<compile_context>
chip_gen: v6e
topology: v6e:2x2x1
jax: 0.10.0
libtpu: 0.0.40
codegen_flags: <defaults>
</compile_context>

<pallas_src>
import functools
import math

import jax
import jax.numpy as jnp
from jax import lax
from jax.experimental import pallas as pl
from jax.experimental.pallas import tpu as pltpu

COUT = 64   # conv out-channels, hard-coded in BaseCNN
K = 3       # conv kernel size, hard-coded in BaseCNN

# dot_general dimension numbers for A[M, K] @ B[N, K]^T -> [M, N]
_TRANS_B = (((1,), (1,)), ((), ()))


def fused_kernel(taps_ref, wk_ref, cb_ref, w2_hbm_ref, b2_ref, wi_ref, bib_ref,
                 wl_ref, bl_ref, out_ref, act_ref, flat_ref, w2_vmem, dma_sem,
                 *, batch, hidden, lh, cout):
    """conv1d(pad=1)+ReLU+maxpool(2) -> flatten -> FC -> LSTM step -> FC."""
    f32 = jnp.float32

    # Dominant weight DMA (HBM -> VMEM) issued first; overlaps the whole
    # conv / pool / flatten phase below.
    w2_copy = pltpu.make_async_copy(w2_hbm_ref, w2_vmem, dma_sem.at[0])
    w2_copy.start()

    # ---- conv1d(stride=1, padding=1) + ReLU + max_pool1d(2), vectorized -----
    # taps_ref rows: [even-position taps ; odd-position taps], each block is
    # ordered (q, b).  One MXU matmul computes all channels at once.
    n = lh * batch
    conv = jnp.dot(taps_ref[...], wk_ref[...],
                   preferred_element_type=f32)          # [2*n, COUT]
    conv_e = conv[0:n, :]
    conv_o = conv[n:2 * n, :]
    # relu(max(a + bias, b + bias)) == max(max(a, b) + bias, 0)
    act_ref[...] = jnp.maximum(jnp.maximum(conv_e, conv_o) + cb_ref[...], 0.0)

    # ---- flatten: (q, b)-major pooled rows -> lane-dense [B, Lh*COUT] -------
    # flat[b, q*COUT + c] = pooled[b, c, q]; w2 columns were permuted to match,
    # so the activations never need a sublane->lane relayout.
    for q in range(lh):
        flat_ref[:, q * cout:(q + 1) * cout] = act_ref[q * batch:(q + 1) * batch, :]

    # ---- CNN fully-connected layer -------------------------------------------
    w2_copy.wait()                       # the big FC weight must have landed
    feat = lax.dot_general(flat_ref[...], w2_vmem[...], _TRANS_B,
                           preferred_element_type=f32) + b2_ref[...]

    # ---- single LSTM cell step (time_size == 1, init_states == None) ---------
    # h0 == c0 == 0  =>  h0 @ W_h.T and f_t * c0 vanish; forget-gate rows were
    # dropped and bias_h folded into bias_i at parameter-prep time.
    gates = lax.dot_general(feat, wi_ref[...], _TRANS_B,
                            preferred_element_type=f32) + bib_ref[...]
    HS = hidden
    i_t = jax.nn.sigmoid(gates[:, 0:HS])
    g_t = jnp.tanh(gates[:, HS:2 * HS])
    o_t = jax.nn.sigmoid(gates[:, 2 * HS:3 * HS])
    h_t = o_t * jnp.tanh(i_t * g_t)

    # ---- LSTM output FC -------------------------------------------------------
    out_ref[...] = lax.dot_general(h_t, wl_ref[...], _TRANS_B,
                                   preferred_element_type=f32) + bl_ref[...]


def prepare_params(params):
    """One-time parameter re-layout (call once, not per forward step)."""
    conv_w, conv_b, w2, b2, wi, bi, wh, bh, wl, bl = params
    F_ = w2.shape[0]
    Lh = w2.shape[1] // COUT
    H = wh.shape[1]
    wk = conv_w[:, 0, :].T                                   # [3, COUT]
    cb = conv_b.reshape(1, COUT)
    # Permute FC columns from torch's (c-major, q-minor) flat order to the
    # kernel's (q-major, c-minor) order.
    w2p = w2.reshape(F_, COUT, Lh).transpose(0, 2, 1).reshape(F_, Lh * COUT)
    # Zero initial state: fold bias_h into bias_i, drop dead forget-gate rows.
    keep = jnp.concatenate([jnp.arange(0, H), jnp.arange(2 * H, 4 * H)])
    wi3 = wi[keep, :]                                        # rows = [i; g; o]
    bib3 = (bi + bh)[keep].reshape(1, 3 * H)
    return (wk, cb, w2p, b2.reshape(1, F_), wi3, bib3, wl,
            bl.reshape(1, wl.shape[0]))


def base_cnn_con_lstm_forward(x, prep, init_states=None):
    """x: [B, 1, L] (PyTorch NCL layout).  Returns [B, n_output]."""
    if init_states is not None:
        # The kernel specializes the zero-initial-state path of the module.
        raise NotImplementedError("kernel assumes init_states is None (h0=c0=0)")
    wk, cb, w2p, b2, wi3, bib3, wl, bl = prep
    B, C, L = x.shape
    assert C == 1 and L % 2 == 0
    Lh = L // 2
    F_ = w2p.shape[0]
    H = wi3.shape[0] // 3
    O = wl.shape[0]
    assert w2p.shape[1] == COUT * Lh

    # Tiny glue: zero-pad (conv padding=1) and gather the 3 conv taps for the
    # even / odd pooled positions, rows ordered (q, b) so the kernel's flatten
    # copies are contiguous 2-row blocks.
    xpad = jnp.pad(x[:, 0, :], ((0, 0), (1, 1)))                        # [B, L+2]

    def taps(off):
        cols = [xpad[:, off + j: off + j + L: 2] for j in range(K)]     # [B, Lh] each
        t = jnp.stack(cols, axis=-1)                                    # [B, Lh, 3]
        return t.transpose(1, 0, 2).reshape(Lh * B, K)                  # rows (q, b)

    taps_eo = jnp.concatenate([taps(0), taps(1)], axis=0)               # [2*Lh*B, 3]

    vmem = pl.BlockSpec(memory_space=pltpu.MemorySpace.VMEM)
    hbm = pl.BlockSpec(memory_space=pl.ANY)     # no auto-DMA; copied in-kernel

    kernel = functools.partial(fused_kernel, batch=B, hidden=H, lh=Lh, cout=COUT)
    return pl.pallas_call(
        kernel,
        out_shape=jax.ShapeDtypeStruct((B, O), jnp.float32),
        in_specs=[vmem, vmem, vmem, hbm, vmem, vmem, vmem, vmem, vmem],
        out_specs=vmem,
        scratch_shapes=[
            pltpu.VMEM((Lh * B, COUT), jnp.float32),    # pooled acts, (q, b)-major rows
            pltpu.VMEM((B, Lh * COUT), jnp.float32),    # lane-dense flat activations
            pltpu.VMEM((F_, Lh * COUT), jnp.float32),   # landing buffer for w2
            pltpu.SemaphoreType.DMA((1,)),              # w2 DMA completion
        ],
    )(taps_eo, wk, cb, w2p, b2, wi3, bib3, wl, bl)


def reference(x, params):
    """Pure-JAX reference reproducing the PyTorch forward (incl. zero state)."""
    conv_w, conv_b, w2, b2, wi, bi, wh, bh, wl, bl = params
    B, _, L = x.shape
    y = jax.lax.conv_general_dilated(
        x, conv_w, window_strides=(1,), padding=((1, 1),),
        dimension_numbers=('NCH', 'OIH', 'NCH')) + conv_b[None, :, None]
    y = jnp.maximum(y, 0.0)
    y = jnp.max(y.reshape(B, COUT, L // 2, 2), axis=-1)
    flat = y.reshape(B, -1)
    feat = flat @ w2.T + b2
    H = wh.shape[1]
    h = jnp.zeros((B, H), jnp.float32)
    c = jnp.zeros((B, H), jnp.float32)
    gates = feat @ wi.T + bi + h @ wh.T + bh
    i_t = jax.nn.sigmoid(gates[:, :H])
    f_t = jax.nn.sigmoid(gates[:, H:2 * H])
    g_t = jnp.tanh(gates[:, 2 * H:3 * H])
    o_t = jax.nn.sigmoid(gates[:, 3 * H:])
    c = f_t * c + i_t * g_t
    h = o_t * jnp.tanh(c)
    return h @ wl.T + bl


if __name__ == "__main__":
    # BaseCNN hard-codes the FC input to 64*100, which forces conv length 200.
    B = 2
    L = 200
    cnn_feature = 32      # == n_features fed into the LSTM
    n_hidden = 32
    n_output = 8

    key = jax.random.PRNGKey(0)
    ks = jax.random.split(key, 12)

    # deterministic synthetic init, shapes exactly as in the module __init__
    conv_w = jax.random.normal(ks[0], (COUT, 1, K), jnp.float32) * math.sqrt(2.0 / K)
    conv_b = jnp.zeros((COUT,), jnp.float32)
    w2 = jax.random.normal(ks[1], (cnn_feature, COUT * (L // 2)), jnp.float32) * 0.02
    b2 = jnp.zeros((cnn_feature,), jnp.float32)
    stdv = 1.0 / math.sqrt(n_hidden)
    wi = jax.random.uniform(ks[2], (4 * n_hidden, cnn_feature), jnp.float32, -stdv, stdv)
    bi = jax.random.uniform(ks[3], (4 * n_hidden,), jnp.float32, -stdv, stdv)
    wh = jax.random.uniform(ks[4], (4 * n_hidden, n_hidden), jnp.float32, -stdv, stdv)
    bh = jax.random.uniform(ks[5], (4 * n_hidden,), jnp.float32, -stdv, stdv)
    wl = jax.random.uniform(ks[6], (n_output, n_hidden), jnp.float32, -stdv, stdv)
    bl = jax.random.uniform(ks[7], (n_output,), jnp.float32, -stdv, stdv)
    params = (conv_w, conv_b, w2, b2, wi, bi, wh, bh, wl, bl)

    x = jax.random.normal(ks[8], (B, 1, L), jnp.float32)

    prep = prepare_params(params)                      # one-time weight re-layout
    fwd = jax.jit(base_cnn_con_lstm_forward)
    out = fwd(x, prep)
    out = jax.block_until_ready(out)

    ref = reference(x, params)
    assert out.shape == (B, n_output)
    assert jnp.allclose(out, ref, atol=2e-4, rtol=2e-4)
    print("KERNEL_OK")
</pallas_src>

<mosaic_0001>
module attributes {stable_mosaic.version = 11 : i64} {
  func.func @fused_kernel(%arg0: memref<400x3xf32, #tpu.memory_space<vmem>>, %arg1: memref<3x64xf32, #tpu.memory_space<vmem>>, %arg2: memref<1x64xf32, #tpu.memory_space<vmem>>, %arg3: memref<32x6400xf32, #tpu.memory_space<any>>, %arg4: memref<1x32xf32, #tpu.memory_space<vmem>>, %arg5: memref<96x32xf32, #tpu.memory_space<vmem>>, %arg6: memref<1x96xf32, #tpu.memory_space<vmem>>, %arg7: memref<8x32xf32, #tpu.memory_space<vmem>>, %arg8: memref<1x8xf32, #tpu.memory_space<vmem>>, %arg9: memref<2x8xf32, #tpu.memory_space<vmem>>, %arg10: memref<200x64xf32, #tpu.memory_space<vmem>>, %arg11: memref<2x6400xf32, #tpu.memory_space<vmem>>, %arg12: memref<32x6400xf32, #tpu.memory_space<vmem>>, %arg13: memref<1x!tpu.dma_semaphore, #tpu.memory_space<semaphore_mem>>) attributes {dimension_semantics = [], scalar_prefetch = 0 : i64, scratch_operands = 4 : i64, tpu.core_type = #tpu.core_type<tc>} {
    %c0_i32 = arith.constant 0 : i32
    %0 = tpu.memref_slice %arg13[%c0_i32] : memref<1x!tpu.dma_semaphore, #tpu.memory_space<semaphore_mem>> -> memref<1x!tpu.dma_semaphore, #tpu.memory_space<semaphore_mem>>
    %1 = tpu.memref_squeeze %0 : memref<1x!tpu.dma_semaphore, #tpu.memory_space<semaphore_mem>> -> memref<!tpu.dma_semaphore, #tpu.memory_space<semaphore_mem>>
    tpu.enqueue_dma source(%arg3 : memref<32x6400xf32, #tpu.memory_space<any>>) target(%arg12 : memref<32x6400xf32, #tpu.memory_space<vmem>>) target_semaphore(%1 : memref<!tpu.dma_semaphore, #tpu.memory_space<semaphore_mem>>)
    %c0 = arith.constant 0 : index
    %c0_0 = arith.constant 0 : index
    %2 = vector.load %arg0[%c0, %c0_0] : memref<400x3xf32, #tpu.memory_space<vmem>>, vector<400x3xf32>
    %c0_1 = arith.constant 0 : index
    %c0_2 = arith.constant 0 : index
    %3 = vector.load %arg1[%c0_1, %c0_2] : memref<3x64xf32, #tpu.memory_space<vmem>>, vector<3x64xf32>
    %cst = arith.constant dense<0.000000e+00> : vector<400x64xf32>
    %4 = tpu.matmul %2, %3, %cst {dimension_numbers = #tpu.dot_dimension_numbers<[1], [0], [0], [1], [0, 0, 1, 1], [], []>} : vector<400x3xf32>, vector<3x64xf32>, vector<400x64xf32> -> vector<400x64xf32>
    %5 = vector.extract_strided_slice %4 {offsets = [0, 0], sizes = [200, 64], strides = [1, 1]} : vector<400x64xf32> to vector<200x64xf32>
    %6 = vector.extract_strided_slice %4 {offsets = [200, 0], sizes = [200, 64], strides = [1, 1]} : vector<400x64xf32> to vector<200x64xf32>
    %7 = arith.maximumf %5, %6 : vector<200x64xf32>
    %c0_3 = arith.constant 0 : index
    %c0_4 = arith.constant 0 : index
    %8 = vector.load %arg2[%c0_3, %c0_4] : memref<1x64xf32, #tpu.memory_space<vmem>>, vector<1x64xf32>
    %9 = vector.broadcast %8 : vector<1x64xf32> to vector<200x64xf32>
    %10 = arith.addf %7, %9 : vector<200x64xf32>
    %cst_5 = arith.constant 0.000000e+00 : f32
    %11 = vector.broadcast %cst_5 : f32 to vector<200x64xf32>
    %12 = arith.maximumf %10, %11 : vector<200x64xf32>
    %c0_6 = arith.constant 0 : index
    %c0_7 = arith.constant 0 : index
    %13 = vector.load %arg10[%c0_6, %c0_7] : memref<200x64xf32, #tpu.memory_space<vmem>>, vector<200x64xf32>
    tpu.vector_store %arg10[%c0_6, %c0_7], %12 {strides = array<i32>} : memref<200x64xf32, #tpu.memory_space<vmem>>, vector<200x64xf32>,
    %c0_8 = arith.constant 0 : index
    %c0_9 = arith.constant 0 : index
    %14 = vector.load %arg10[%c0_8, %c0_9] : memref<200x64xf32, #tpu.memory_space<vmem>>, vector<2x64xf32>
    %c0_10 = arith.constant 0 : index
    %c0_11 = arith.constant 0 : index
    %15 = vector.load %arg11[%c0_10, %c0_11] : memref<2x6400xf32, #tpu.memory_space<vmem>>, vector<2x64xf32>
    tpu.vector_store %arg11[%c0_10, %c0_11], %14 {strides = array<i32>} : memref<2x6400xf32, #tpu.memory_space<vmem>>, vector<2x64xf32>,
    %c2 = arith.constant 2 : index
    %c0_12 = arith.constant 0 : index
    %16 = vector.load %arg10[%c2, %c0_12] : memref<200x64xf32, #tpu.memory_space<vmem>>, vector<2x64xf32>
    %c0_13 = arith.constant 0 : index
    %c64 = arith.constant 64 : index
    %17 = vector.load %arg11[%c0_13, %c64] : memref<2x6400xf32, #tpu.memory_space<vmem>>, vector<2x64xf32>
    tpu.vector_store %arg11[%c0_13, %c64], %16 {strides = array<i32>} : memref<2x6400xf32, #tpu.memory_space<vmem>>, vector<2x64xf32>,
    %c4 = arith.constant 4 : index
    %c0_14 = arith.constant 0 : index
    %18 = vector.load %arg10[%c4, %c0_14] : memref<200x64xf32, #tpu.memory_space<vmem>>, vector<2x64xf32>
    %c0_15 = arith.constant 0 : index
    %c128 = arith.constant 128 : index
    %19 = vector.load %arg11[%c0_15, %c128] : memref<2x6400xf32, #tpu.memory_space<vmem>>, vector<2x64xf32>
    tpu.vector_store %arg11[%c0_15, %c128], %18 {strides = array<i32>} : memref<2x6400xf32, #tpu.memory_space<vmem>>, vector<2x64xf32>,
    %c6 = arith.constant 6 : index
    %c0_16 = arith.constant 0 : index
    %20 = vector.load %arg10[%c6, %c0_16] : memref<200x64xf32, #tpu.memory_space<vmem>>, vector<2x64xf32>
    %c0_17 = arith.constant 0 : index
    %c192 = arith.constant 192 : index
    %21 = vector.load %arg11[%c0_17, %c192] : memref<2x6400xf32, #tpu.memory_space<vmem>>, vector<2x64xf32>
    tpu.vector_store %arg11[%c0_17, %c192], %20 {strides = array<i32>} : memref<2x6400xf32, #tpu.memory_space<vmem>>, vector<2x64xf32>,
    %c8 = arith.constant 8 : index
    %c0_18 = arith.constant 0 : index
    %22 = vector.load %arg10[%c8, %c0_18] : memref<200x64xf32, #tpu.memory_space<vmem>>, vector<2x64xf32>
    %c0_19 = arith.constant 0 : index
    %c256 = arith.constant 256 : index
    %23 = vector.load %arg11[%c0_19, %c256] : memref<2x6400xf32, #tpu.memory_space<vmem>>, vector<2x64xf32>
    tpu.vector_store %arg11[%c0_19, %c256], %22 {strides = array<i32>} : memref<2x6400xf32, #tpu.memory_space<vmem>>, vector<2x64xf32>,
    %c10 = arith.constant 10 : index
    %c0_20 = arith.constant 0 : index
    %24 = vector.load %arg10[%c10, %c0_20] : memref<200x64xf32, #tpu.memory_space<vmem>>, vector<2x64xf32>
    %c0_21 = arith.constant 0 : index
    %c320 = arith.constant 320 : index
    %25 = vector.load %arg11[%c0_21, %c320] : memref<2x6400xf32, #tpu.memory_space<vmem>>, vector<2x64xf32>
    tpu.vector_store %arg11[%c0_21, %c320], %24 {strides = array<i32>} : memref<2x6400xf32, #tpu.memory_space<vmem>>, vector<2x64xf32>,
    %c12 = arith.constant 12 : index
    %c0_22 = arith.constant 0 : index
    %26 = vector.load %arg10[%c12, %c0_22] : memref<200x64xf32, #tpu.memory_space<vmem>>, vector<2x64xf32>
    %c0_23 = arith.constant 0 : index
    %c384 = arith.constant 384 : index
    %27 = vector.load %arg11[%c0_23, %c384] : memref<2x6400xf32, #tpu.memory_space<vmem>>, vector<2x64xf32>
    tpu.vector_store %arg11[%c0_23, %c384], %26 {strides = array<i32>} : memref<2x6400xf32, #tpu.memory_space<vmem>>, vector<2x64xf32>,
    %c14 = arith.constant 14 : index
    %c0_24 = arith.constant 0 : index
    %28 = vector.load %arg10[%c14, %c0_24] : memref<200x64xf32, #tpu.memory_space<vmem>>, vector<2x64xf32>
    %c0_25 = arith.constant 0 : index
    %c448 = arith.constant 448 : index
    %29 = vector.load %arg11[%c0_25, %c448] : memref<2x6400xf32, #tpu.memory_space<vmem>>, vector<2x64xf32>
    tpu.vector_store %arg11[%c0_25, %c448], %28 {strides = array<i32>} : memref<2x6400xf32, #tpu.memory_space<vmem>>, vector<2x64xf32>,
    %c16 = arith.constant 16 : index
    %c0_26 = arith.constant 0 : index
    %30 = vector.load %arg10[%c16, %c0_26] : memref<200x64xf32, #tpu.memory_space<vmem>>, vector<2x64xf32>
    %c0_27 = arith.constant 0 : index
    %c512 = arith.constant 512 : index
    %31 = vector.load %arg11[%c0_27, %c512] : memref<2x6400xf32, #tpu.memory_space<vmem>>, vector<2x64xf32>
    tpu.vector_store %arg11[%c0_27, %c512], %30 {strides = array<i32>} : memref<2x6400xf32, #tpu.memory_space<vmem>>, vector<2x64xf32>,
    %c18 = arith.constant 18 : index
    %c0_28 = arith.constant 0 : index
    %32 = vector.load %arg10[%c18, %c0_28] : memref<200x64xf32, #tpu.memory_space<vmem>>, vector<2x64xf32>
    %c0_29 = arith.constant 0 : index
    %c576 = arith.constant 576 : index
    %33 = vector.load %arg11[%c0_29, %c576] : memref<2x6400xf32, #tpu.memory_space<vmem>>, vector<2x64xf32>
    tpu.vector_store %arg11[%c0_29, %c576], %32 {strides = array<i32>} : memref<2x6400xf32, #tpu.memory_space<vmem>>, vector<2x64xf32>,
    %c20 = arith.constant 20 : index
    %c0_30 = arith.constant 0 : index
    %34 = vector.load %arg10[%c20, %c0_30] : memref<200x64xf32, #tpu.memory_space<vmem>>, vector<2x64xf32>
    %c0_31 = arith.constant 0 : index
    %c640 = arith.constant 640 : index
    %35 = vector.load %arg11[%c0_31, %c640] : memref<2x6400xf32, #tpu.memory_space<vmem>>, vector<2x64xf32>
    tpu.vector_store %arg11[%c0_31, %c640], %34 {strides = array<i32>} : memref<2x6400xf32, #tpu.memory_space<vmem>>, vector<2x64xf32>,
    %c22 = arith.constant 22 : index
    %c0_32 = arith.constant 0 : index
    %36 = vector.load %arg10[%c22, %c0_32] : memref<200x64xf32, #tpu.memory_space<vmem>>, vector<2x64xf32>
    %c0_33 = arith.constant 0 : index
    %c704 = arith.constant 704 : index
    %37 = vector.load %arg11[%c0_33, %c704] : memref<2x6400xf32, #tpu.memory_space<vmem>>, vector<2x64xf32>
    tpu.vector_store %arg11[%c0_33, %c704], %36 {strides = array<i32>} : memref<2x6400xf32, #tpu.memory_space<vmem>>, vector<2x64xf32>,
    %c24 = arith.constant 24 : index
    %c0_34 = arith.constant 0 : index
    %38 = vector.load %arg10[%c24, %c0_34] : memref<200x64xf32, #tpu.memory_space<vmem>>, vector<2x64xf32>
    %c0_35 = arith.constant 0 : index
    %c768 = arith.constant 768 : index
    %39 = vector.load %arg11[%c0_35, %c768] : memref<2x6400xf32, #tpu.memory_space<vmem>>, vector<2x64xf32>
    tpu.vector_store %arg11[%c0_35, %c768], %38 {strides = array<i32>} : memref<2x6400xf32, #tpu.memory_space<vmem>>, vector<2x64xf32>,
    %c26 = arith.constant 26 : index
    %c0_36 = arith.constant 0 : index
    %40 = vector.load %arg10[%c26, %c0_36] : memref<200x64xf32, #tpu.memory_space<vmem>>, vector<2x64xf32>
    %c0_37 = arith.constant 0 : index
    %c832 = arith.constant 832 : index
    %41 = vector.load %arg11[%c0_37, %c832] : memref<2x6400xf32, #tpu.memory_space<vmem>>, vector<2x64xf32>
    tpu.vector_store %arg11[%c0_37, %c832], %40 {strides = array<i32>} : memref<2x6400xf32, #tpu.memory_space<vmem>>, vector<2x64xf32>,
    %c28 = arith.constant 28 : index
    %c0_38 = arith.constant 0 : index
    %42 = vector.load %arg10[%c28, %c0_38] : memref<200x64xf32, #tpu.memory_space<vmem>>, vector<2x64xf32>
    %c0_39 = arith.constant 0 : index
    %c896 = arith.constant 896 : index
    %43 = vector.load %arg11[%c0_39, %c896] : memref<2x6400xf32, #tpu.memory_space<vmem>>, vector<2x64xf32>
    tpu.vector_store %arg11[%c0_39, %c896], %42 {strides = array<i32>} : memref<2x6400xf32, #tpu.memory_space<vmem>>, vector<2x64xf32>,
    %c30 = arith.constant 30 : index
    %c0_40 = arith.constant 0 : index
    %44 = vector.load %arg10[%c30, %c0_40] : memref<200x64xf32, #tpu.memory_space<vmem>>, vector<2x64xf32>
    %c0_41 = arith.constant 0 : index
    %c960 = arith.constant 960 : index
    %45 = vector.load %arg11[%c0_41, %c960] : memref<2x6400xf32, #tpu.memory_space<vmem>>, vector<2x64xf32>
    tpu.vector_store %arg11[%c0_41, %c960], %44 {strides = array<i32>} : memref<2x6400xf32, #tpu.memory_space<vmem>>, vector<2x64xf32>,
    %c32 = arith.constant 32 : index
    %c0_42 = arith.constant 0 : index
    %46 = vector.load %arg10[%c32, %c0_42] : memref<200x64xf32, #tpu.memory_space<vmem>>, vector<2x64xf32>
    %c0_43 = arith.constant 0 : index
    %c1024 = arith.constant 1024 : index
    %47 = vector.load %arg11[%c0_43, %c1024] : memref<2x6400xf32, #tpu.memory_space<vmem>>, vector<2x64xf32>
    tpu.vector_store %arg11[%c0_43, %c1024], %46 {strides = array<i32>} : memref<2x6400xf32, #tpu.memory_space<vmem>>, vector<2x64xf32>,
    %c34 = arith.constant 34 : index
    %c0_44 = arith.constant 0 : index
    %48 = vector.load %arg10[%c34, %c0_44] : memref<200x64xf32, #tpu.memory_space<vmem>>, vector<2x64xf32>
    %c0_45 = arith.constant 0 : index
    %c1088 = arith.constant 1088 : index
    %49 = vector.load %arg11[%c0_45, %c1088] : memref<2x6400xf32, #tpu.memory_space<vmem>>, vector<2x64xf32>
    tpu.vector_store %arg11[%c0_45, %c1088], %48 {strides = array<i32>} : memref<2x6400xf32, #tpu.memory_space<vmem>>, vector<2x64xf32>,
    %c36 = arith.constant 36 : index
    %c0_46 = arith.constant 0 : index
    %50 = vector.load %arg10[%c36, %c0_46] : memref<200x64xf32, #tpu.memory_space<vmem>>, vector<2x64xf32>
    %c0_47 = arith.constant 0 : index
    %c1152 = arith.constant 1152 : index
    %51 = vector.load %arg11[%c0_47, %c1152] : memref<2x6400xf32, #tpu.memory_space<vmem>>, vector<2x64xf32>
    tpu.vector_store %arg11[%c0_47, %c1152], %50 {strides = array<i32>} : memref<2x6400xf32, #tpu.memory_space<vmem>>, vector<2x64xf32>,
    %c38 = arith.constant 38 : index
    %c0_48 = arith.constant 0 : index
    %52 = vector.load %arg10[%c38, %c0_48] : memref<200x64xf32, #tpu.memory_space<vmem>>, vector<2x64xf32>
    %c0_49 = arith.constant 0 : index
    %c1216 = arith.constant 1216 : index
    %53 = vector.load %arg11[%c0_49, %c1216] : memref<2x6400xf32, #tpu.memory_space<vmem>>, vector<2x64xf32>
    tpu.vector_store %arg11[%c0_49, %c1216], %52 {strides = array<i32>} : memref<2x6400xf32, #tpu.memory_space<vmem>>, vector<2x64xf32>,
    %c40 = arith.constant 40 : index
    %c0_50 = arith.constant 0 : index
    %54 = vector.load %arg10[%c40, %c0_50] : memref<200x64xf32, #tpu.memory_space<vmem>>, vector<2x64xf32>
    %c0_51 = arith.constant 0 : index
    %c1280 = arith.constant 1280 : index
    %55 = vector.load %arg11[%c0_51, %c1280] : memref<2x6400xf32, #tpu.memory_space<vmem>>, vector<2x64xf32>
    tpu.vector_store %arg11[%c0_51, %c1280], %54 {strides = array<i32>} : memref<2x6400xf32, #tpu.memory_space<vmem>>, vector<2x64xf32>,
    %c42 = arith.constant 42 : index
    %c0_52 = arith.constant 0 : index
    %56 = vector.load %arg10[%c42, %c0_52] : memref<200x64xf32, #tpu.memory_space<vmem>>, vector<2x64xf32>
    %c0_53 = arith.constant 0 : index
    %c1344 = arith.constant 1344 : index
    %57 = vector.load %arg11[%c0_53, %c1344] : memref<2x6400xf32, #tpu.memory_space<vmem>>, vector<2x64xf32>
    tpu.vector_store %arg11[%c0_53, %c1344], %56 {strides = array<i32>} : memref<2x6400xf32, #tpu.memory_space<vmem>>, vector<2x64xf32>,
    %c44 = arith.constant 44 : index
    %c0_54 = arith.constant 0 : index
    %58 = vector.load %arg10[%c44, %c0_54] : memref<200x64xf32, #tpu.memory_space<vmem>>, vector<2x64xf32>
    %c0_55 = arith.constant 0 : index
    %c1408 = arith.constant 1408 : index
    %59 = vector.load %arg11[%c0_55, %c1408] : memref<2x6400xf32, #tpu.memory_space<vmem>>, vector<2x64xf32>
    tpu.vector_store %arg11[%c0_55, %c1408], %58 {strides = array<i32>} : memref<2x6400xf32, #tpu.memory_space<vmem>>, vector<2x64xf32>,
    %c46 = arith.constant 46 : index
    %c0_56 = arith.constant 0 : index
    %60 = vector.load %arg10[%c46, %c0_56] : memref<200x64xf32, #tpu.memory_space<vmem>>, vector<2x64xf32>
    %c0_57 = arith.constant 0 : index
    %c1472 = arith.constant 1472 : index
    %61 = vector.load %arg11[%c0_57, %c1472] : memref<2x6400xf32, #tpu.memory_space<vmem>>, vector<2x64xf32>
    tpu.vector_store %arg11[%c0_57, %c1472], %60 {strides = array<i32>} : memref<2x6400xf32, #tpu.memory_space<vmem>>, vector<2x64xf32>,
    %c48 = arith.constant 48 : index
    %c0_58 = arith.constant 0 : index
    %62 = vector.load %arg10[%c48, %c0_58] : memref<200x64xf32, #tpu.memory_space<vmem>>, vector<2x64xf32>
    %c0_59 = arith.constant 0 : index
    %c1536 = arith.constant 1536 : index
    %63 = vector.load %arg11[%c0_59, %c1536] : memref<2x6400xf32, #tpu.memory_space<vmem>>, vector<2x64xf32>
    tpu.vector_store %arg11[%c0_59, %c1536], %62 {strides = array<i32>} : memref<2x6400xf32, #tpu.memory_space<vmem>>, vector<2x64xf32>,
    %c50 = arith.constant 50 : index
    %c0_60 = arith.constant 0 : index
    %64 = vector.load %arg10[%c50, %c0_60] : memref<200x64xf32, #tpu.memory_space<vmem>>, vector<2x64xf32>
    %c0_61 = arith.constant 0 : index
    %c1600 = arith.constant 1600 : index
    %65 = vector.load %arg11[%c0_61, %c1600] : memref<2x6400xf32, #tpu.memory_space<vmem>>, vector<2x64xf32>
    tpu.vector_store %arg11[%c0_61, %c1600], %64 {strides = array<i32>} : memref<2x6400xf32, #tpu.memory_space<vmem>>, vector<2x64xf32>,
    %c52 = arith.constant 52 : index
    %c0_62 = arith.constant 0 : index
    %66 = vector.load %arg10[%c52, %c0_62] : memref<200x64xf32, #tpu.memory_space<vmem>>, vector<2x64xf32>
    %c0_63 = arith.constant 0 : index
    %c1664 = arith.constant 1664 : index
    %67 = vector.load %arg11[%c0_63, %c1664] : memref<2x6400xf32, #tpu.memory_space<vmem>>, vector<2x64xf32>
    tpu.vector_store %arg11[%c0_63, %c1664], %66 {strides = array<i32>} : memref<2x6400xf32, #tpu.memory_space<vmem>>, vector<2x64xf32>,
    %c54 = arith.constant 54 : index
    %c0_64 = arith.constant 0 : index
    %68 = vector.load %arg10[%c54, %c0_64] : memref<200x64xf32, #tpu.memory_space<vmem>>, vector<2x64xf32>
    %c0_65 = arith.constant 0 : index
    %c1728 = arith.constant 1728 : index
    %69 = vector.load %arg11[%c0_65, %c1728] : memref<2x6400xf32, #tpu.memory_space<vmem>>, vector<2x64xf32>
    tpu.vector_store %arg11[%c0_65, %c1728], %68 {strides = array<i32>} : memref<2x6400xf32, #tpu.memory_space<vmem>>, vector<2x64xf32>,
    %c56 = arith.constant 56 : index
    %c0_66 = arith.constant 0 : index
    %70 = vector.load %arg10[%c56, %c0_66] : memref<200x64xf32, #tpu.memory_space<vmem>>, vector<2x64xf32>
    %c0_67 = arith.constant 0 : index
    %c1792 = arith.constant 1792 : index
    %71 = vector.load %arg11[%c0_67, %c1792] : memref<2x6400xf32, #tpu.memory_space<vmem>>, vector<2x64xf32>
    tpu.vector_store %arg11[%c0_67, %c1792], %70 {strides = array<i32>} : memref<2x6400xf32, #tpu.memory_space<vmem>>, vector<2x64xf32>,
    %c58 = arith.constant 58 : index
    %c0_68 = arith.constant 0 : index
    %72 = vector.load %arg10[%c58, %c0_68] : memref<200x64xf32, #tpu.memory_space<vmem>>, vector<2x64xf32>
    %c0_69 = arith.constant 0 : index
    %c1856 = arith.constant 1856 : index
    %73 = vector.load %arg11[%c0_69, %c1856] : memref<2x6400xf32, #tpu.memory_space<vmem>>, vector<2x64xf32>
    tpu.vector_store %arg11[%c0_69, %c1856], %72 {strides = array<i32>} : memref<2x6400xf32, #tpu.memory_space<vmem>>, vector<2x64xf32>,
    %c60 = arith.constant 60 : index
    %c0_70 = arith.constant 0 : index
    %74 = vector.load %arg10[%c60, %c0_70] : memref<200x64xf32, #tpu.memory_space<vmem>>, vector<2x64xf32>
    %c0_71 = arith.constant 0 : index
    %c1920 = arith.constant 1920 : index
    %75 = vector.load %arg11[%c0_71, %c1920] : memref<2x6400xf32, #tpu.memory_space<vmem>>, vector<2x64xf32>
    tpu.vector_store %arg11[%c0_71, %c1920], %74 {strides = array<i32>} : memref<2x6400xf32, #tpu.memory_space<vmem>>, vector<2x64xf32>,
    %c62 = arith.constant 62 : index
    %c0_72 = arith.constant 0 : index
    %76 = vector.load %arg10[%c62, %c0_72] : memref<200x64xf32, #tpu.memory_space<vmem>>, vector<2x64xf32>
    %c0_73 = arith.constant 0 : index
    %c1984 = arith.constant 1984 : index
    %77 = vector.load %arg11[%c0_73, %c1984] : memref<2x6400xf32, #tpu.memory_space<vmem>>, vector<2x64xf32>
    tpu.vector_store %arg11[%c0_73, %c1984], %76 {strides = array<i32>} : memref<2x6400xf32, #tpu.memory_space<vmem>>, vector<2x64xf32>,
    %c64_74 = arith.constant 64 : index
    %c0_75 = arith.constant 0 : index
    %78 = vector.load %arg10[%c64_74, %c0_75] : memref<200x64xf32, #tpu.memory_space<vmem>>, vector<2x64xf32>
    %c0_76 = arith.constant 0 : index
    %c2048 = arith.constant 2048 : index
    %79 = vector.load %arg11[%c0_76, %c2048] : memref<2x6400xf32, #tpu.memory_space<vmem>>, vector<2x64xf32>
    tpu.vector_store %arg11[%c0_76, %c2048], %78 {strides = array<i32>} : memref<2x6400xf32, #tpu.memory_space<vmem>>, vector<2x64xf32>,
    %c66 = arith.constant 66 : index
    %c0_77 = arith.constant 0 : index
    %80 = vector.load %arg10[%c66, %c0_77] : memref<200x64xf32, #tpu.memory_space<vmem>>, vector<2x64xf32>
    %c0_78 = arith.constant 0 : index
    %c2112 = arith.constant 2112 : index
    %81 = vector.load %arg11[%c0_78, %c2112] : memref<2x6400xf32, #tpu.memory_space<vmem>>, vector<2x64xf32>
    tpu.vector_store %arg11[%c0_78, %c2112], %80 {strides = array<i32>} : memref<2x6400xf32, #tpu.memory_space<vmem>>, vector<2x64xf32>,
    %c68 = arith.constant 68 : index
    %c0_79 = arith.constant 0 : index
    %82 = vector.load %arg10[%c68, %c0_79] : memref<200x64xf32, #tpu.memory_space<vmem>>, vector<2x64xf32>
    %c0_80 = arith.constant 0 : index
    %c2176 = arith.constant 2176 : index
    %83 = vector.load %arg11[%c0_80, %c2176] : memref<2x6400xf32, #tpu.memory_space<vmem>>, vector<2x64xf32>
    tpu.vector_store %arg11[%c0_80, %c2176], %82 {strides = array<i32>} : memref<2x6400xf32, #tpu.memory_space<vmem>>, vector<2x64xf32>,
    %c70 = arith.constant 70 : index
    %c0_81 = arith.constant 0 : index
    %84 = vector.load %arg10[%c70, %c0_81] : memref<200x64xf32, #tpu.memory_space<vmem>>, vector<2x64xf32>
    %c0_82 = arith.constant 0 : index
    %c2240 = arith.constant 2240 : index
    %85 = vector.load %arg11[%c0_82, %c2240] : memref<2x6400xf32, #tpu.memory_space<vmem>>, vector<2x64xf32>
    tpu.vector_store %arg11[%c0_82, %c2240], %84 {strides = array<i32>} : memref<2x6400xf32, #tpu.memory_space<vmem>>, vector<2x64xf32>,
    %c72 = arith.constant 72 : index
    %c0_83 = arith.constant 0 : index
    %86 = vector.load %arg10[%c72, %c0_83] : memref<200x64xf32, #tpu.memory_space<vmem>>, vector<2x64xf32>
    %c0_84 = arith.constant 0 : index
    %c2304 = arith.constant 2304 : index
    %87 = vector.load %arg11[%c0_84, %c2304] : memref<2x6400xf32, #tpu.memory_space<vmem>>, vector<2x64xf32>
    tpu.vector_store %arg11[%c0_84, %c2304], %86 {strides = array<i32>} : memref<2x6400xf32, #tpu.memory_space<vmem>>, vector<2x64xf32>,
    %c74 = arith.constant 74 : index
    %c0_85 = arith.constant 0 : index
    %88 = vector.load %arg10[%c74, %c0_85] : memref<200x64xf32, #tpu.memory_space<vmem>>, vector<2x64xf32>
    %c0_86 = arith.constant 0 : index
    %c2368 = arith.constant 2368 : index
    %89 = vector.load %arg11[%c0_86, %c2368] : memref<2x6400xf32, #tpu.memory_space<vmem>>, vector<2x64xf32>
    tpu.vector_store %arg11[%c0_86, %c2368], %88 {strides = array<i32>} : memref<2x6400xf32, #tpu.memory_space<vmem>>, vector<2x64xf32>,
    %c76 = arith.constant 76 : index
    %c0_87 = arith.constant 0 : index
    %90 = vector.load %arg10[%c76, %c0_87] : memref<200x64xf32, #tpu.memory_space<vmem>>, vector<2x64xf32>
    %c0_88 = arith.constant 0 : index
    %c2432 = arith.constant 2432 : index
    %91 = vector.load %arg11[%c0_88, %c2432] : memref<2x6400xf32, #tpu.memory_space<vmem>>, vector<2x64xf32>
    tpu.vector_store %arg11[%c0_88, %c2432], %90 {strides = array<i32>} : memref<2x6400xf32, #tpu.memory_space<vmem>>, vector<2x64xf32>,
    %c78 = arith.constant 78 : index
    %c0_89 = arith.constant 0 : index
    %92 = vector.load %arg10[%c78, %c0_89] : memref<200x64xf32, #tpu.memory_space<vmem>>, vector<2x64xf32>
    %c0_90 = arith.constant 0 : index
    %c2496 = arith.constant 2496 : index
    %93 = vector.load %arg11[%c0_90, %c2496] : memref<2x6400xf32, #tpu.memory_space<vmem>>, vector<2x64xf32>
    tpu.vector_store %arg11[%c0_90, %c2496], %92 {strides = array<i32>} : memref<2x6400xf32, #tpu.memory_space<vmem>>, vector<2x64xf32>,
    %c80 = arith.constant 80 : index
    %c0_91 = arith.constant 0 : index
    %94 = vector.load %arg10[%c80, %c0_91] : memref<200x64xf32, #tpu.memory_space<vmem>>, vector<2x64xf32>
    %c0_92 = arith.constant 0 : index
    %c2560 = arith.constant 2560 : index
    %95 = vector.load %arg11[%c0_92, %c2560] : memref<2x6400xf32, #tpu.memory_space<vmem>>, vector<2x64xf32>
    tpu.vector_store %arg11[%c0_92, %c2560], %94 {strides = array<i32>} : memref<2x6400xf32, #tpu.memory_space<vmem>>, vector<2x64xf32>,
    %c82 = arith.constant 82 : index
    %c0_93 = arith.constant 0 : index
    %96 = vector.load %arg10[%c82, %c0_93] : memref<200x64xf32, #tpu.memory_space<vmem>>, vector<2x64xf32>
    %c0_94 = arith.constant 0 : index
    %c2624 = arith.constant 2624 : index
    %97 = vector.load %arg11[%c0_94, %c2624] : memref<2x6400xf32, #tpu.memory_space<vmem>>, vector<2x64xf32>
    tpu.vector_store %arg11[%c0_94, %c2624], %96 {strides = array<i32>} : memref<2x6400xf32, #tpu.memory_space<vmem>>, vector<2x64xf32>,
    %c84 = arith.constant 84 : index
    %c0_95 = arith.constant 0 : index
    %98 = vector.load %arg10[%c84, %c0_95] : memref<200x64xf32, #tpu.memory_space<vmem>>, vector<2x64xf32>
    %c0_96 = arith.constant 0 : index
    %c2688 = arith.constant 2688 : index
    %99 = vector.load %arg11[%c0_96, %c2688] : memref<2x6400xf32, #tpu.memory_space<vmem>>, vector<2x64xf32>
    tpu.vector_store %arg11[%c0_96, %c2688], %98 {strides = array<i32>} : memref<2x6400xf32, #tpu.memory_space<vmem>>, vector<2x64xf32>,
    %c86 = arith.constant 86 : index
    %c0_97 = arith.constant 0 : index
    %100 = vector.load %arg10[%c86, %c0_97] : memref<200x64xf32, #tpu.memory_space<vmem>>, vector<2x64xf32>
    %c0_98 = arith.constant 0 : index
    %c2752 = arith.constant 2752 : index
    %101 = vector.load %arg11[%c0_98, %c2752] : memref<2x6400xf32, #tpu.memory_space<vmem>>, vector<2x64xf32>
    tpu.vector_store %arg11[%c0_98, %c2752], %100 {strides = array<i32>} : memref<2x6400xf32, #tpu.memory_space<vmem>>, vector<2x64xf32>,
    %c88 = arith.constant 88 : index
    %c0_99 = arith.constant 0 : index
    %102 = vector.load %arg10[%c88, %c0_99] : memref<200x64xf32, #tpu.memory_space<vmem>>, vector<2x64xf32>
    %c0_100 = arith.constant 0 : index
    %c2816 = arith.constant 2816 : index
    %103 = vector.load %arg11[%c0_100, %c2816] : memref<2x6400xf32, #tpu.memory_space<vmem>>, vector<2x64xf32>
    tpu.vector_store %arg11[%c0_100, %c2816], %102 {strides = array<i32>} : memref<2x6400xf32, #tpu.memory_space<vmem>>, vector<2x64xf32>,
    %c90 = arith.constant 90 : index
    %c0_101 = arith.constant 0 : index
    %104 = vector.load %arg10[%c90, %c0_101] : memref<200x64xf32, #tpu.memory_space<vmem>>, vector<2x64xf32>
    %c0_102 = arith.constant 0 : index
    %c2880 = arith.constant 2880 : index
    %105 = vector.load %arg11[%c0_102, %c2880] : memref<2x6400xf32, #tpu.memory_space<vmem>>, vector<2x64xf32>
    tpu.vector_store %arg11[%c0_102, %c2880], %104 {strides = array<i32>} : memref<2x6400xf32, #tpu.memory_space<vmem>>, vector<2x64xf32>,
    %c92 = arith.constant 92 : index
    %c0_103 = arith.constant 0 : index
    %106 = vector.load %arg10[%c92, %c0_103] : memref<200x64xf32, #tpu.memory_space<vmem>>, vector<2x64xf32>
    %c0_104 = arith.constant 0 : index
    %c2944 = arith.constant 2944 : index
    %107 = vector.load %arg11[%c0_104, %c2944] : memref<2x6400xf32, #tpu.memory_space<vmem>>, vector<2x64xf32>
    tpu.vector_store %arg11[%c0_104, %c2944], %106 {strides = array<i32>} : memref<2x6400xf32, #tpu.memory_space<vmem>>, vector<2x64xf32>,
    %c94 = arith.constant 94 : index
    %c0_105 = arith.constant 0 : index
    %108 = vector.load %arg10[%c94, %c0_105] : memref<200x64xf32, #tpu.memory_space<vmem>>, vector<2x64xf32>
    %c0_106 = arith.constant 0 : index
    %c3008 = arith.constant 3008 : index
    %109 = vector.load %arg11[%c0_106, %c3008] : memref<2x6400xf32, #tpu.memory_space<vmem>>, vector<2x64xf32>
    tpu.vector_store %arg11[%c0_106, %c3008], %108 {strides = array<i32>} : memref<2x6400xf32, #tpu.memory_space<vmem>>, vector<2x64xf32>,
    %c96 = arith.constant 96 : index
    %c0_107 = arith.constant 0 : index
    %110 = vector.load %arg10[%c96, %c0_107] : memref<200x64xf32, #tpu.memory_space<vmem>>, vector<2x64xf32>
    %c0_108 = arith.constant 0 : index
    %c3072 = arith.constant 3072 : index
    %111 = vector.load %arg11[%c0_108, %c3072] : memref<2x6400xf32, #tpu.memory_space<vmem>>, vector<2x64xf32>
    tpu.vector_store %arg11[%c0_108, %c3072], %110 {strides = array<i32>} : memref<2x6400xf32, #tpu.memory_space<vmem>>, vector<2x64xf32>,
    %c98 = arith.constant 98 : index
    %c0_109 = arith.constant 0 : index
    %112 = vector.load %arg10[%c98, %c0_109] : memref<200x64xf32, #tpu.memory_space<vmem>>, vector<2x64xf32>
    %c0_110 = arith.constant 0 : index
    %c3136 = arith.constant 3136 : index
    %113 = vector.load %arg11[%c0_110, %c3136] : memref<2x6400xf32, #tpu.memory_space<vmem>>, vector<2x64xf32>
    tpu.vector_store %arg11[%c0_110, %c3136], %112 {strides = array<i32>} : memref<2x6400xf32, #tpu.memory_space<vmem>>, vector<2x64xf32>,
    %c100 = arith.constant 100 : index
    %c0_111 = arith.constant 0 : index
    %114 = vector.load %arg10[%c100, %c0_111] : memref<200x64xf32, #tpu.memory_space<vmem>>, vector<2x64xf32>
    %c0_112 = arith.constant 0 : index
    %c3200 = arith.constant 3200 : index
    %115 = vector.load %arg11[%c0_112, %c3200] : memref<2x6400xf32, #tpu.memory_space<vmem>>, vector<2x64xf32>
    tpu.vector_store %arg11[%c0_112, %c3200], %114 {strides = array<i32>} : memref<2x6400xf32, #tpu.memory_space<vmem>>, vector<2x64xf32>,
    %c102 = arith.constant 102 : index
    %c0_113 = arith.constant 0 : index
    %116 = vector.load %arg10[%c102, %c0_113] : memref<200x64xf32, #tpu.memory_space<vmem>>, vector<2x64xf32>
    %c0_114 = arith.constant 0 : index
    %c3264 = arith.constant 3264 : index
    %117 = vector.load %arg11[%c0_114, %c3264] : memref<2x6400xf32, #tpu.memory_space<vmem>>, vector<2x64xf32>
    tpu.vector_store %arg11[%c0_114, %c3264], %116 {strides = array<i32>} : memref<2x6400xf32, #tpu.memory_space<vmem>>, vector<2x64xf32>,
    %c104 = arith.constant 104 : index
    %c0_115 = arith.constant 0 : index
    %118 = vector.load %arg10[%c104, %c0_115] : memref<200x64xf32, #tpu.memory_space<vmem>>, vector<2x64xf32>
    %c0_116 = arith.constant 0 : index
    %c3328 = arith.constant 3328 : index
    %119 = vector.load %arg11[%c0_116, %c3328] : memref<2x6400xf32, #tpu.memory_space<vmem>>, vector<2x64xf32>
    tpu.vector_store %arg11[%c0_116, %c3328], %118 {strides = array<i32>} : memref<2x6400xf32, #tpu.memory_space<vmem>>, vector<2x64xf32>,
    %c106 = arith.constant 106 : index
    %c0_117 = arith.constant 0 : index
    %120 = vector.load %arg10[%c106, %c0_117] : memref<200x64xf32, #tpu.memory_space<vmem>>, vector<2x64xf32>
    %c0_118 = arith.constant 0 : index
    %c3392 = arith.constant 3392 : index
    %121 = vector.load %arg11[%c0_118, %c3392] : memref<2x6400xf32, #tpu.memory_space<vmem>>, vector<2x64xf32>
    tpu.vector_store %arg11[%c0_118, %c3392], %120 {strides = array<i32>} : memref<2x6400xf32, #tpu.memory_space<vmem>>, vector<2x64xf32>,
    %c108 = arith.constant 108 : index
    %c0_119 = arith.constant 0 : index
    %122 = vector.load %arg10[%c108, %c0_119] : memref<200x64xf32, #tpu.memory_space<vmem>>, vector<2x64xf32>
    %c0_120 = arith.constant 0 : index
    %c3456 = arith.constant 3456 : index
    %123 = vector.load %arg11[%c0_120, %c3456] : memref<2x6400xf32, #tpu.memory_space<vmem>>, vector<2x64xf32>
    tpu.vector_store %arg11[%c0_120, %c3456], %122 {strides = array<i32>} : memref<2x6400xf32, #tpu.memory_space<vmem>>, vector<2x64xf32>,
    %c110 = arith.constant 110 : index
    %c0_121 = arith.constant 0 : index
    %124 = vector.load %arg10[%c110, %c0_121] : memref<200x64xf32, #tpu.memory_space<vmem>>, vector<2x64xf32>
    %c0_122 = arith.constant 0 : index
    %c3520 = arith.constant 3520 : index
    %125 = vector.load %arg11[%c0_122, %c3520] : memref<2x6400xf32, #tpu.memory_space<vmem>>, vector<2x64xf32>
    tpu.vector_store %arg11[%c0_122, %c3520], %124 {strides = array<i32>} : memref<2x6400xf32, #tpu.memory_space<vmem>>, vector<2x64xf32>,
    %c112 = arith.constant 112 : index
    %c0_123 = arith.constant 0 : index
    %126 = vector.load %arg10[%c112, %c0_123] : memref<200x64xf32, #tpu.memory_space<vmem>>, vector<2x64xf32>
    %c0_124 = arith.constant 0 : index
    %c3584 = arith.constant 3584 : index
    %127 = vector.load %arg11[%c0_124, %c3584] : memref<2x6400xf32, #tpu.memory_space<vmem>>, vector<2x64xf32>
    tpu.vector_store %arg11[%c0_124, %c3584], %126 {strides = array<i32>} : memref<2x6400xf32, #tpu.memory_space<vmem>>, vector<2x64xf32>,
    %c114 = arith.constant 114 : index
    %c0_125 = arith.constant 0 : index
    %128 = vector.load %arg10[%c114, %c0_125] : memref<200x64xf32, #tpu.memory_space<vmem>>, vector<2x64xf32>
    %c0_126 = arith.constant 0 : index
    %c3648 = arith.constant 3648 : index
    %129 = vector.load %arg11[%c0_126, %c3648] : memref<2x6400xf32, #tpu.memory_space<vmem>>, vector<2x64xf32>
    tpu.vector_store %arg11[%c0_126, %c3648], %128 {strides = array<i32>} : memref<2x6400xf32, #tpu.memory_space<vmem>>, vector<2x64xf32>,
    %c116 = arith.constant 116 : index
    %c0_127 = arith.constant 0 : index
    %130 = vector.load %arg10[%c116, %c0_127] : memref<200x64xf32, #tpu.memory_space<vmem>>, vector<2x64xf32>
    %c0_128 = arith.constant 0 : index
    %c3712 = arith.constant 3712 : index
    %131 = vector.load %arg11[%c0_128, %c3712] : memref<2x6400xf32, #tpu.memory_space<vmem>>, vector<2x64xf32>
    tpu.vector_store %arg11[%c0_128, %c3712], %130 {strides = array<i32>} : memref<2x6400xf32, #tpu.memory_space<vmem>>, vector<2x64xf32>,
    %c118 = arith.constant 118 : index
    %c0_129 = arith.constant 0 : index
    %132 = vector.load %arg10[%c118, %c0_129] : memref<200x64xf32, #tpu.memory_space<vmem>>, vector<2x64xf32>
    %c0_130 = arith.constant 0 : index
    %c3776 = arith.constant 3776 : index
    %133 = vector.load %arg11[%c0_130, %c3776] : memref<2x6400xf32, #tpu.memory_space<vmem>>, vector<2x64xf32>
    tpu.vector_store %arg11[%c0_130, %c3776], %132 {strides = array<i32>} : memref<2x6400xf32, #tpu.memory_space<vmem>>, vector<2x64xf32>,
    %c120 = arith.constant 120 : index
    %c0_131 = arith.constant 0 : index
    %134 = vector.load %arg10[%c120, %c0_131] : memref<200x64xf32, #tpu.memory_space<vmem>>, vector<2x64xf32>
    %c0_132 = arith.constant 0 : index
    %c3840 = arith.constant 3840 : index
    %135 = vector.load %arg11[%c0_132, %c3840] : memref<2x6400xf32, #tpu.memory_space<vmem>>, vector<2x64xf32>
    tpu.vector_store %arg11[%c0_132, %c3840], %134 {strides = array<i32>} : memref<2x6400xf32, #tpu.memory_space<vmem>>, vector<2x64xf32>,
    %c122 = arith.constant 122 : index
    %c0_133 = arith.constant 0 : index
    %136 = vector.load %arg10[%c122, %c0_133] : memref<200x64xf32, #tpu.memory_space<vmem>>, vector<2x64xf32>
    %c0_134 = arith.constant 0 : index
    %c3904 = arith.constant 3904 : index
    %137 = vector.load %arg11[%c0_134, %c3904] : memref<2x6400xf32, #tpu.memory_space<vmem>>, vector<2x64xf32>
    tpu.vector_store %arg11[%c0_134, %c3904], %136 {strides = array<i32>} : memref<2x6400xf32, #tpu.memory_space<vmem>>, vector<2x64xf32>,
    %c124 = arith.constant 124 : index
    %c0_135 = arith.constant 0 : index
    %138 = vector.load %arg10[%c124, %c0_135] : memref<200x64xf32, #tpu.memory_space<vmem>>, vector<2x64xf32>
    %c0_136 = arith.constant 0 : index
    %c3968 = arith.constant 3968 : index
    %139 = vector.load %arg11[%c0_136, %c3968] : memref<2x6400xf32, #tpu.memory_space<vmem>>, vector<2x64xf32>
    tpu.vector_store %arg11[%c0_136, %c3968], %138 {strides = array<i32>} : memref<2x6400xf32, #tpu.memory_space<vmem>>, vector<2x64xf32>,
    %c126 = arith.constant 126 : index
    %c0_137 = arith.constant 0 : index
    %140 = vector.load %arg10[%c126, %c0_137] : memref<200x64xf32, #tpu.memory_space<vmem>>, vector<2x64xf32>
    %c0_138 = arith.constant 0 : index
    %c4032 = arith.constant 4032 : index
    %141 = vector.load %arg11[%c0_138, %c4032] : memref<2x6400xf32, #tpu.memory_space<vmem>>, vector<2x64xf32>
    tpu.vector_store %arg11[%c0_138, %c4032], %140 {strides = array<i32>} : memref<2x6400xf32, #tpu.memory_space<vmem>>, vector<2x64xf32>,
    %c128_139 = arith.constant 128 : index
    %c0_140 = arith.constant 0 : index
    %142 = vector.load %arg10[%c128_139, %c0_140] : memref<200x64xf32, #tpu.memory_space<vmem>>, vector<2x64xf32>
    %c0_141 = arith.constant 0 : index
    %c4096 = arith.constant 4096 : index
    %143 = vector.load %arg11[%c0_141, %c4096] : memref<2x6400xf32, #tpu.memory_space<vmem>>, vector<2x64xf32>
    tpu.vector_store %arg11[%c0_141, %c4096], %142 {strides = array<i32>} : memref<2x6400xf32, #tpu.memory_space<vmem>>, vector<2x64xf32>,
    %c130 = arith.constant 130 : index
    %c0_142 = arith.constant 0 : index
    %144 = vector.load %arg10[%c130, %c0_142] : memref<200x64xf32, #tpu.memory_space<vmem>>, vector<2x64xf32>
    %c0_143 = arith.constant 0 : index
    %c4160 = arith.constant 4160 : index
    %145 = vector.load %arg11[%c0_143, %c4160] : memref<2x6400xf32, #tpu.memory_space<vmem>>, vector<2x64xf32>
    tpu.vector_store %arg11[%c0_143, %c4160], %144 {strides = array<i32>} : memref<2x6400xf32, #tpu.memory_space<vmem>>, vector<2x64xf32>,
    %c132 = arith.constant 132 : index
    %c0_144 = arith.constant 0 : index
    %146 = vector.load %arg10[%c132, %c0_144] : memref<200x64xf32, #tpu.memory_space<vmem>>, vector<2x64xf32>
    %c0_145 = arith.constant 0 : index
    %c4224 = arith.constant 4224 : index
    %147 = vector.load %arg11[%c0_145, %c4224] : memref<2x6400xf32, #tpu.memory_space<vmem>>, vector<2x64xf32>
    tpu.vector_store %arg11[%c0_145, %c4224], %146 {strides = array<i32>} : memref<2x6400xf32, #tpu.memory_space<vmem>>, vector<2x64xf32>,
    %c134 = arith.constant 134 : index
    %c0_146 = arith.constant 0 : index
    %148 = vector.load %arg10[%c134, %c0_146] : memref<200x64xf32, #tpu.memory_space<vmem>>, vector<2x64xf32>
    %c0_147 = arith.constant 0 : index
    %c4288 = arith.constant 4288 : index
    %149 = vector.load %arg11[%c0_147, %c4288] : memref<2x6400xf32, #tpu.memory_space<vmem>>, vector<2x64xf32>
    tpu.vector_store %arg11[%c0_147, %c4288], %148 {strides = array<i32>} : memref<2x6400xf32, #tpu.memory_space<vmem>>, vector<2x64xf32>,
    %c136 = arith.constant 136 : index
    %c0_148 = arith.constant 0 : index
    %150 = vector.load %arg10[%c136, %c0_148] : memref<200x64xf32, #tpu.memory_space<vmem>>, vector<2x64xf32>
    %c0_149 = arith.constant 0 : index
    %c4352 = arith.constant 4352 : index
    %151 = vector.load %arg11[%c0_149, %c4352] : memref<2x6400xf32, #tpu.memory_space<vmem>>, vector<2x64xf32>
    tpu.vector_store %arg11[%c0_149, %c4352], %150 {strides = array<i32>} : memref<2x6400xf32, #tpu.memory_space<vmem>>, vector<2x64xf32>,
    %c138 = arith.constant 138 : index
    %c0_150 = arith.constant 0 : index
    %152 = vector.load %arg10[%c138, %c0_150] : memref<200x64xf32, #tpu.memory_space<vmem>>, vector<2x64xf32>
    %c0_151 = arith.constant 0 : index
    %c4416 = arith.constant 4416 : index
    %153 = vector.load %arg11[%c0_151, %c4416] : memref<2x6400xf32, #tpu.memory_space<vmem>>, vector<2x64xf32>
    tpu.vector_store %arg11[%c0_151, %c4416], %152 {strides = array<i32>} : memref<2x6400xf32, #tpu.memory_space<vmem>>, vector<2x64xf32>,
    %c140 = arith.constant 140 : index
    %c0_152 = arith.constant 0 : index
    %154 = vector.load %arg10[%c140, %c0_152] : memref<200x64xf32, #tpu.memory_space<vmem>>, vector<2x64xf32>
    %c0_153 = arith.constant 0 : index
    %c4480 = arith.constant 4480 : index
    %155 = vector.load %arg11[%c0_153, %c4480] : memref<2x6400xf32, #tpu.memory_space<vmem>>, vector<2x64xf32>
    tpu.vector_store %arg11[%c0_153, %c4480], %154 {strides = array<i32>} : memref<2x6400xf32, #tpu.memory_space<vmem>>, vector<2x64xf32>,
    %c142 = arith.constant 142 : index
    %c0_154 = arith.constant 0 : index
    %156 = vector.load %arg10[%c142, %c0_154] : memref<200x64xf32, #tpu.memory_space<vmem>>, vector<2x64xf32>
    %c0_155 = arith.constant 0 : index
    %c4544 = arith.constant 4544 : index
    %157 = vector.load %arg11[%c0_155, %c4544] : memref<2x6400xf32, #tpu.memory_space<vmem>>, vector<2x64xf32>
    tpu.vector_store %arg11[%c0_155, %c4544], %156 {strides = array<i32>} : memref<2x6400xf32, #tpu.memory_space<vmem>>, vector<2x64xf32>,
    %c144 = arith.constant 144 : index
    %c0_156 = arith.constant 0 : index
    %158 = vector.load %arg10[%c144, %c0_156] : memref<200x64xf32, #tpu.memory_space<vmem>>, vector<2x64xf32>
    %c0_157 = arith.constant 0 : index
    %c4608 = arith.constant 4608 : index
    %159 = vector.load %arg11[%c0_157, %c4608] : memref<2x6400xf32, #tpu.memory_space<vmem>>, vector<2x64xf32>
    tpu.vector_store %arg11[%c0_157, %c4608], %158 {strides = array<i32>} : memref<2x6400xf32, #tpu.memory_space<vmem>>, vector<2x64xf32>,
    %c146 = arith.constant 146 : index
    %c0_158 = arith.constant 0 : index
    %160 = vector.load %arg10[%c146, %c0_158] : memref<200x64xf32, #tpu.memory_space<vmem>>, vector<2x64xf32>
    %c0_159 = arith.constant 0 : index
    %c4672 = arith.constant 4672 : index
    %161 = vector.load %arg11[%c0_159, %c4672] : memref<2x6400xf32, #tpu.memory_space<vmem>>, vector<2x64xf32>
    tpu.vector_store %arg11[%c0_159, %c4672], %160 {strides = array<i32>} : memref<2x6400xf32, #tpu.memory_space<vmem>>, vector<2x64xf32>,
    %c148 = arith.constant 148 : index
    %c0_160 = arith.constant 0 : index
    %162 = vector.load %arg10[%c148, %c0_160] : memref<200x64xf32, #tpu.memory_space<vmem>>, vector<2x64xf32>
    %c0_161 = arith.constant 0 : index
    %c4736 = arith.constant 4736 : index
    %163 = vector.load %arg11[%c0_161, %c4736] : memref<2x6400xf32, #tpu.memory_space<vmem>>, vector<2x64xf32>
    tpu.vector_store %arg11[%c0_161, %c4736], %162 {strides = array<i32>} : memref<2x6400xf32, #tpu.memory_space<vmem>>, vector<2x64xf32>,
    %c150 = arith.constant 150 : index
    %c0_162 = arith.constant 0 : index
    %164 = vector.load %arg10[%c150, %c0_162] : memref<200x64xf32, #tpu.memory_space<vmem>>, vector<2x64xf32>
    %c0_163 = arith.constant 0 : index
    %c4800 = arith.constant 4800 : index
    %165 = vector.load %arg11[%c0_163, %c4800] : memref<2x6400xf32, #tpu.memory_space<vmem>>, vector<2x64xf32>
    tpu.vector_store %arg11[%c0_163, %c4800], %164 {strides = array<i32>} : memref<2x6400xf32, #tpu.memory_space<vmem>>, vector<2x64xf32>,
    %c152 = arith.constant 152 : index
    %c0_164 = arith.constant 0 : index
    %166 = vector.load %arg10[%c152, %c0_164] : memref<200x64xf32, #tpu.memory_space<vmem>>, vector<2x64xf32>
    %c0_165 = arith.constant 0 : index
    %c4864 = arith.constant 4864 : index
    %167 = vector.load %arg11[%c0_165, %c4864] : memref<2x6400xf32, #tpu.memory_space<vmem>>, vector<2x64xf32>
    tpu.vector_store %arg11[%c0_165, %c4864], %166 {strides = array<i32>} : memref<2x6400xf32, #tpu.memory_space<vmem>>, vector<2x64xf32>,
    %c154 = arith.constant 154 : index
    %c0_166 = arith.constant 0 : index
    %168 = vector.load %arg10[%c154, %c0_166] : memref<200x64xf32, #tpu.memory_space<vmem>>, vector<2x64xf32>
    %c0_167 = arith.constant 0 : index
    %c4928 = arith.constant 4928 : index
    %169 = vector.load %arg11[%c0_167, %c4928] : memref<2x6400xf32, #tpu.memory_space<vmem>>, vector<2x64xf32>
    tpu.vector_store %arg11[%c0_167, %c4928], %168 {strides = array<i32>} : memref<2x6400xf32, #tpu.memory_space<vmem>>, vector<2x64xf32>,
    %c156 = arith.constant 156 : index
    %c0_168 = arith.constant 0 : index
    %170 = vector.load %arg10[%c156, %c0_168] : memref<200x64xf32, #tpu.memory_space<vmem>>, vector<2x64xf32>
    %c0_169 = arith.constant 0 : index
    %c4992 = arith.constant 4992 : index
    %171 = vector.load %arg11[%c0_169, %c4992] : memref<2x6400xf32, #tpu.memory_space<vmem>>, vector<2x64xf32>
    tpu.vector_store %arg11[%c0_169, %c4992], %170 {strides = array<i32>} : memref<2x6400xf32, #tpu.memory_space<vmem>>, vector<2x64xf32>,
    %c158 = arith.constant 158 : index
    %c0_170 = arith.constant 0 : index
    %172 = vector.load %arg10[%c158, %c0_170] : memref<200x64xf32, #tpu.memory_space<vmem>>, vector<2x64xf32>
    %c0_171 = arith.constant 0 : index
    %c5056 = arith.constant 5056 : index
    %173 = vector.load %arg11[%c0_171, %c5056] : memref<2x6400xf32, #tpu.memory_space<vmem>>, vector<2x64xf32>
    tpu.vector_store %arg11[%c0_171, %c5056], %172 {strides = array<i32>} : memref<2x6400xf32, #tpu.memory_space<vmem>>, vector<2x64xf32>,
    %c160 = arith.constant 160 : index
    %c0_172 = arith.constant 0 : index
    %174 = vector.load %arg10[%c160, %c0_172] : memref<200x64xf32, #tpu.memory_space<vmem>>, vector<2x64xf32>
    %c0_173 = arith.constant 0 : index
    %c5120 = arith.constant 5120 : index
    %175 = vector.load %arg11[%c0_173, %c5120] : memref<2x6400xf32, #tpu.memory_space<vmem>>, vector<2x64xf32>
    tpu.vector_store %arg11[%c0_173, %c5120], %174 {strides = array<i32>} : memref<2x6400xf32, #tpu.memory_space<vmem>>, vector<2x64xf32>,
    %c162 = arith.constant 162 : index
    %c0_174 = arith.constant 0 : index
    %176 = vector.load %arg10[%c162, %c0_174] : memref<200x64xf32, #tpu.memory_space<vmem>>, vector<2x64xf32>
    %c0_175 = arith.constant 0 : index
    %c5184 = arith.constant 5184 : index
    %177 = vector.load %arg11[%c0_175, %c5184] : memref<2x6400xf32, #tpu.memory_space<vmem>>, vector<2x64xf32>
    tpu.vector_store %arg11[%c0_175, %c5184], %176 {strides = array<i32>} : memref<2x6400xf32, #tpu.memory_space<vmem>>, vector<2x64xf32>,
    %c164 = arith.constant 164 : index
    %c0_176 = arith.constant 0 : index
    %178 = vector.load %arg10[%c164, %c0_176] : memref<200x64xf32, #tpu.memory_space<vmem>>, vector<2x64xf32>
    %c0_177 = arith.constant 0 : index
    %c5248 = arith.constant 5248 : index
    %179 = vector.load %arg11[%c0_177, %c5248] : memref<2x6400xf32, #tpu.memory_space<vmem>>, vector<2x64xf32>
    tpu.vector_store %arg11[%c0_177, %c5248], %178 {strides = array<i32>} : memref<2x6400xf32, #tpu.memory_space<vmem>>, vector<2x64xf32>,
    %c166 = arith.constant 166 : index
    %c0_178 = arith.constant 0 : index
    %180 = vector.load %arg10[%c166, %c0_178] : memref<200x64xf32, #tpu.memory_space<vmem>>, vector<2x64xf32>
    %c0_179 = arith.constant 0 : index
    %c5312 = arith.constant 5312 : index
    %181 = vector.load %arg11[%c0_179, %c5312] : memref<2x6400xf32, #tpu.memory_space<vmem>>, vector<2x64xf32>
    tpu.vector_store %arg11[%c0_179, %c5312], %180 {strides = array<i32>} : memref<2x6400xf32, #tpu.memory_space<vmem>>, vector<2x64xf32>,
    %c168 = arith.constant 168 : index
    %c0_180 = arith.constant 0 : index
    %182 = vector.load %arg10[%c168, %c0_180] : memref<200x64xf32, #tpu.memory_space<vmem>>, vector<2x64xf32>
    %c0_181 = arith.constant 0 : index
    %c5376 = arith.constant 5376 : index
    %183 = vector.load %arg11[%c0_181, %c5376] : memref<2x6400xf32, #tpu.memory_space<vmem>>, vector<2x64xf32>
    tpu.vector_store %arg11[%c0_181, %c5376], %182 {strides = array<i32>} : memref<2x6400xf32, #tpu.memory_space<vmem>>, vector<2x64xf32>,
    %c170 = arith.constant 170 : index
    %c0_182 = arith.constant 0 : index
    %184 = vector.load %arg10[%c170, %c0_182] : memref<200x64xf32, #tpu.memory_space<vmem>>, vector<2x64xf32>
    %c0_183 = arith.constant 0 : index
    %c5440 = arith.constant 5440 : index
    %185 = vector.load %arg11[%c0_183, %c5440] : memref<2x6400xf32, #tpu.memory_space<vmem>>, vector<2x64xf32>
    tpu.vector_store %arg11[%c0_183, %c5440], %184 {strides = array<i32>} : memref<2x6400xf32, #tpu.memory_space<vmem>>, vector<2x64xf32>,
    %c172 = arith.constant 172 : index
    %c0_184 = arith.constant 0 : index
    %186 = vector.load %arg10[%c172, %c0_184] : memref<200x64xf32, #tpu.memory_space<vmem>>, vector<2x64xf32>
    %c0_185 = arith.constant 0 : index
    %c5504 = arith.constant 5504 : index
    %187 = vector.load %arg11[%c0_185, %c5504] : memref<2x6400xf32, #tpu.memory_space<vmem>>, vector<2x64xf32>
    tpu.vector_store %arg11[%c0_185, %c5504], %186 {strides = array<i32>} : memref<2x6400xf32, #tpu.memory_space<vmem>>, vector<2x64xf32>,
    %c174 = arith.constant 174 : index
    %c0_186 = arith.constant 0 : index
    %188 = vector.load %arg10[%c174, %c0_186] : memref<200x64xf32, #tpu.memory_space<vmem>>, vector<2x64xf32>
    %c0_187 = arith.constant 0 : index
    %c5568 = arith.constant 5568 : index
    %189 = vector.load %arg11[%c0_187, %c5568] : memref<2x6400xf32, #tpu.memory_space<vmem>>, vector<2x64xf32>
    tpu.vector_store %arg11[%c0_187, %c5568], %188 {strides = array<i32>} : memref<2x6400xf32, #tpu.memory_space<vmem>>, vector<2x64xf32>,
    %c176 = arith.constant 176 : index
    %c0_188 = arith.constant 0 : index
    %190 = vector.load %arg10[%c176, %c0_188] : memref<200x64xf32, #tpu.memory_space<vmem>>, vector<2x64xf32>
    %c0_189 = arith.constant 0 : index
    %c5632 = arith.constant 5632 : index
    %191 = vector.load %arg11[%c0_189, %c5632] : memref<2x6400xf32, #tpu.memory_space<vmem>>, vector<2x64xf32>
    tpu.vector_store %arg11[%c0_189, %c5632], %190 {strides = array<i32>} : memref<2x6400xf32, #tpu.memory_space<vmem>>, vector<2x64xf32>,
    %c178 = arith.constant 178 : index
    %c0_190 = arith.constant 0 : index
    %192 = vector.load %arg10[%c178, %c0_190] : memref<200x64xf32, #tpu.memory_space<vmem>>, vector<2x64xf32>
    %c0_191 = arith.constant 0 : index
    %c5696 = arith.constant 5696 : index
    %193 = vector.load %arg11[%c0_191, %c5696] : memref<2x6400xf32, #tpu.memory_space<vmem>>, vector<2x64xf32>
    tpu.vector_store %arg11[%c0_191, %c5696], %192 {strides = array<i32>} : memref<2x6400xf32, #tpu.memory_space<vmem>>, vector<2x64xf32>,
    %c180 = arith.constant 180 : index
    %c0_192 = arith.constant 0 : index
    %194 = vector.load %arg10[%c180, %c0_192] : memref<200x64xf32, #tpu.memory_space<vmem>>, vector<2x64xf32>
    %c0_193 = arith.constant 0 : index
    %c5760 = arith.constant 5760 : index
    %195 = vector.load %arg11[%c0_193, %c5760] : memref<2x6400xf32, #tpu.memory_space<vmem>>, vector<2x64xf32>
    tpu.vector_store %arg11[%c0_193, %c5760], %194 {strides = array<i32>} : memref<2x6400xf32, #tpu.memory_space<vmem>>, vector<2x64xf32>,
    %c182 = arith.constant 182 : index
    %c0_194 = arith.constant 0 : index
    %196 = vector.load %arg10[%c182, %c0_194] : memref<200x64xf32, #tpu.memory_space<vmem>>, vector<2x64xf32>
    %c0_195 = arith.constant 0 : index
    %c5824 = arith.constant 5824 : index
    %197 = vector.load %arg11[%c0_195, %c5824] : memref<2x6400xf32, #tpu.memory_space<vmem>>, vector<2x64xf32>
    tpu.vector_store %arg11[%c0_195, %c5824], %196 {strides = array<i32>} : memref<2x6400xf32, #tpu.memory_space<vmem>>, vector<2x64xf32>,
    %c184 = arith.constant 184 : index
    %c0_196 = arith.constant 0 : index
    %198 = vector.load %arg10[%c184, %c0_196] : memref<200x64xf32, #tpu.memory_space<vmem>>, vector<2x64xf32>
    %c0_197 = arith.constant 0 : index
    %c5888 = arith.constant 5888 : index
    %199 = vector.load %arg11[%c0_197, %c5888] : memref<2x6400xf32, #tpu.memory_space<vmem>>, vector<2x64xf32>
    tpu.vector_store %arg11[%c0_197, %c5888], %198 {strides = array<i32>} : memref<2x6400xf32, #tpu.memory_space<vmem>>, vector<2x64xf32>,
    %c186 = arith.constant 186 : index
    %c0_198 = arith.constant 0 : index
    %200 = vector.load %arg10[%c186, %c0_198] : memref<200x64xf32, #tpu.memory_space<vmem>>, vector<2x64xf32>
    %c0_199 = arith.constant 0 : index
    %c5952 = arith.constant 5952 : index
    %201 = vector.load %arg11[%c0_199, %c5952] : memref<2x6400xf32, #tpu.memory_space<vmem>>, vector<2x64xf32>
    tpu.vector_store %arg11[%c0_199, %c5952], %200 {strides = array<i32>} : memref<2x6400xf32, #tpu.memory_space<vmem>>, vector<2x64xf32>,
    %c188 = arith.constant 188 : index
    %c0_200 = arith.constant 0 : index
    %202 = vector.load %arg10[%c188, %c0_200] : memref<200x64xf32, #tpu.memory_space<vmem>>, vector<2x64xf32>
    %c0_201 = arith.constant 0 : index
    %c6016 = arith.constant 6016 : index
    %203 = vector.load %arg11[%c0_201, %c6016] : memref<2x6400xf32, #tpu.memory_space<vmem>>, vector<2x64xf32>
    tpu.vector_store %arg11[%c0_201, %c6016], %202 {strides = array<i32>} : memref<2x6400xf32, #tpu.memory_space<vmem>>, vector<2x64xf32>,
    %c190 = arith.constant 190 : index
    %c0_202 = arith.constant 0 : index
    %204 = vector.load %arg10[%c190, %c0_202] : memref<200x64xf32, #tpu.memory_space<vmem>>, vector<2x64xf32>
    %c0_203 = arith.constant 0 : index
    %c6080 = arith.constant 6080 : index
    %205 = vector.load %arg11[%c0_203, %c6080] : memref<2x6400xf32, #tpu.memory_space<vmem>>, vector<2x64xf32>
    tpu.vector_store %arg11[%c0_203, %c6080], %204 {strides = array<i32>} : memref<2x6400xf32, #tpu.memory_space<vmem>>, vector<2x64xf32>,
    %c192_204 = arith.constant 192 : index
    %c0_205 = arith.constant 0 : index
    %206 = vector.load %arg10[%c192_204, %c0_205] : memref<200x64xf32, #tpu.memory_space<vmem>>, vector<2x64xf32>
    %c0_206 = arith.constant 0 : index
    %c6144 = arith.constant 6144 : index
    %207 = vector.load %arg11[%c0_206, %c6144] : memref<2x6400xf32, #tpu.memory_space<vmem>>, vector<2x64xf32>
    tpu.vector_store %arg11[%c0_206, %c6144], %206 {strides = array<i32>} : memref<2x6400xf32, #tpu.memory_space<vmem>>, vector<2x64xf32>,
    %c194 = arith.constant 194 : index
    %c0_207 = arith.constant 0 : index
    %208 = vector.load %arg10[%c194, %c0_207] : memref<200x64xf32, #tpu.memory_space<vmem>>, vector<2x64xf32>
    %c0_208 = arith.constant 0 : index
    %c6208 = arith.constant 6208 : index
    %209 = vector.load %arg11[%c0_208, %c6208] : memref<2x6400xf32, #tpu.memory_space<vmem>>, vector<2x64xf32>
    tpu.vector_store %arg11[%c0_208, %c6208], %208 {strides = array<i32>} : memref<2x6400xf32, #tpu.memory_space<vmem>>, vector<2x64xf32>,
    %c196 = arith.constant 196 : index
    %c0_209 = arith.constant 0 : index
    %210 = vector.load %arg10[%c196, %c0_209] : memref<200x64xf32, #tpu.memory_space<vmem>>, vector<2x64xf32>
    %c0_210 = arith.constant 0 : index
    %c6272 = arith.constant 6272 : index
    %211 = vector.load %arg11[%c0_210, %c6272] : memref<2x6400xf32, #tpu.memory_space<vmem>>, vector<2x64xf32>
    tpu.vector_store %arg11[%c0_210, %c6272], %210 {strides = array<i32>} : memref<2x6400xf32, #tpu.memory_space<vmem>>, vector<2x64xf32>,
    %c198 = arith.constant 198 : index
    %c0_211 = arith.constant 0 : index
    %212 = vector.load %arg10[%c198, %c0_211] : memref<200x64xf32, #tpu.memory_space<vmem>>, vector<2x64xf32>
    %c0_212 = arith.constant 0 : index
    %c6336 = arith.constant 6336 : index
    %213 = vector.load %arg11[%c0_212, %c6336] : memref<2x6400xf32, #tpu.memory_space<vmem>>, vector<2x64xf32>
    tpu.vector_store %arg11[%c0_212, %c6336], %212 {strides = array<i32>} : memref<2x6400xf32, #tpu.memory_space<vmem>>, vector<2x64xf32>,
    %c0_i32_213 = arith.constant 0 : i32
    %214 = tpu.memref_slice %arg13[%c0_i32_213] : memref<1x!tpu.dma_semaphore, #tpu.memory_space<semaphore_mem>> -> memref<1x!tpu.dma_semaphore, #tpu.memory_space<semaphore_mem>>
    %215 = tpu.memref_squeeze %214 : memref<1x!tpu.dma_semaphore, #tpu.memory_space<semaphore_mem>> -> memref<!tpu.dma_semaphore, #tpu.memory_space<semaphore_mem>>
    tpu.wait_dma2 semaphore(%215 : memref<!tpu.dma_semaphore, #tpu.memory_space<semaphore_mem>>) src(%arg3 : memref<32x6400xf32, #tpu.memory_space<any>>) dst(%arg12 : memref<32x6400xf32, #tpu.memory_space<vmem>>)
    %c0_214 = arith.constant 0 : index
    %c0_215 = arith.constant 0 : index
    %216 = vector.load %arg11[%c0_214, %c0_215] : memref<2x6400xf32, #tpu.memory_space<vmem>>, vector<2x6400xf32>
    %c0_216 = arith.constant 0 : index
    %c0_217 = arith.constant 0 : index
    %217 = vector.load %arg12[%c0_216, %c0_217] : memref<32x6400xf32, #tpu.memory_space<vmem>>, vector<32x6400xf32>
    %cst_218 = arith.constant dense<0.000000e+00> : vector<2x32xf32>
    %218 = tpu.matmul %216, %217, %cst_218 {dimension_numbers = #tpu.dot_dimension_numbers<[1], [1], [0], [0], [0, 0, 1, 0], [], []>} : vector<2x6400xf32>, vector<32x6400xf32>, vector<2x32xf32> -> vector<2x32xf32>
    %c0_219 = arith.constant 0 : index
    %c0_220 = arith.constant 0 : index
    %219 = vector.load %arg4[%c0_219, %c0_220] : memref<1x32xf32, #tpu.memory_space<vmem>>, vector<1x32xf32>
    %220 = vector.broadcast %219 : vector<1x32xf32> to vector<2x32xf32>
    %221 = arith.addf %218, %220 : vector<2x32xf32>
    %c0_221 = arith.constant 0 : index
    %c0_222 = arith.constant 0 : index
    %222 = vector.load %arg5[%c0_221, %c0_222] : memref<96x32xf32, #tpu.memory_space<vmem>>, vector<96x32xf32>
    %cst_223 = arith.constant dense<0.000000e+00> : vector<2x96xf32>
    %223 = tpu.matmul %221, %222, %cst_223 {dimension_numbers = #tpu.dot_dimension_numbers<[1], [1], [0], [0], [0, 0, 1, 0], [], []>} : vector<2x32xf32>, vector<96x32xf32>, vector<2x96xf32> -> vector<2x96xf32>
    %c0_224 = arith.constant 0 : index
    %c0_225 = arith.constant 0 : index
    %224 = vector.load %arg6[%c0_224, %c0_225] : memref<1x96xf32, #tpu.memory_space<vmem>>, vector<1x96xf32>
    %225 = vector.broadcast %224 : vector<1x96xf32> to vector<2x96xf32>
    %226 = arith.addf %223, %225 : vector<2x96xf32>
    %227 = vector.extract_strided_slice %226 {offsets = [0, 0], sizes = [2, 32], strides = [1, 1]} : vector<2x96xf32> to vector<2x32xf32>
    %228 = arith.negf %227 : vector<2x32xf32>
    %229 = math.exp %228 : vector<2x32xf32>
    %cst_226 = arith.constant 1.000000e+00 : f32
    %230 = vector.broadcast %cst_226 : f32 to vector<2x32xf32>
    %231 = arith.addf %230, %229 : vector<2x32xf32>
    %232 = arith.divf %230, %231 : vector<2x32xf32>
    %233 = vector.extract_strided_slice %226 {offsets = [0, 32], sizes = [2, 32], strides = [1, 1]} : vector<2x96xf32> to vector<2x32xf32>
    %234 = math.tanh %233 : vector<2x32xf32>
    %235 = vector.extract_strided_slice %226 {offsets = [0, 64], sizes = [2, 32], strides = [1, 1]} : vector<2x96xf32> to vector<2x32xf32>
    %236 = arith.negf %235 : vector<2x32xf32>
    %237 = math.exp %236 : vector<2x32xf32>
    %cst_227 = arith.constant 1.000000e+00 : f32
    %238 = vector.broadcast %cst_227 : f32 to vector<2x32xf32>
    %239 = arith.addf %238, %237 : vector<2x32xf32>
    %240 = arith.divf %238, %239 : vector<2x32xf32>
    %241 = arith.mulf %232, %234 : vector<2x32xf32>
    %242 = math.tanh %241 : vector<2x32xf32>
    %243 = arith.mulf %240, %242 : vector<2x32xf32>
    %c0_228 = arith.constant 0 : index
    %c0_229 = arith.constant 0 : index
    %244 = vector.load %arg7[%c0_228, %c0_229] : memref<8x32xf32, #tpu.memory_space<vmem>>, vector<8x32xf32>
    %cst_230 = arith.constant dense<0.000000e+00> : vector<2x8xf32>
    %245 = tpu.matmul %243, %244, %cst_230 {dimension_numbers = #tpu.dot_dimension_numbers<[1], [1], [0], [0], [0, 0, 1, 0], [], []>} : vector<2x32xf32>, vector<8x32xf32>, vector<2x8xf32> -> vector<2x8xf32>
    %c0_231 = arith.constant 0 : index
    %c0_232 = arith.constant 0 : index
    %246 = vector.load %arg8[%c0_231, %c0_232] : memref<1x8xf32, #tpu.memory_space<vmem>>, vector<1x8xf32>
    %247 = vector.broadcast %246 : vector<1x8xf32> to vector<2x8xf32>
    %248 = arith.addf %245, %247 : vector<2x8xf32>
    %c0_233 = arith.constant 0 : index
    %c0_234 = arith.constant 0 : index
    %249 = vector.load %arg9[%c0_233, %c0_234] : memref<2x8xf32, #tpu.memory_space<vmem>>, vector<2x8xf32>
    tpu.vector_store %arg9[%c0_233, %c0_234], %248 {strides = array<i32>} : memref<2x8xf32, #tpu.memory_space<vmem>>, vector<2x8xf32>,
    return
  }
}

</mosaic_0001>

<llo_original>
// kernel: base_cnn_con_lstm_forward.1
$region0: #{base_cnn_con_lstm_forward.1}
  #allocation0 [shape = 'u32[]', space=smem, size = 0x4, offset = 0x4, fixed_abs, tag = 'smem constant byte address 0x4 - core index']
  #allocation1 [shape = 'u32[144,128]{1,0:T(1,128)}', space=vmem, size = 0x12000, scoped, tag = 'internal scratch']
  #allocation2 [shape = 'f32[200,64]{1,0:T(8,128)}', space=vmem, size = 0x19000, scoped, tag = 'scratch operand']
  #allocation3 [shape = 'f32[2,6400]{1,0:T(2,128)}', space=vmem, size = 0xc800, scoped, tag = 'scratch operand']
  #allocation4 [shape = 'f32[32,6400]{1,0:T(8,128)}', space=vmem, size = 0xc8000, scoped, tag = 'scratch operand']
  #allocation5 [shape = 's32[1]{0}', space=sflag, size = 0x4, scoped, tag = 'scratch operand']
  #allocation8 [shape = 's32[]', space=sflag, size = 0x4, offset = 0, fixed_abs, tag = 'sflag constant byte address 0x0 - dummy sync flag']
  %s0 = inlined_call_operand.vmem [shape: f32[400,3], index: 0, kind: input, shape index: {}]
  %s1 = inlined_call_operand.vmem [shape: f32[3,64], index: 1, kind: input, shape index: {}]
  %s2 = inlined_call_operand.vmem [shape: f32[1,64], index: 2, kind: input, shape index: {}]
  %s3 = inlined_call_operand.vmem [shape: f32[32,6400], index: 3, kind: input, shape index: {}]
  %s4 = inlined_call_operand.vmem [shape: f32[1,32], index: 4, kind: input, shape index: {}]
  %s5 = inlined_call_operand.vmem [shape: f32[96,32], index: 5, kind: input, shape index: {}]
  %s6 = inlined_call_operand.vmem [shape: f32[1,96], index: 6, kind: input, shape index: {}]
  %s7 = inlined_call_operand.vmem [shape: f32[8,32], index: 7, kind: input, shape index: {}]
  %s8 = inlined_call_operand.vmem [shape: f32[1,8], index: 8, kind: input, shape index: {}]
  %s9 = inlined_call_operand.hbm [shape: f32[2,8], index: 9, kind: output, shape index: {}]
  %s10 = sld [smem:[#allocation0]]
  $region76: #{base_cnn_con_lstm_forward.1} parent=0
    _
  %s12 = ssub.s32 1, %s10
  %s13 = scalar_select 0, %s12, %s10
  $region1: #{base_cnn_con_lstm_forward.1} parent=0
    #allocation6 [shape = 'u8[1024]{0}', space=vmem, size = 0x400, scoped, tag = 'output window, operand 0, single buffered']
    #allocation7 [shape = 's32[1]{0}', space=sflag, size = 0x4, scoped, tag = 'scoped memory for base_cnn_con_lstm_forward.1']
    %14 = vsyncpa [#allocation7], 0
    // Predicated region
    $region2: #{base_cnn_con_lstm_forward.1} parent=1 // pred_check
      _
    $region3: #{base_cnn_con_lstm_forward.1} parent=1 // pred_check_branch
      %16 = sbr.rel (0) target = $region5
    $region4: #{base_cnn_con_lstm_forward.1} parent=1 // pred_region
      _
    $region5: #{base_cnn_con_lstm_forward.1} parent=1 // pred_fallthru
      _
    // Predicated region
    $region6: #{base_cnn_con_lstm_forward.1} parent=1 // pred_check
      _
    $region7: #{base_cnn_con_lstm_forward.1} parent=1 // pred_check_branch
      %18 = sbr.rel (0) target = $region9
    $region8: #{base_cnn_con_lstm_forward.1} parent=1 // pred_region
      _
    $region9: #{base_cnn_con_lstm_forward.1} parent=1 // pred_fallthru
      _
    // Predicated region
    $region10: #{base_cnn_con_lstm_forward.1} parent=1 // pred_check
      _
    $region11: #{base_cnn_con_lstm_forward.1} parent=1 // pred_check_branch
      %20 = sbr.rel (0) target = $region13
    $region12: #{base_cnn_con_lstm_forward.1} parent=1 // pred_region
      _
    $region13: #{base_cnn_con_lstm_forward.1} parent=1 // pred_fallthru
      _
    // Predicated region
    $region14: #{base_cnn_con_lstm_forward.1} parent=1 // pred_check
      _
    $region15: #{base_cnn_con_lstm_forward.1} parent=1 // pred_check_branch
      %22 = sbr.rel (0) target = $region17
    $region16: #{base_cnn_con_lstm_forward.1} parent=1 // pred_region
      _
    $region17: #{base_cnn_con_lstm_forward.1} parent=1 // pred_fallthru
      _
    // Predicated region
    $region18: #{base_cnn_con_lstm_forward.1} parent=1 // pred_check
      _
    $region19: #{base_cnn_con_lstm_forward.1} parent=1 // pred_check_branch
      %24 = sbr.rel (0) target = $region21
    $region20: #{base_cnn_con_lstm_forward.1} parent=1 // pred_region
      _
    $region21: #{base_cnn_con_lstm_forward.1} parent=1 // pred_fallthru
      _
    // Predicated region
    $region22: #{base_cnn_con_lstm_forward.1} parent=1 // pred_check
      _
    $region23: #{base_cnn_con_lstm_forward.1} parent=1 // pred_check_branch
      %26 = sbr.rel (0) target = $region25
    $region24: #{base_cnn_con_lstm_forward.1} parent=1 // pred_region
      _
    $region25: #{base_cnn_con_lstm_forward.1} parent=1 // pred_fallthru
      _
    // Predicated region
    $region26: #{base_cnn_con_lstm_forward.1} parent=1 // pred_check
      _
    $region27: #{base_cnn_con_lstm_forward.1} parent=1 // pred_check_branch
      %28 = sbr.rel (0) target = $region29
    $region28: #{base_cnn_con_lstm_forward.1} parent=1 // pred_region
      _
    $region29: #{base_cnn_con_lstm_forward.1} parent=1 // pred_fallthru
      _
    // Predicated region
    $region30: #{base_cnn_con_lstm_forward.1} parent=1 // pred_check
      _
    $region31: #{base_cnn_con_lstm_forward.1} parent=1 // pred_check_branch
      %30 = sbr.rel (0) target = $region33
    $region32: #{base_cnn_con_lstm_forward.1} parent=1 // pred_region
      _
    $region33: #{base_cnn_con_lstm_forward.1} parent=1 // pred_fallthru
      _
    %p32 = scmp.lt.u32.totalorder 1600, 8
    %p33 = pneg %p32
    // Predicated region
    $region34: #{base_cnn_con_lstm_forward.1} parent=1 // pred_check
      _
    $region35: #{base_cnn_con_lstm_forward.1} parent=1 // pred_check_branch
      %35 = sbr.rel (%p32) target = $region37
    $region36: #{base_cnn_con_lstm_forward.1} parent=1 // pred_region
      %s51 = sand.u32 1600, 7
      %p52 = scmp.eq.s32.totalorder %s51, 0
      // Predicated region
      $region49: #{base_cnn_con_lstm_forward.1} parent=36 // pred_check
        %p53 = pneg %p52
      $region50: #{base_cnn_con_lstm_forward.1} parent=36 // pred_check_branch
        %55 = sbr.rel (%p53) target = $region52
      $region51: #{base_cnn_con_lstm_forward.1} parent=36 // pred_region
        loop: start=0, step=1, limit=1
        $region53: #{base_cnn_con_lstm_forward.1} parent=51 // loop_pre_header
          _
        $region54: #{base_cnn_con_lstm_forward.1} parent=51 // loop_header
          %s57 = sphi 0, %s61
          %p58 = scmp.ge.s32.totalorder %s57, 1
          %s62 = sphi %s3, %s3
          %s63 = sphi [#allocation4], [#allocation4]
        $region55: #{base_cnn_con_lstm_forward.1} parent=51 // loop_header_branch
          %60 = sbr.rel (%p58) target = $region59
        $region56: #{base_cnn_con_lstm_forward.1} parent=51 // loop_body
          %v64 = vld [vmem:[%s62] sm:$0xff]
          %65 = vst [vmem:[%s63] sm:$0xff] %v64
          %v66 = vld [vmem:[%s62 + $0x8] sm:$0xff]
          %67 = vst [vmem:[%s63 + $0x8] sm:$0xff] %v66
          %v68 = vld [vmem:[%s62 + $0x10] sm:$0xff]
          %69 = vst [vmem:[%s63 + $0x10] sm:$0xff] %v68
          %v70 = vld [vmem:[%s62 + $0x18] sm:$0xff]
          %71 = vst [vmem:[%s63 + $0x18] sm:$0xff] %v70
          %v72 = vld [vmem:[%s62 + $0x20] sm:$0xff]
          %73 = vst [vmem:[%s63 + $0x20] sm:$0xff] %v72
          %v74 = vld [vmem:[%s62 + $0x28] sm:$0xff]
          %75 = vst [vmem:[%s63 + $0x28] sm:$0xff] %v74
          %v76 = vld [vmem:[%s62 + $0x30] sm:$0xff]
          %77 = vst [vmem:[%s63 + $0x30] sm:$0xff] %v76
          %v78 = vld [vmem:[%s62 + $0x38] sm:$0xff]
          %79 = vst [vmem:[%s63 + $0x38] sm:$0xff] %v78
          %v80 = vld [vmem:[%s62 + $0x40] sm:$0xff]
          %81 = vst [vmem:[%s63 + $0x40] sm:$0xff] %v80
          %v82 = vld [vmem:[%s62 + $0x48] sm:$0xff]
          %83 = vst [vmem:[%s63 + $0x48] sm:$0xff] %v82
          %v84 = vld [vmem:[%s62 + $0x50] sm:$0xff]
          %85 = vst [vmem:[%s63 + $0x50] sm:$0xff] %v84
          %v86 = vld [vmem:[%s62 + $0x58] sm:$0xff]
          %87 = vst [vmem:[%s63 + $0x58] sm:$0xff] %v86
          %v88 = vld [vmem:[%s62 + $0x60] sm:$0xff]
          %89 = vst [vmem:[%s63 + $0x60] sm:$0xff] %v88
          %v90 = vld [vmem:[%s62 + $0x68] sm:$0xff]
          %91 = vst [vmem:[%s63 + $0x68] sm:$0xff] %v90
          %v92 = vld [vmem:[%s62 + $0x70] sm:$0xff]
          %93 = vst [vmem:[%s63 + $0x70] sm:$0xff] %v92
          %v94 = vld [vmem:[%s62 + $0x78] sm:$0xff]
          %95 = vst [vmem:[%s63 + $0x78] sm:$0xff] %v94
          %v96 = vld [vmem:[%s62 + $0x80] sm:$0xff]
          %97 = vst [vmem:[%s63 + $0x80] sm:$0xff] %v96
          %v98 = vld [vmem:[%s62 + $0x88] sm:$0xff]
          %99 = vst [vmem:[%s63 + $0x88] sm:$0xff] %v98
          %v100 = vld [vmem:[%s62 + $0x90] sm:$0xff]
          %101 = vst [vmem:[%s63 + $0x90] sm:$0xff] %v100
          %v102 = vld [vmem:[%s62 + $0x98] sm:$0xff]
          %103 = vst [vmem:[%s63 + $0x98] sm:$0xff] %v102
          %v104 = vld [vmem:[%s62 + $0xa0] sm:$0xff]
          %105 = vst [vmem:[%s63 + $0xa0] sm:$0xff] %v104
          %v106 = vld [vmem:[%s62 + $0xa8] sm:$0xff]
          %107 = vst [vmem:[%s63 + $0xa8] sm:$0xff] %v106
          %v108 = vld [vmem:[%s62 + $0xb0] sm:$0xff]
          %109 = vst [vmem:[%s63 + $0xb0] sm:$0xff] %v108
          %v110 = vld [vmem:[%s62 + $0xb8] sm:$0xff]
          %111 = vst [vmem:[%s63 + $0xb8] sm:$0xff] %v110
          %v112 = vld [vmem:[%s62 + $0xc0] sm:$0xff]
          %113 = vst [vmem:[%s63 + $0xc0] sm:$0xff] %v112
          %v114 = vld [vmem:[%s62 + $0xc8] sm:$0xff]
          %115 = vst [vmem:[%s63 + $0xc8] sm:$0xff] %v114
          %v116 = vld [vmem:[%s62 + $0xd0] sm:$0xff]
          %117 = vst [vmem:[%s63 + $0xd0] sm:$0xff] %v116
          %v118 = vld [vmem:[%s62 + $0xd8] sm:$0xff]
          %119 = vst [vmem:[%s63 + $0xd8] sm:$0xff] %v118
          %v120 = vld [vmem:[%s62 + $0xe0] sm:$0xff]
          %121 = vst [vmem:[%s63 + $0xe0] sm:$0xff] %v120
          %v122 = vld [vmem:[%s62 + $0xe8] sm:$0xff]
          %123 = vst [vmem:[%s63 + $0xe8] sm:$0xff] %v122
          %v124 = vld [vmem:[%s62 + $0xf0] sm:$0xff]
          %125 = vst [vmem:[%s63 + $0xf0] sm:$0xff] %v124
          %v126 = vld [vmem:[%s62 + $0xf8] sm:$0xff]
          %127 = vst [vmem:[%s63 + $0xf8] sm:$0xff] %v126
          %v128 = vld [vmem:[%s62 + $0x100] sm:$0xff]
          %129 = vst [vmem:[%s63 + $0x100] sm:$0xff] %v128
          %v130 = vld [vmem:[%s62 + $0x108] sm:$0xff]
          %131 = vst [vmem:[%s63 + $0x108] sm:$0xff] %v130
          %v132 = vld [vmem:[%s62 + $0x110] sm:$0xff]
          %133 = vst [vmem:[%s63 + $0x110] sm:$0xff] %v132
          %v134 = vld [vmem:[%s62 + $0x118] sm:$0xff]
          %135 = vst [vmem:[%s63 + $0x118] sm:$0xff] %v134
          %v136 = vld [vmem:[%s62 + $0x120] sm:$0xff]
          %137 = vst [vmem:[%s63 + $0x120] sm:$0xff] %v136
          %v138 = vld [vmem:[%s62 + $0x128] sm:$0xff]
          %139 = vst [vmem:[%s63 + $0x128] sm:$0xff] %v138
          %v140 = vld [vmem:[%s62 + $0x130] sm:$0xff]
          %141 = vst [vmem:[%s63 + $0x130] sm:$0xff] %v140
          %v142 = vld [vmem:[%s62 + $0x138] sm:$0xff]
          %143 = vst [vmem:[%s63 + $0x138] sm:$0xff] %v142
          %v144 = vld [vmem:[%s62 + $0x140] sm:$0xff]
          %145 = vst [vmem:[%s63 + $0x140] sm:$0xff] %v144
          %v146 = vld [vmem:[%s62 + $0x148] sm:$0xff]
          %147 = vst [vmem:[%s63 + $0x148] sm:$0xff] %v146
          %v148 = vld [vmem:[%s62 + $0x150] sm:$0xff]
          %149 = vst [vmem:[%s63 + $0x150] sm:$0xff] %v148
          %v150 = vld [vmem:[%s62 + $0x158] sm:$0xff]
          %151 = vst [vmem:[%s63 + $0x158] sm:$0xff] %v150
          %v152 = vld [vmem:[%s62 + $0x160] sm:$0xff]
          %153 = vst [vmem:[%s63 + $0x160] sm:$0xff] %v152
          %v154 = vld [vmem:[%s62 + $0x168] sm:$0xff]
          %155 = vst [vmem:[%s63 + $0x168] sm:$0xff] %v154
          %v156 = vld [vmem:[%s62 + $0x170] sm:$0xff]
          %157 = vst [vmem:[%s63 + $0x170] sm:$0xff] %v156
          %v158 = vld [vmem:[%s62 + $0x178] sm:$0xff]
          %159 = vst [vmem:[%s63 + $0x178] sm:$0xff] %v158
          %v160 = vld [vmem:[%s62 + $0x180] sm:$0xff]
          %161 = vst [vmem:[%s63 + $0x180] sm:$0xff] %v160
          %v162 = vld [vmem:[%s62 + $0x188] sm:$0xff]
          %163 = vst [vmem:[%s63 + $0x188] sm:$0xff] %v162
          %v164 = vld [vmem:[%s62 + $0x190] sm:$0xff]
          %165 = vst [vmem:[%s63 + $0x190] sm:$0xff] %v164
          %v166 = vld [vmem:[%s62 + $0x198] sm:$0xff]
          %167 = vst [vmem:[%s63 + $0x198] sm:$0xff] %v166
          %v168 = vld [vmem:[%s62 + $0x1a0] sm:$0xff]
          %169 = vst [vmem:[%s63 + $0x1a0] sm:$0xff] %v168
          %v170 = vld [vmem:[%s62 + $0x1a8] sm:$0xff]
          %171 = vst [vmem:[%s63 + $0x1a8] sm:$0xff] %v170
          %v172 = vld [vmem:[%s62 + $0x1b0] sm:$0xff]
          %173 = vst [vmem:[%s63 + $0x1b0] sm:$0xff] %v172
          %v174 = vld [vmem:[%s62 + $0x1b8] sm:$0xff]
          %175 = vst [vmem:[%s63 + $0x1b8] sm:$0xff] %v174
          %v176 = vld [vmem:[%s62 + $0x1c0] sm:$0xff]
          %177 = vst [vmem:[%s63 + $0x1c0] sm:$0xff] %v176
          %v178 = vld [vmem:[%s62 + $0x1c8] sm:$0xff]
          %179 = vst [vmem:[%s63 + $0x1c8] sm:$0xff] %v178
          %v180 = vld [vmem:[%s62 + $0x1d0] sm:$0xff]
          %181 = vst [vmem:[%s63 + $0x1d0] sm:$0xff] %v180
          %v182 = vld [vmem:[%s62 + $0x1d8] sm:$0xff]
          %183 = vst [vmem:[%s63 + $0x1d8] sm:$0xff] %v182
          %v184 = vld [vmem:[%s62 + $0x1e0] sm:$0xff]
          %185 = vst [vmem:[%s63 + $0x1e0] sm:$0xff] %v184
          %v186 = vld [vmem:[%s62 + $0x1e8] sm:$0xff]
          %187 = vst [vmem:[%s63 + $0x1e8] sm:$0xff] %v186
          %v188 = vld [vmem:[%s62 + $0x1f0] sm:$0xff]
          %189 = vst [vmem:[%s63 + $0x1f0] sm:$0xff] %v188
          %v190 = vld [vmem:[%s62 + $0x1f8] sm:$0xff]
          %191 = vst [vmem:[%s63 + $0x1f8] sm:$0xff] %v190
          %v192 = vld [vmem:[%s62 + $0x200] sm:$0xff]
          %193 = vst [vmem:[%s63 + $0x200] sm:$0xff] %v192
          %v194 = vld [vmem:[%s62 + $0x208] sm:$0xff]
          %195 = vst [vmem:[%s63 + $0x208] sm:$0xff] %v194
          %v196 = vld [vmem:[%s62 + $0x210] sm:$0xff]
          %197 = vst [vmem:[%s63 + $0x210] sm:$0xff] %v196
          %v198 = vld [vmem:[%s62 + $0x218] sm:$0xff]
          %199 = vst [vmem:[%s63 + $0x218] sm:$0xff] %v198
          %v200 = vld [vmem:[%s62 + $0x220] sm:$0xff]
          %201 = vst [vmem:[%s63 + $0x220] sm:$0xff] %v200
          %v202 = vld [vmem:[%s62 + $0x228] sm:$0xff]
          %203 = vst [vmem:[%s63 + $0x228] sm:$0xff] %v202
          %v204 = vld [vmem:[%s62 + $0x230] sm:$0xff]
          %205 = vst [vmem:[%s63 + $0x230] sm:$0xff] %v204
          %v206 = vld [vmem:[%s62 + $0x238] sm:$0xff]
          %207 = vst [vmem:[%s63 + $0x238] sm:$0xff] %v206
          %v208 = vld [vmem:[%s62 + $0x240] sm:$0xff]
          %209 = vst [vmem:[%s63 + $0x240] sm:$0xff] %v208
          %v210 = vld [vmem:[%s62 + $0x248] sm:$0xff]
          %211 = vst [vmem:[%s63 + $0x248] sm:$0xff] %v210
          %v212 = vld [vmem:[%s62 + $0x250] sm:$0xff]
          %213 = vst [vmem:[%s63 + $0x250] sm:$0xff] %v212
          %v214 = vld [vmem:[%s62 + $0x258] sm:$0xff]
          %215 = vst [vmem:[%s63 + $0x258] sm:$0xff] %v214
          %v216 = vld [vmem:[%s62 + $0x260] sm:$0xff]
          %217 = vst [vmem:[%s63 + $0x260] sm:$0xff] %v216
          %v218 = vld [vmem:[%s62 + $0x268] sm:$0xff]
          %219 = vst [vmem:[%s63 + $0x268] sm:$0xff] %v218
          %v220 = vld [vmem:[%s62 + $0x270] sm:$0xff]
          %221 = vst [vmem:[%s63 + $0x270] sm:$0xff] %v220
          %v222 = vld [vmem:[%s62 + $0x278] sm:$0xff]
          %223 = vst [vmem:[%s63 + $0x278] sm:$0xff] %v222
          %v224 = vld [vmem:[%s62 + $0x280] sm:$0xff]
          %225 = vst [vmem:[%s63 + $0x280] sm:$0xff] %v224
          %v226 = vld [vmem:[%s62 + $0x288] sm:$0xff]
          %227 = vst [vmem:[%s63 + $0x288] sm:$0xff] %v226
          %v228 = vld [vmem:[%s62 + $0x290] sm:$0xff]
          %229 = vst [vmem:[%s63 + $0x290] sm:$0xff] %v228
          %v230 = vld [vmem:[%s62 + $0x298] sm:$0xff]
          %231 = vst [vmem:[%s63 + $0x298] sm:$0xff] %v230
          %v232 = vld [vmem:[%s62 + $0x2a0] sm:$0xff]
          %233 = vst [vmem:[%s63 + $0x2a0] sm:$0xff] %v232
          %v234 = vld [vmem:[%s62 + $0x2a8] sm:$0xff]
          %235 = vst [vmem:[%s63 + $0x2a8] sm:$0xff] %v234
          %v236 = vld [vmem:[%s62 + $0x2b0] sm:$0xff]
          %237 = vst [vmem:[%s63 + $0x2b0] sm:$0xff] %v236
          %v238 = vld [vmem:[%s62 + $0x2b8] sm:$0xff]
          %239 = vst [vmem:[%s63 + $0x2b8] sm:$0xff] %v238
          %v240 = vld [vmem:[%s62 + $0x2c0] sm:$0xff]
          %241 = vst [vmem:[%s63 + $0x2c0] sm:$0xff] %v240
          %v242 = vld [vmem:[%s62 + $0x2c8] sm:$0xff]
          %243 = vst [vmem:[%s63 + $0x2c8] sm:$0xff] %v242
          %v244 = vld [vmem:[%s62 + $0x2d0] sm:$0xff]
          %245 = vst [vmem:[%s63 + $0x2d0] sm:$0xff] %v244
          %v246 = vld [vmem:[%s62 + $0x2d8] sm:$0xff]
          %247 = vst [vmem:[%s63 + $0x2d8] sm:$0xff] %v246
          %v248 = vld [vmem:[%s62 + $0x2e0] sm:$0xff]
          %249 = vst [vmem:[%s63 + $0x2e0] sm:$0xff] %v248
          %v250 = vld [vmem:[%s62 + $0x2e8] sm:$0xff]
          %251 = vst [vmem:[%s63 + $0x2e8] sm:$0xff] %v250
          %v252 = vld [vmem:[%s62 + $0x2f0] sm:$0xff]
          %253 = vst [vmem:[%s63 + $0x2f0] sm:$0xff] %v252
          %v254 = vld [vmem:[%s62 + $0x2f8] sm:$0xff]
          %255 = vst [vmem:[%s63 + $0x2f8] sm:$0xff] %v254
          %v256 = vld [vmem:[%s62 + $0x300] sm:$0xff]
          %257 = vst [vmem:[%s63 + $0x300] sm:$0xff] %v256
          %v258 = vld [vmem:[%s62 + $0x308] sm:$0xff]
          %259 = vst [vmem:[%s63 + $0x308] sm:$0xff] %v258
          %v260 = vld [vmem:[%s62 + $0x310] sm:$0xff]
          %261 = vst [vmem:[%s63 + $0x310] sm:$0xff] %v260
          %v262 = vld [vmem:[%s62 + $0x318] sm:$0xff]
          %263 = vst [vmem:[%s63 + $0x318] sm:$0xff] %v262
          %v264 = vld [vmem:[%s62 + $0x320] sm:$0xff]
          %265 = vst [vmem:[%s63 + $0x320] sm:$0xff] %v264
          %v266 = vld [vmem:[%s62 + $0x328] sm:$0xff]
          %267 = vst [vmem:[%s63 + $0x328] sm:$0xff] %v266
          %v268 = vld [vmem:[%s62 + $0x330] sm:$0xff]
          %269 = vst [vmem:[%s63 + $0x330] sm:$0xff] %v268
          %v270 = vld [vmem:[%s62 + $0x338] sm:$0xff]
          %271 = vst [vmem:[%s63 + $0x338] sm:$0xff] %v270
          %v272 = vld [vmem:[%s62 + $0x340] sm:$0xff]
          %273 = vst [vmem:[%s63 + $0x340] sm:$0xff] %v272
          %v274 = vld [vmem:[%s62 + $0x348] sm:$0xff]
          %275 = vst [vmem:[%s63 + $0x348] sm:$0xff] %v274
          %v276 = vld [vmem:[%s62 + $0x350] sm:$0xff]
          %277 = vst [vmem:[%s63 + $0x350] sm:$0xff] %v276
          %v278 = vld [vmem:[%s62 + $0x358] sm:$0xff]
          %279 = vst [vmem:[%s63 + $0x358] sm:$0xff] %v278
          %v280 = vld [vmem:[%s62 + $0x360] sm:$0xff]
          %281 = vst [vmem:[%s63 + $0x360] sm:$0xff] %v280
          %v282 = vld [vmem:[%s62 + $0x368] sm:$0xff]
          %283 = vst [vmem:[%s63 + $0x368] sm:$0xff] %v282
          %v284 = vld [vmem:[%s62 + $0x370] sm:$0xff]
          %285 = vst [vmem:[%s63 + $0x370] sm:$0xff] %v284
          %v286 = vld [vmem:[%s62 + $0x378] sm:$0xff]
          %287 = vst [vmem:[%s63 + $0x378] sm:$0xff] %v286
          %v288 = vld [vmem:[%s62 + $0x380] sm:$0xff]
          %289 = vst [vmem:[%s63 + $0x380] sm:$0xff] %v288
          %v290 = vld [vmem:[%s62 + $0x388] sm:$0xff]
          %291 = vst [vmem:[%s63 + $0x388] sm:$0xff] %v290
          %v292 = vld [vmem:[%s62 + $0x390] sm:$0xff]
          %293 = vst [vmem:[%s63 + $0x390] sm:$0xff] %v292
          %v294 = vld [vmem:[%s62 + $0x398] sm:$0xff]
          %295 = vst [vmem:[%s63 + $0x398] sm:$0xff] %v294
          %v296 = vld [vmem:[%s62 + $0x3a0] sm:$0xff]
          %297 = vst [vmem:[%s63 + $0x3a0] sm:$0xff] %v296
          %v298 = vld [vmem:[%s62 + $0x3a8] sm:$0xff]
          %299 = vst [vmem:[%s63 + $0x3a8] sm:$0xff] %v298
          %v300 = vld [vmem:[%s62 + $0x3b0] sm:$0xff]
          %301 = vst [vmem:[%s63 + $0x3b0] sm:$0xff] %v300
          %v302 = vld [vmem:[%s62 + $0x3b8] sm:$0xff]
          %303 = vst [vmem:[%s63 + $0x3b8] sm:$0xff] %v302
          %v304 = vld [vmem:[%s62 + $0x3c0] sm:$0xff]
          %305 = vst [vmem:[%s63 + $0x3c0] sm:$0xff] %v304
          %v306 = vld [vmem:[%s62 + $0x3c8] sm:$0xff]
          %307 = vst [vmem:[%s63 + $0x3c8] sm:$0xff] %v306
          %v308 = vld [vmem:[%s62 + $0x3d0] sm:$0xff]
          %309 = vst [vmem:[%s63 + $0x3d0] sm:$0xff] %v308
          %v310 = vld [vmem:[%s62 + $0x3d8] sm:$0xff]
          %311 = vst [vmem:[%s63 + $0x3d8] sm:$0xff] %v310
          %v312 = vld [vmem:[%s62 + $0x3e0] sm:$0xff]
          %313 = vst [vmem:[%s63 + $0x3e0] sm:$0xff] %v312
          %v314 = vld [vmem:[%s62 + $0x3e8] sm:$0xff]
          %315 = vst [vmem:[%s63 + $0x3e8] sm:$0xff] %v314
          %v316 = vld [vmem:[%s62 + $0x3f0] sm:$0xff]
          %317 = vst [vmem:[%s63 + $0x3f0] sm:$0xff] %v316
          %v318 = vld [vmem:[%s62 + $0x3f8] sm:$0xff]
          %319 = vst [vmem:[%s63 + $0x3f8] sm:$0xff] %v318
          %v320 = vld [vmem:[%s62 + $0x400] sm:$0xff]
          %321 = vst [vmem:[%s63 + $0x400] sm:$0xff] %v320
          %v322 = vld [vmem:[%s62 + $0x408] sm:$0xff]
          %323 = vst [vmem:[%s63 + $0x408] sm:$0xff] %v322
          %v324 = vld [vmem:[%s62 + $0x410] sm:$0xff]
          %325 = vst [vmem:[%s63 + $0x410] sm:$0xff] %v324
          %v326 = vld [vmem:[%s62 + $0x418] sm:$0xff]
          %327 = vst [vmem:[%s63 + $0x418] sm:$0xff] %v326
          %v328 = vld [vmem:[%s62 + $0x420] sm:$0xff]
          %329 = vst [vmem:[%s63 + $0x420] sm:$0xff] %v328
          %v330 = vld [vmem:[%s62 + $0x428] sm:$0xff]
          %331 = vst [vmem:[%s63 + $0x428] sm:$0xff] %v330
          %v332 = vld [vmem:[%s62 + $0x430] sm:$0xff]
          %333 = vst [vmem:[%s63 + $0x430] sm:$0xff] %v332
          %v334 = vld [vmem:[%s62 + $0x438] sm:$0xff]
          %335 = vst [vmem:[%s63 + $0x438] sm:$0xff] %v334
          %v336 = vld [vmem:[%s62 + $0x440] sm:$0xff]
          %337 = vst [vmem:[%s63 + $0x440] sm:$0xff] %v336
          %v338 = vld [vmem:[%s62 + $0x448] sm:$0xff]
          %339 = vst [vmem:[%s63 + $0x448] sm:$0xff] %v338
          %v340 = vld [vmem:[%s62 + $0x450] sm:$0xff]
          %341 = vst [vmem:[%s63 + $0x450] sm:$0xff] %v340
          %v342 = vld [vmem:[%s62 + $0x458] sm:$0xff]
          %343 = vst [vmem:[%s63 + $0x458] sm:$0xff] %v342
          %v344 = vld [vmem:[%s62 + $0x460] sm:$0xff]
          %345 = vst [vmem:[%s63 + $0x460] sm:$0xff] %v344
          %v346 = vld [vmem:[%s62 + $0x468] sm:$0xff]
          %347 = vst [vmem:[%s63 + $0x468] sm:$0xff] %v346
          %v348 = vld [vmem:[%s62 + $0x470] sm:$0xff]
          %349 = vst [vmem:[%s63 + $0x470] sm:$0xff] %v348
          %v350 = vld [vmem:[%s62 + $0x478] sm:$0xff]
          %351 = vst [vmem:[%s63 + $0x478] sm:$0xff] %v350
          %v352 = vld [vmem:[%s62 + $0x480] sm:$0xff]
          %353 = vst [vmem:[%s63 + $0x480] sm:$0xff] %v352
          %v354 = vld [vmem:[%s62 + $0x488] sm:$0xff]
          %355 = vst [vmem:[%s63 + $0x488] sm:$0xff] %v354
          %v356 = vld [vmem:[%s62 + $0x490] sm:$0xff]
          %357 = vst [vmem:[%s63 + $0x490] sm:$0xff] %v356
          %v358 = vld [vmem:[%s62 + $0x498] sm:$0xff]
          %359 = vst [vmem:[%s63 + $0x498] sm:$0xff] %v358
          %v360 = vld [vmem:[%s62 + $0x4a0] sm:$0xff]
          %361 = vst [vmem:[%s63 + $0x4a0] sm:$0xff] %v360
          %v362 = vld [vmem:[%s62 + $0x4a8] sm:$0xff]
          %363 = vst [vmem:[%s63 + $0x4a8] sm:$0xff] %v362
          %v364 = vld [vmem:[%s62 + $0x4b0] sm:$0xff]
          %365 = vst [vmem:[%s63 + $0x4b0] sm:$0xff] %v364
          %v366 = vld [vmem:[%s62 + $0x4b8] sm:$0xff]
          %367 = vst [vmem:[%s63 + $0x4b8] sm:$0xff] %v366
          %v368 = vld [vmem:[%s62 + $0x4c0] sm:$0xff]
          %369 = vst [vmem:[%s63 + $0x4c0] sm:$0xff] %v368
          %v370 = vld [vmem:[%s62 + $0x4c8] sm:$0xff]
          %371 = vst [vmem:[%s63 + $0x4c8] sm:$0xff] %v370
          %v372 = vld [vmem:[%s62 + $0x4d0] sm:$0xff]
          %373 = vst [vmem:[%s63 + $0x4d0] sm:$0xff] %v372
          %v374 = vld [vmem:[%s62 + $0x4d8] sm:$0xff]
          %375 = vst [vmem:[%s63 + $0x4d8] sm:$0xff] %v374
          %v376 = vld [vmem:[%s62 + $0x4e0] sm:$0xff]
          %377 = vst [vmem:[%s63 + $0x4e0] sm:$0xff] %v376
          %v378 = vld [vmem:[%s62 + $0x4e8] sm:$0xff]
          %379 = vst [vmem:[%s63 + $0x4e8] sm:$0xff] %v378
          %v380 = vld [vmem:[%s62 + $0x4f0] sm:$0xff]
          %381 = vst [vmem:[%s63 + $0x4f0] sm:$0xff] %v380
          %v382 = vld [vmem:[%s62 + $0x4f8] sm:$0xff]
          %383 = vst [vmem:[%s63 + $0x4f8] sm:$0xff] %v382
          %v384 = vld [vmem:[%s62 + $0x500] sm:$0xff]
          %385 = vst [vmem:[%s63 + $0x500] sm:$0xff] %v384
          %v386 = vld [vmem:[%s62 + $0x508] sm:$0xff]
          %387 = vst [vmem:[%s63 + $0x508] sm:$0xff] %v386
          %v388 = vld [vmem:[%s62 + $0x510] sm:$0xff]
          %389 = vst [vmem:[%s63 + $0x510] sm:$0xff] %v388
          %v390 = vld [vmem:[%s62 + $0x518] sm:$0xff]
          %391 = vst [vmem:[%s63 + $0x518] sm:$0xff] %v390
          %v392 = vld [vmem:[%s62 + $0x520] sm:$0xff]
          %393 = vst [vmem:[%s63 + $0x520] sm:$0xff] %v392
          %v394 = vld [vmem:[%s62 + $0x528] sm:$0xff]
          %395 = vst [vmem:[%s63 + $0x528] sm:$0xff] %v394
          %v396 = vld [vmem:[%s62 + $0x530] sm:$0xff]
          %397 = vst [vmem:[%s63 + $0x530] sm:$0xff] %v396
          %v398 = vld [vmem:[%s62 + $0x538] sm:$0xff]
          %399 = vst [vmem:[%s63 + $0x538] sm:$0xff] %v398
          %v400 = vld [vmem:[%s62 + $0x540] sm:$0xff]
          %401 = vst [vmem:[%s63 + $0x540] sm:$0xff] %v400
          %v402 = vld [vmem:[%s62 + $0x548] sm:$0xff]
          %403 = vst [vmem:[%s63 + $0x548] sm:$0xff] %v402
          %v404 = vld [vmem:[%s62 + $0x550] sm:$0xff]
          %405 = vst [vmem:[%s63 + $0x550] sm:$0xff] %v404
          %v406 = vld [vmem:[%s62 + $0x558] sm:$0xff]
          %407 = vst [vmem:[%s63 + $0x558] sm:$0xff] %v406
          %v408 = vld [vmem:[%s62 + $0x560] sm:$0xff]
          %409 = vst [vmem:[%s63 + $0x560] sm:$0xff] %v408
          %v410 = vld [vmem:[%s62 + $0x568] sm:$0xff]
          %411 = vst [vmem:[%s63 + $0x568] sm:$0xff] %v410
          %v412 = vld [vmem:[%s62 + $0x570] sm:$0xff]
          %413 = vst [vmem:[%s63 + $0x570] sm:$0xff] %v412
          %v414 = vld [vmem:[%s62 + $0x578] sm:$0xff]
          %415 = vst [vmem:[%s63 + $0x578] sm:$0xff] %v414
          %v416 = vld [vmem:[%s62 + $0x580] sm:$0xff]
          %417 = vst [vmem:[%s63 + $0x580] sm:$0xff] %v416
          %v418 = vld [vmem:[%s62 + $0x588] sm:$0xff]
          %419 = vst [vmem:[%s63 + $0x588] sm:$0xff] %v418
          %v420 = vld [vmem:[%s62 + $0x590] sm:$0xff]
          %421 = vst [vmem:[%s63 + $0x590] sm:$0xff] %v420
          %v422 = vld [vmem:[%s62 + $0x598] sm:$0xff]
          %423 = vst [vmem:[%s63 + $0x598] sm:$0xff] %v422
          %v424 = vld [vmem:[%s62 + $0x5a0] sm:$0xff]
          %425 = vst [vmem:[%s63 + $0x5a0] sm:$0xff] %v424
          %v426 = vld [vmem:[%s62 + $0x5a8] sm:$0xff]
          %427 = vst [vmem:[%s63 + $0x5a8] sm:$0xff] %v426
          %v428 = vld [vmem:[%s62 + $0x5b0] sm:$0xff]
          %429 = vst [vmem:[%s63 + $0x5b0] sm:$0xff] %v428
          %v430 = vld [vmem:[%s62 + $0x5b8] sm:$0xff]
          %431 = vst [vmem:[%s63 + $0x5b8] sm:$0xff] %v430
          %v432 = vld [vmem:[%s62 + $0x5c0] sm:$0xff]
          %433 = vst [vmem:[%s63 + $0x5c0] sm:$0xff] %v432
          %v434 = vld [vmem:[%s62 + $0x5c8] sm:$0xff]
          %435 = vst [vmem:[%s63 + $0x5c8] sm:$0xff] %v434
          %v436 = vld [vmem:[%s62 + $0x5d0] sm:$0xff]
          %437 = vst [vmem:[%s63 + $0x5d0] sm:$0xff] %v436
          %v438 = vld [vmem:[%s62 + $0x5d8] sm:$0xff]
          %439 = vst [vmem:[%s63 + $0x5d8] sm:$0xff] %v438
          %v440 = vld [vmem:[%s62 + $0x5e0] sm:$0xff]
          %441 = vst [vmem:[%s63 + $0x5e0] sm:$0xff] %v440
          %v442 = vld [vmem:[%s62 + $0x5e8] sm:$0xff]
          %443 = vst [vmem:[%s63 + $0x5e8] sm:$0xff] %v442
          %v444 = vld [vmem:[%s62 + $0x5f0] sm:$0xff]
          %445 = vst [vmem:[%s63 + $0x5f0] sm:$0xff] %v444
          %v446 = vld [vmem:[%s62 + $0x5f8] sm:$0xff]
          %447 = vst [vmem:[%s63 + $0x5f8] sm:$0xff] %v446
          %v448 = vld [vmem:[%s62 + $0x600] sm:$0xff]
          %449 = vst [vmem:[%s63 + $0x600] sm:$0xff] %v448
          %v450 = vld [vmem:[%s62 + $0x608] sm:$0xff]
          %451 = vst [vmem:[%s63 + $0x608] sm:$0xff] %v450
          %v452 = vld [vmem:[%s62 + $0x610] sm:$0xff]
          %453 = vst [vmem:[%s63 + $0x610] sm:$0xff] %v452
          %v454 = vld [vmem:[%s62 + $0x618] sm:$0xff]
          %455 = vst [vmem:[%s63 + $0x618] sm:$0xff] %v454
          %v456 = vld [vmem:[%s62 + $0x620] sm:$0xff]
          %457 = vst [vmem:[%s63 + $0x620] sm:$0xff] %v456
          %v458 = vld [vmem:[%s62 + $0x628] sm:$0xff]
          %459 = vst [vmem:[%s63 + $0x628] sm:$0xff] %v458
          %v460 = vld [vmem:[%s62 + $0x630] sm:$0xff]
          %461 = vst [vmem:[%s63 + $0x630] sm:$0xff] %v460
          %v462 = vld [vmem:[%s62 + $0x638] sm:$0xff]
          %463 = vst [vmem:[%s63 + $0x638] sm:$0xff] %v462
        $region57: #{base_cnn_con_lstm_forward.1} parent=51 // loop_footer
          %s61 = sadd.s32 1, %s57
        $region58: #{base_cnn_con_lstm_forward.1} parent=51 // loop_footer_branch
          %56 = sbr.rel target = $region54
        $region59: #{base_cnn_con_lstm_forward.1} parent=51 // loop_exit
          _
      $region52: #{base_cnn_con_lstm_forward.1} parent=36 // pred_fallthru
        _
      %p464 = pneg %p52
      // Predicated region
      $region60: #{base_cnn_con_lstm_forward.1} parent=36 // pred_check
        _
      $region61: #{base_cnn_con_lstm_forward.1} parent=36 // pred_check_branch
        %466 = sbr.rel (%p52) target = $region63
      $region62: #{base_cnn_con_lstm_forward.1} parent=36 // pred_region
        %s467 = sand.u32 1600, 7
      $region63: #{base_cnn_con_lstm_forward.1} parent=36 // pred_fallthru
        _
    $region37: #{base_cnn_con_lstm_forward.1} parent=1 // pred_fallthru
      _
    // Predicated region
    $region38: #{base_cnn_con_lstm_forward.1} parent=1 // pred_check
      %p36 = pneg %p32
    $region39: #{base_cnn_con_lstm_forward.1} parent=1 // pred_check_branch
      %38 = sbr.rel (%p36) target = $region41
    $region40: #{base_cnn_con_lstm_forward.1} parent=1 // pred_region
      %s39 = sshll.u32 1, 1600
      %s40 = ssub.s32 %s39, 1
      loop: start=0, step=1, limit=1
      $region42: #{base_cnn_con_lstm_forward.1} parent=40 // loop_pre_header
        _
      $region43: #{base_cnn_con_lstm_forward.1} parent=40 // loop_header
        %s42 = sphi 0, %s46
        %p43 = scmp.ge.s32.totalorder %s42, 1
        %s47 = sphi %s3, %s3
        %s48 = sphi [#allocation4], [#allocation4]
      $region44: #{base_cnn_con_lstm_forward.1} parent=40 // loop_header_branch
        %45 = sbr.rel (%p43) target = $region48
      $region45: #{base_cnn_con_lstm_forward.1} parent=40 // loop_body
        %v49 = vld [vmem:[%s47] sm:%s40]
        %50 = vst [vmem:[%s48] sm:%s40] %v49
      $region46: #{base_cnn_con_lstm_forward.1} parent=40 // loop_footer
        %s46 = sadd.s32 1, %s42
      $region47: #{base_cnn_con_lstm_forward.1} parent=40 // loop_footer_branch
        %41 = sbr.rel target = $region43
      $region48: #{base_cnn_con_lstm_forward.1} parent=40 // loop_exit
        _
    $region41: #{base_cnn_con_lstm_forward.1} parent=1 // pred_fallthru
      _
    // Predicated region
    $region64: #{base_cnn_con_lstm_forward.1} parent=1 // pred_check
      _
    $region65: #{base_cnn_con_lstm_forward.1} parent=1 // pred_check_branch
      %470 = sbr.rel (0) target = $region67
    $region66: #{base_cnn_con_lstm_forward.1} parent=1 // pred_region
      %471 = vsyncadd [#allocation5], 25600
    $region67: #{base_cnn_con_lstm_forward.1} parent=1 // pred_fallthru
      _
    %v472 = vld [vmem:[%s0] sm:$0xff]
    %v473 = vld [vmem:[%s0 + $0x8] sm:$0xff]
    %v474 = vld [vmem:[%s0 + $0x10] sm:$0xff]
    %v475 = vld [vmem:[%s0 + $0x18] sm:$0xff]
    %v476 = vld [vmem:[%s0 + $0x20] sm:$0xff]
    %v477 = vld [vmem:[%s0 + $0x28] sm:$0xff]
    %v478 = vld [vmem:[%s0 + $0x30] sm:$0xff]
    %v479 = vld [vmem:[%s0 + $0x38] sm:$0xff]
    %v480 = vld [vmem:[%s0 + $0x40] sm:$0xff]
    %v481 = vld [vmem:[%s0 + $0x48] sm:$0xff]
    %v482 = vld [vmem:[%s0 + $0x50] sm:$0xff]
    %v483 = vld [vmem:[%s0 + $0x58] sm:$0xff]
    %v484 = vld [vmem:[%s0 + $0x60] sm:$0xff]
    %v485 = vld [vmem:[%s0 + $0x68] sm:$0xff]
    %v486 = vld [vmem:[%s0 + $0x70] sm:$0xff]
    %v487 = vld [vmem:[%s0 + $0x78] sm:$0xff]
    %v488 = vld [vmem:[%s0 + $0x80] sm:$0xff]
    %v489 = vld [vmem:[%s0 + $0x88] sm:$0xff]
    %v490 = vld [vmem:[%s0 + $0x90] sm:$0xff]
    %v491 = vld [vmem:[%s0 + $0x98] sm:$0xff]
    %v492 = vld [vmem:[%s0 + $0xa0] sm:$0xff]
    %v493 = vld [vmem:[%s0 + $0xa8] sm:$0xff]
    %v494 = vld [vmem:[%s0 + $0xb0] sm:$0xff]
    %v495 = vld [vmem:[%s0 + $0xb8] sm:$0xff]
    %v496 = vld [vmem:[%s0 + $0xc0] sm:$0xff]
    %v497 = vld [vmem:[%s0 + $0xc8] sm:$0xff]
    %v498 = vld [vmem:[%s0 + $0xd0] sm:$0xff]
    %v499 = vld [vmem:[%s0 + $0xd8] sm:$0xff]
    %v500 = vld [vmem:[%s0 + $0xe0] sm:$0xff]
    %v501 = vld [vmem:[%s0 + $0xe8] sm:$0xff]
    %v502 = vld [vmem:[%s0 + $0xf0] sm:$0xff]
    %v503 = vld [vmem:[%s0 + $0xf8] sm:$0xff]
    %v504 = vld [vmem:[%s0 + $0x100] sm:$0xff]
    %v505 = vld [vmem:[%s0 + $0x108] sm:$0xff]
    %v506 = vld [vmem:[%s0 + $0x110] sm:$0xff]
    %v507 = vld [vmem:[%s0 + $0x118] sm:$0xff]
    %v508 = vld [vmem:[%s0 + $0x120] sm:$0xff]
    %v509 = vld [vmem:[%s0 + $0x128] sm:$0xff]
    %v510 = vld [vmem:[%s0 + $0x130] sm:$0xff]
    %v511 = vld [vmem:[%s0 + $0x138] sm:$0xff]
    %v512 = vld [vmem:[%s0 + $0x140] sm:$0xff]
    %v513 = vld [vmem:[%s0 + $0x148] sm:$0xff]
    %v514 = vld [vmem:[%s0 + $0x150] sm:$0xff]
    %v515 = vld [vmem:[%s0 + $0x158] sm:$0xff]
    %v516 = vld [vmem:[%s0 + $0x160] sm:$0xff]
    %v517 = vld [vmem:[%s0 + $0x168] sm:$0xff]
    %v518 = vld [vmem:[%s0 + $0x170] sm:$0xff]
    %v519 = vld [vmem:[%s0 + $0x178] sm:$0xff]
    %v520 = vld [vmem:[%s0 + $0x180] sm:$0xff]
    %v521 = vld [vmem:[%s0 + $0x188] sm:$0xff]
    %v522 = vld [vmem:[%s1] sm:$0x7]
    %vm523 = vcmask 23552
    %v525 = vsel %vm523, %v472, 0
    %v528 = vsel %vm523, %v473, 0
    %v531 = vsel %vm523, %v474, 0
    %v534 = vsel %vm523, %v475, 0
    %v537 = vsel %vm523, %v476, 0
    %v540 = vsel %vm523, %v477, 0
    %v543 = vsel %vm523, %v478, 0
    %v546 = vsel %vm523, %v479, 0
    %v549 = vsel %vm523, %v480, 0
    %v552 = vsel %vm523, %v481, 0
    %v555 = vsel %vm523, %v482, 0
    %v558 = vsel %vm523, %v483, 0
    %v561 = vsel %vm523, %v484, 0
    %v564 = vsel %vm523, %v485, 0
    %v567 = vsel %vm523, %v486, 0
    %v570 = vsel %vm523, %v487, 0
    %v573 = vsel %vm523, %v488, 0
    %v576 = vsel %vm523, %v489, 0
    %v579 = vsel %vm523, %v490, 0
    %v582 = vsel %vm523, %v491, 0
    %v585 = vsel %vm523, %v492, 0
    %v588 = vsel %vm523, %v493, 0
    %v591 = vsel %vm523, %v494, 0
    %v594 = vsel %vm523, %v495, 0
    %v597 = vsel %vm523, %v496, 0
    %v600 = vsel %vm523, %v497, 0
    %v603 = vsel %vm523, %v498, 0
    %v606 = vsel %vm523, %v499, 0
    %v609 = vsel %vm523, %v500, 0
    %v612 = vsel %vm523, %v501, 0
    %v615 = vsel %vm523, %v502, 0
    %v618 = vsel %vm523, %v503, 0
    %v621 = vsel %vm523, %v504, 0
    %v624 = vsel %vm523, %v505, 0
    %v627 = vsel %vm523, %v506, 0
    %v630 = vsel %vm523, %v507, 0
    %v633 = vsel %vm523, %v508, 0
    %v636 = vsel %vm523, %v509, 0
    %v639 = vsel %vm523, %v510, 0
    %v642 = vsel %vm523, %v511, 0
    %v645 = vsel %vm523, %v512, 0
    %v648 = vsel %vm523, %v513, 0
    %v651 = vsel %vm523, %v514, 0
    %v654 = vsel %vm523, %v515, 0
    %v657 = vsel %vm523, %v516, 0
    %v660 = vsel %vm523, %v517, 0
    %v663 = vsel %vm523, %v518, 0
    %v666 = vsel %vm523, %v519, 0
    %v669 = vsel %vm523, %v520, 0
    %v672 = vsel %vm523, %v521, 0
    %vm674 = vcmask 1042432
    %v676 = vsel %vm674, %v522, 0
    %678 = vmatprep.subr.mxu0 0.0
    %679 = vmatpush1.msra.mxu0 0.0
    %680 = vmatprep.subr.mxu0 0.0
    %681 = vmatpush1.msra.mxu0 0.0
    %682 = vmatprep.subr.mxu0 0.0
    %683 = vmatpush1.msra.mxu0 0.0
    %684 = vmatprep.subr.mxu0 0.0
    %685 = vmatpush1.msra.mxu0 0.0
    %686 = vmatprep.subr.mxu0 0.0
    %687 = vmatpush1.msra.mxu0 0.0
    %688 = vmatprep.subr.mxu0 0.0
    %689 = vmatpush1.msra.mxu0 0.0
    %690 = vmatprep.subr.mxu0 0.0
    %691 = vmatpush1.msra.mxu0 0.0
    %692 = vmatprep.subr.mxu0 0.0
    %693 = vmatpush1.msra.mxu0 0.0
    %694 = vmatprep.subr.mxu0 0.0
    %695 = vmatpush1.msra.mxu0 0.0
    %696 = vmatprep.subr.mxu0 0.0
    %697 = vmatpush1.msra.mxu0 0.0
    %698 = vmatprep.subr.mxu0 0.0
    %699 = vmatpush1.msra.mxu0 0.0
    %700 = vmatprep.subr.mxu0 0.0
    %701 = vmatpush1.msra.mxu0 0.0
    %702 = vmatprep.subr.mxu0 0.0
    %703 = vmatpush1.msra.mxu0 0.0
    %704 = vmatprep.subr.mxu0 0.0
    %705 = vmatpush1.msra.mxu0 0.0
    %706 = vmatprep.subr.mxu0 0.0
    %707 = vmatpush1.msra.mxu0 0.0
    %708 = vmatprep.subr.mxu0 0.0
    %709 = vmatpush1.msra.mxu0 %v676
    %710 = vmatprep.subr.mxu0 0.0
    %711 = vmatpush2.msra.mxu0 0.0
    %712 = vmatprep.subr.mxu0 0.0
    %713 = vmatpush2.msra.mxu0 0.0
    %714 = vmatprep.subr.mxu0 0.0
    %715 = vmatpush2.msra.mxu0 0.0
    %716 = vmatprep.subr.mxu0 0.0
    %717 = vmatpush2.msra.mxu0 0.0
    %718 = vmatprep.subr.mxu0 0.0
    %719 = vmatpush2.msra.mxu0 0.0
    %720 = vmatprep.subr.mxu0 0.0
    %721 = vmatpush2.msra.mxu0 0.0
    %722 = vmatprep.subr.mxu0 0.0
    %723 = vmatpush2.msra.mxu0 0.0
    %724 = vmatprep.subr.mxu0 0.0
    %725 = vmatpush2.msra.mxu0 0.0
    %726 = vmatprep.subr.mxu0 0.0
    %727 = vmatpush2.msra.mxu0 0.0
    %728 = vmatprep.subr.mxu0 0.0
    %729 = vmatpush2.msra.mxu0 0.0
    %730 = vmatprep.subr.mxu0 0.0
    %731 = vmatpush2.msra.mxu0 0.0
    %732 = vmatprep.subr.mxu0 0.0
    %733 = vmatpush2.msra.mxu0 0.0
    %734 = vmatprep.subr.mxu0 0.0
    %735 = vmatpush2.msra.mxu0 0.0
    %736 = vmatprep.subr.mxu0 0.0
    %737 = vmatpush2.msra.mxu0 0.0
    %738 = vmatprep.subr.mxu0 0.0
    %739 = vmatpush2.msra.mxu0 0.0
    %740 = vmatprep.subr.mxu0 0.0
    %741 = vmatpush2.msra.mxu0 0.0
    %742 = vmatprep.mubr.f32.mxu0 0.0
    %743 = vmatmul.mubr.f32.gmra.mxu0 %v525
    %v744 = vpop.f32.mrf.mxu0
    %v745 = vadd.f32 0.0, %v744
    %v746 = vpop.f32.mrf.mxu0
    %747 = vmatprep.mubr.f32.mxu0 0.0
    %748 = vmatmul.mubr.f32.gmra.mxu0 %v528
    %v749 = vpop.f32.mrf.mxu0
    %v750 = vadd.f32 0.0, %v749
    %v751 = vpop.f32.mrf.mxu0
    %752 = vmatprep.mubr.f32.mxu0 0.0
    %753 = vmatmul.mubr.f32.gmra.mxu0 %v531
    %v754 = vpop.f32.mrf.mxu0
    %v755 = vadd.f32 0.0, %v754
    %v756 = vpop.f32.mrf.mxu0
    %757 = vmatprep.mubr.f32.mxu0 0.0
    %758 = vmatmul.mubr.f32.gmra.mxu0 %v534
    %v759 = vpop.f32.mrf.mxu0
    %v760 = vadd.f32 0.0, %v759
    %v761 = vpop.f32.mrf.mxu0
    %762 = vmatprep.mubr.f32.mxu0 0.0
    %763 = vmatmul.mubr.f32.gmra.mxu0 %v537
    %v764 = vpop.f32.mrf.mxu0
    %v765 = vadd.f32 0.0, %v764
    %v766 = vpop.f32.mrf.mxu0
    %767 = vmatprep.mubr.f32.mxu0 0.0
    %768 = vmatmul.mubr.f32.gmra.mxu0 %v540
    %v769 = vpop.f32.mrf.mxu0
    %v770 = vadd.f32 0.0, %v769
    %v771 = vpop.f32.mrf.mxu0
    %772 = vmatprep.mubr.f32.mxu0 0.0
    %773 = vmatmul.mubr.f32.gmra.mxu0 %v543
    %v774 = vpop.f32.mrf.mxu0
    %v775 = vadd.f32 0.0, %v774
    %v776 = vpop.f32.mrf.mxu0
    %777 = vmatprep.mubr.f32.mxu0 0.0
    %778 = vmatmul.mubr.f32.gmra.mxu0 %v546
    %v779 = vpop.f32.mrf.mxu0
    %v780 = vadd.f32 0.0, %v779
    %v781 = vpop.f32.mrf.mxu0
    %782 = vmatprep.mubr.f32.mxu0 0.0
    %783 = vmatmul.mubr.f32.gmra.mxu0 %v549
    %v784 = vpop.f32.mrf.mxu0
    %v785 = vadd.f32 0.0, %v784
    %v786 = vpop.f32.mrf.mxu0
    %787 = vmatprep.mubr.f32.mxu0 0.0
    %788 = vmatmul.mubr.f32.gmra.mxu0 %v552
    %v789 = vpop.f32.mrf.mxu0
    %v790 = vadd.f32 0.0, %v789
    %v791 = vpop.f32.mrf.mxu0
    %792 = vmatprep.mubr.f32.mxu0 0.0
    %793 = vmatmul.mubr.f32.gmra.mxu0 %v555
    %v794 = vpop.f32.mrf.mxu0
    %v795 = vadd.f32 0.0, %v794
    %v796 = vpop.f32.mrf.mxu0
    %797 = vmatprep.mubr.f32.mxu0 0.0
    %798 = vmatmul.mubr.f32.gmra.mxu0 %v558
    %v799 = vpop.f32.mrf.mxu0
    %v800 = vadd.f32 0.0, %v799
    %v801 = vpop.f32.mrf.mxu0
    %802 = vmatprep.mubr.f32.mxu0 0.0
    %803 = vmatmul.mubr.f32.gmra.mxu0 %v561
    %v804 = vpop.f32.mrf.mxu0
    %v805 = vadd.f32 0.0, %v804
    %v806 = vpop.f32.mrf.mxu0
    %807 = vmatprep.mubr.f32.mxu0 0.0
    %808 = vmatmul.mubr.f32.gmra.mxu0 %v564
    %v809 = vpop.f32.mrf.mxu0
    %v810 = vadd.f32 0.0, %v809
    %v811 = vpop.f32.mrf.mxu0
    %812 = vmatprep.mubr.f32.mxu0 0.0
    %813 = vmatmul.mubr.f32.gmra.mxu0 %v567
    %v814 = vpop.f32.mrf.mxu0
    %v815 = vadd.f32 0.0, %v814
    %v816 = vpop.f32.mrf.mxu0
    %817 = vmatprep.mubr.f32.mxu0 0.0
    %818 = vmatmul.mubr.f32.gmra.mxu0 %v570
    %v819 = vpop.f32.mrf.mxu0
    %v820 = vadd.f32 0.0, %v819
    %v821 = vpop.f32.mrf.mxu0
    %822 = vmatprep.mubr.f32.mxu0 0.0
    %823 = vmatmul.mubr.f32.gmra.mxu0 %v573
    %v824 = vpop.f32.mrf.mxu0
    %v825 = vadd.f32 0.0, %v824
    %v826 = vpop.f32.mrf.mxu0
    %827 = vmatprep.mubr.f32.mxu0 0.0
    %828 = vmatmul.mubr.f32.gmra.mxu0 %v576
    %v829 = vpop.f32.mrf.mxu0
    %v830 = vadd.f32 0.0, %v829
    %v831 = vpop.f32.mrf.mxu0
    %832 = vmatprep.mubr.f32.mxu0 0.0
    %833 = vmatmul.mubr.f32.gmra.mxu0 %v579
    %v834 = vpop.f32.mrf.mxu0
    %v835 = vadd.f32 0.0, %v834
    %v836 = vpop.f32.mrf.mxu0
    %837 = vmatprep.mubr.f32.mxu0 0.0
    %838 = vmatmul.mubr.f32.gmra.mxu0 %v582
    %v839 = vpop.f32.mrf.mxu0
    %v840 = vadd.f32 0.0, %v839
    %v841 = vpop.f32.mrf.mxu0
    %842 = vmatprep.mubr.f32.mxu0 0.0
    %843 = vmatmul.mubr.f32.gmra.mxu0 %v585
    %v844 = vpop.f32.mrf.mxu0
    %v845 = vadd.f32 0.0, %v844
    %v846 = vpop.f32.mrf.mxu0
    %847 = vmatprep.mubr.f32.mxu0 0.0
    %848 = vmatmul.mubr.f32.gmra.mxu0 %v588
    %v849 = vpop.f32.mrf.mxu0
    %v850 = vadd.f32 0.0, %v849
    %v851 = vpop.f32.mrf.mxu0
    %852 = vmatprep.mubr.f32.mxu0 0.0
    %853 = vmatmul.mubr.f32.gmra.mxu0 %v591
    %v854 = vpop.f32.mrf.mxu0
    %v855 = vadd.f32 0.0, %v854
    %v856 = vpop.f32.mrf.mxu0
    %857 = vmatprep.mubr.f32.mxu0 0.0
    %858 = vmatmul.mubr.f32.gmra.mxu0 %v594
    %v859 = vpop.f32.mrf.mxu0
    %v860 = vadd.f32 0.0, %v859
    %v861 = vpop.f32.mrf.mxu0
    %862 = vmatprep.mubr.f32.mxu0 0.0
    %863 = vmatmul.mubr.f32.gmra.mxu0 %v597
    %v864 = vpop.f32.mrf.mxu0
    %v865 = vadd.f32 0.0, %v864
    %v866 = vpop.f32.mrf.mxu0
    %867 = vmatprep.mubr.f32.mxu0 0.0
    %868 = vmatmul.mubr.f32.gmra.mxu0 %v600
    %v869 = vpop.f32.mrf.mxu0
    %v870 = vadd.f32 0.0, %v869
    %v871 = vpop.f32.mrf.mxu0
    %872 = vmatprep.mubr.f32.mxu0 0.0
    %873 = vmatmul.mubr.f32.gmra.mxu0 %v603
    %v874 = vpop.f32.mrf.mxu0
    %v875 = vadd.f32 0.0, %v874
    %v876 = vpop.f32.mrf.mxu0
    %877 = vmatprep.mubr.f32.mxu0 0.0
    %878 = vmatmul.mubr.f32.gmra.mxu0 %v606
    %v879 = vpop.f32.mrf.mxu0
    %v880 = vadd.f32 0.0, %v879
    %v881 = vpop.f32.mrf.mxu0
    %882 = vmatprep.mubr.f32.mxu0 0.0
    %883 = vmatmul.mubr.f32.gmra.mxu0 %v609
    %v884 = vpop.f32.mrf.mxu0
    %v885 = vadd.f32 0.0, %v884
    %v886 = vpop.f32.mrf.mxu0
    %887 = vmatprep.mubr.f32.mxu0 0.0
    %888 = vmatmul.mubr.f32.gmra.mxu0 %v612
    %v889 = vpop.f32.mrf.mxu0
    %v890 = vadd.f32 0.0, %v889
    %v891 = vpop.f32.mrf.mxu0
    %892 = vmatprep.mubr.f32.mxu0 0.0
    %893 = vmatmul.mubr.f32.gmra.mxu0 %v615
    %v894 = vpop.f32.mrf.mxu0
    %v895 = vadd.f32 0.0, %v894
    %v896 = vpop.f32.mrf.mxu0
    %897 = vmatprep.mubr.f32.mxu0 0.0
    %898 = vmatmul.mubr.f32.gmra.mxu0 %v618
    %v899 = vpop.f32.mrf.mxu0
    %v900 = vadd.f32 0.0, %v899
    %v901 = vpop.f32.mrf.mxu0
    %902 = vmatprep.mubr.f32.mxu0 0.0
    %903 = vmatmul.mubr.f32.gmra.mxu0 %v621
    %v904 = vpop.f32.mrf.mxu0
    %v905 = vadd.f32 0.0, %v904
    %v906 = vpop.f32.mrf.mxu0
    %907 = vmatprep.mubr.f32.mxu0 0.0
    %908 = vmatmul.mubr.f32.gmra.mxu0 %v624
    %v909 = vpop.f32.mrf.mxu0
    %v910 = vadd.f32 0.0, %v909
    %v911 = vpop.f32.mrf.mxu0
    %912 = vmatprep.mubr.f32.mxu0 0.0
    %913 = vmatmul.mubr.f32.gmra.mxu0 %v627
    %v914 = vpop.f32.mrf.mxu0
    %v915 = vadd.f32 0.0, %v914
    %v916 = vpop.f32.mrf.mxu0
    %917 = vmatprep.mubr.f32.mxu0 0.0
    %918 = vmatmul.mubr.f32.gmra.mxu0 %v630
    %v919 = vpop.f32.mrf.mxu0
    %v920 = vadd.f32 0.0, %v919
    %v921 = vpop.f32.mrf.mxu0
    %922 = vmatprep.mubr.f32.mxu0 0.0
    %923 = vmatmul.mubr.f32.gmra.mxu0 %v633
    %v924 = vpop.f32.mrf.mxu0
    %v925 = vadd.f32 0.0, %v924
    %v926 = vpop.f32.mrf.mxu0
    %927 = vmatprep.mubr.f32.mxu0 0.0
    %928 = vmatmul.mubr.f32.gmra.mxu0 %v636
    %v929 = vpop.f32.mrf.mxu0
    %v930 = vadd.f32 0.0, %v929
    %v931 = vpop.f32.mrf.mxu0
    %932 = vmatprep.mubr.f32.mxu0 0.0
    %933 = vmatmul.mubr.f32.gmra.mxu0 %v639
    %v934 = vpop.f32.mrf.mxu0
    %v935 = vadd.f32 0.0, %v934
    %v936 = vpop.f32.mrf.mxu0
    %937 = vmatprep.mubr.f32.mxu0 0.0
    %938 = vmatmul.mubr.f32.gmra.mxu0 %v642
    %v939 = vpop.f32.mrf.mxu0
    %v940 = vadd.f32 0.0, %v939
    %v941 = vpop.f32.mrf.mxu0
    %942 = vmatprep.mubr.f32.mxu0 0.0
    %943 = vmatmul.mubr.f32.gmra.mxu0 %v645
    %v944 = vpop.f32.mrf.mxu0
    %v945 = vadd.f32 0.0, %v944
    %v946 = vpop.f32.mrf.mxu0
    %947 = vmatprep.mubr.f32.mxu0 0.0
    %948 = vmatmul.mubr.f32.gmra.mxu0 %v648
    %v949 = vpop.f32.mrf.mxu0
    %v950 = vadd.f32 0.0, %v949
    %v951 = vpop.f32.mrf.mxu0
    %952 = vmatprep.mubr.f32.mxu0 0.0
    %953 = vmatmul.mubr.f32.gmra.mxu0 %v651
    %v954 = vpop.f32.mrf.mxu0
    %v955 = vadd.f32 0.0, %v954
    %v956 = vpop.f32.mrf.mxu0
    %957 = vmatprep.mubr.f32.mxu0 0.0
    %958 = vmatmul.mubr.f32.gmra.mxu0 %v654
    %v959 = vpop.f32.mrf.mxu0
    %v960 = vadd.f32 0.0, %v959
    %v961 = vpop.f32.mrf.mxu0
    %962 = vmatprep.mubr.f32.mxu0 0.0
    %963 = vmatmul.mubr.f32.gmra.mxu0 %v657
    %v964 = vpop.f32.mrf.mxu0
    %v965 = vadd.f32 0.0, %v964
    %v966 = vpop.f32.mrf.mxu0
    %967 = vmatprep.mubr.f32.mxu0 0.0
    %968 = vmatmul.mubr.f32.gmra.mxu0 %v660
    %v969 = vpop.f32.mrf.mxu0
    %v970 = vadd.f32 0.0, %v969
    %v971 = vpop.f32.mrf.mxu0
    %972 = vmatprep.mubr.f32.mxu0 0.0
    %973 = vmatmul.mubr.f32.gmra.mxu0 %v663
    %v974 = vpop.f32.mrf.mxu0
    %v975 = vadd.f32 0.0, %v974
    %v976 = vpop.f32.mrf.mxu0
    %977 = vmatprep.mubr.f32.mxu0 0.0
    %978 = vmatmul.mubr.f32.gmra.mxu0 %v666
    %v979 = vpop.f32.mrf.mxu0
    %v980 = vadd.f32 0.0, %v979
    %v981 = vpop.f32.mrf.mxu0
    %982 = vmatprep.mubr.f32.mxu0 0.0
    %983 = vmatmul.mubr.f32.gmra.mxu0 %v669
    %v984 = vpop.f32.mrf.mxu0
    %v985 = vadd.f32 0.0, %v984
    %v986 = vpop.f32.mrf.mxu0
    %987 = vmatprep.mubr.f32.mxu0 0.0
    %988 = vmatmul.mubr.f32.gmra.mxu0 %v672
    %v989 = vpop.f32.mrf.mxu0
    %v990 = vadd.f32 0.0, %v989
    %v991 = vpop.f32.mrf.mxu0
    %992 = vdwg.mxu0
    %v993 = vmax.f32 %v745, %v870
    %v994 = vmax.f32 %v750, %v875
    %v995 = vmax.f32 %v755, %v880
    %v996 = vmax.f32 %v760, %v885
    %v997 = vmax.f32 %v765, %v890
    %v998 = vmax.f32 %v770, %v895
    %v999 = vmax.f32 %v775, %v900
    %v1000 = vmax.f32 %v780, %v905
    %v1001 = vmax.f32 %v785, %v910
    %v1002 = vmax.f32 %v790, %v915
    %v1003 = vmax.f32 %v795, %v920
    %v1004 = vmax.f32 %v800, %v925
    %v1005 = vmax.f32 %v805, %v930
    %v1006 = vmax.f32 %v810, %v935
    %v1007 = vmax.f32 %v815, %v940
    %v1008 = vmax.f32 %v820, %v945
    %v1009 = vmax.f32 %v825, %v950
    %v1010 = vmax.f32 %v830, %v955
    %v1011 = vmax.f32 %v835, %v960
    %v1012 = vmax.f32 %v840, %v965
    %v1013 = vmax.f32 %v845, %v970
    %v1014 = vmax.f32 %v850, %v975
    %v1015 = vmax.f32 %v855, %v980
    %v1016 = vmax.f32 %v860, %v985
    %v1017 = vmax.f32 %v865, %v990
    %v1018 = vld [vmem:[%s2] sm:$0x1]
    %v1020 = vlaneseq
    %v1021 = vshrl.u32 %v1020, 7
    %v1022 = vsub.s32 0, %v1021
    %v1023 = vrot.slane %v1018, %v1022
    %v1025 = vadd.f32 %v993, %v1023
    %v1026 = vadd.f32 %v994, %v1023
    %v1027 = vadd.f32 %v995, %v1023
    %v1028 = vadd.f32 %v996, %v1023
    %v1029 = vadd.f32 %v997, %v1023
    %v1030 = vadd.f32 %v998, %v1023
    %v1031 = vadd.f32 %v999, %v1023
    %v1032 = vadd.f32 %v1000, %v1023
    %v1033 = vadd.f32 %v1001, %v1023
    %v1034 = vadd.f32 %v1002, %v1023
    %v1035 = vadd.f32 %v1003, %v1023
    %v1036 = vadd.f32 %v1004, %v1023
    %v1037 = vadd.f32 %v1005, %v1023
    %v1038 = vadd.f32 %v1006, %v1023
    %v1039 = vadd.f32 %v1007, %v1023
    %v1040 = vadd.f32 %v1008, %v1023
    %v1041 = vadd.f32 %v1009, %v1023
    %v1042 = vadd.f32 %v1010, %v1023
    %v1043 = vadd.f32 %v1011, %v1023
    %v1044 = vadd.f32 %v1012, %v1023
    %v1045 = vadd.f32 %v1013, %v1023
    %v1046 = vadd.f32 %v1014, %v1023
    %v1047 = vadd.f32 %v1015, %v1023
    %v1048 = vadd.f32 %v1016, %v1023
    %v1049 = vadd.f32 %v1017, %v1023
    %v1050 = vmax.f32 %v1025, 0.0
    %v1051 = vmax.f32 %v1026, 0.0
    %v1052 = vmax.f32 %v1027, 0.0
    %v1053 = vmax.f32 %v1028, 0.0
    %v1054 = vmax.f32 %v1029, 0.0
    %v1055 = vmax.f32 %v1030, 0.0
    %v1056 = vmax.f32 %v1031, 0.0
    %v1057 = vmax.f32 %v1032, 0.0
    %v1058 = vmax.f32 %v1033, 0.0
    %v1059 = vmax.f32 %v1034, 0.0
    %v1060 = vmax.f32 %v1035, 0.0
    %v1061 = vmax.f32 %v1036, 0.0
    %v1062 = vmax.f32 %v1037, 0.0
    %v1063 = vmax.f32 %v1038, 0.0
    %v1064 = vmax.f32 %v1039, 0.0
    %v1065 = vmax.f32 %v1040, 0.0
    %v1066 = vmax.f32 %v1041, 0.0
    %v1067 = vmax.f32 %v1042, 0.0
    %v1068 = vmax.f32 %v1043, 0.0
    %v1069 = vmax.f32 %v1044, 0.0
    %v1070 = vmax.f32 %v1045, 0.0
    %v1071 = vmax.f32 %v1046, 0.0
    %v1072 = vmax.f32 %v1047, 0.0
    %v1073 = vmax.f32 %v1048, 0.0
    %v1074 = vmax.f32 %v1049, 0.0
    %vm1075 = vcmask 523264
    %1076 = vst.msk [vmem:[#allocation2] sm:$0xff] %vm1075, %v1050
    %1077 = vst.msk [vmem:[#allocation2 + $0x8] sm:$0xff] %vm1075, %v1051
    %1078 = vst.msk [vmem:[#allocation2 + $0x10] sm:$0xff] %vm1075, %v1052
    %1079 = vst.msk [vmem:[#allocation2 + $0x18] sm:$0xff] %vm1075, %v1053
    %1080 = vst.msk [vmem:[#allocation2 + $0x20] sm:$0xff] %vm1075, %v1054
    %1081 = vst.msk [vmem:[#allocation2 + $0x28] sm:$0xff] %vm1075, %v1055
    %1082 = vst.msk [vmem:[#allocation2 + $0x30] sm:$0xff] %vm1075, %v1056
    %1083 = vst.msk [vmem:[#allocation2 + $0x38] sm:$0xff] %vm1075, %v1057
    %1084 = vst.msk [vmem:[#allocation2 + $0x40] sm:$0xff] %vm1075, %v1058
    %1085 = vst.msk [vmem:[#allocation2 + $0x48] sm:$0xff] %vm1075, %v1059
    %1086 = vst.msk [vmem:[#allocation2 + $0x50] sm:$0xff] %vm1075, %v1060
    %1087 = vst.msk [vmem:[#allocation2 + $0x58] sm:$0xff] %vm1075, %v1061
    %1088 = vst.msk [vmem:[#allocation2 + $0x60] sm:$0xff] %vm1075, %v1062
    %1089 = vst.msk [vmem:[#allocation2 + $0x68] sm:$0xff] %vm1075, %v1063
    %1090 = vst.msk [vmem:[#allocation2 + $0x70] sm:$0xff] %vm1075, %v1064
    %1091 = vst.msk [vmem:[#allocation2 + $0x78] sm:$0xff] %vm1075, %v1065
    %1092 = vst.msk [vmem:[#allocation2 + $0x80] sm:$0xff] %vm1075, %v1066
    %1093 = vst.msk [vmem:[#allocation2 + $0x88] sm:$0xff] %vm1075, %v1067
    %1094 = vst.msk [vmem:[#allocation2 + $0x90] sm:$0xff] %vm1075, %v1068
    %1095 = vst.msk [vmem:[#allocation2 + $0x98] sm:$0xff] %vm1075, %v1069
    %1096 = vst.msk [vmem:[#allocation2 + $0xa0] sm:$0xff] %vm1075, %v1070
    %1097 = vst.msk [vmem:[#allocation2 + $0xa8] sm:$0xff] %vm1075, %v1071
    %1098 = vst.msk [vmem:[#allocation2 + $0xb0] sm:$0xff] %vm1075, %v1072
    %1099 = vst.msk [vmem:[#allocation2 + $0xb8] sm:$0xff] %vm1075, %v1073
    %1100 = vst.msk [vmem:[#allocation2 + $0xc0] sm:$0xff] %vm1075, %v1074
    %v1101 = vld [vmem:[#allocation2] sm:$0x3]
    %vm1102 = vcmask 517120
    %1103 = vst.msk [vmem:[#allocation3] sm:$0x3] %vm1102, %v1101
    %v1104 = vld [vmem:[#allocation2 + $0x2] sm:$0x3]
    %v1107 = vunpack.c.l.s4 1983009808
    %v1108 = vunpack.c.0.s8 %v1107
    %v1109 = vlaneseq
    %v1110 = vshrl.u32 %v1109, 7
    %v1111 = vsub.s32 %v1108, %v1110
    %v1112 = vrot.slane %v1104, %v1111
    %1113 = vrot.lane.b32.xlu0 %v1112, 64
    %v1114 = vpop.permute.xlu0 %1113
    %vm1116 = vcmask 1041920
    %1117 = vst.msk [vmem:[#allocation3] sm:$0x3] %vm1116, %v1114
    %v1118 = vld [vmem:[#allocation2 + $0x4] sm:$0x3]
    %1119 = vst.msk [vmem:[#allocation3 + $0x2] sm:$0x3] %vm1102, %v1118
    %v1120 = vld [vmem:[#allocation2 + $0x6] sm:$0x3]
    %v1123 = vunpack.c.l.s4 1983009808
    %v1124 = vunpack.c.0.s8 %v1123
    %v1125 = vlaneseq
    %v1126 = vshrl.u32 %v1125, 7
    %v1127 = vsub.s32 %v1124, %v1126
    %v1128 = vrot.slane %v1120, %v1127
    %1129 = vrot.lane.b32.xlu0 %v1128, 64
    %v1130 = vpop.permute.xlu0 %1129
    %1132 = vst.msk [vmem:[#allocation3 + $0x2] sm:$0x3] %vm1116, %v1130
    %v1133 = vld [vmem:[#allocation2 + $0x8] sm:$0x3]
    %1134 = vst.msk [vmem:[#allocation3 + $0x4] sm:$0x3] %vm1102, %v1133
    %v1135 = vld [vmem:[#allocation2 + $0xa] sm:$0x3]
    %v1138 = vunpack.c.l.s4 1983009808
    %v1139 = vunpack.c.0.s8 %v1138
    %v1140 = vlaneseq
    %v1141 = vshrl.u32 %v1140, 7
    %v1142 = vsub.s32 %v1139, %v1141
    %v1143 = vrot.slane %v1135, %v1142
    %1144 = vrot.lane.b32.xlu0 %v1143, 64
    %v1145 = vpop.permute.xlu0 %1144
    %1147 = vst.msk [vmem:[#allocation3 + $0x4] sm:$0x3] %vm1116, %v1145
    %v1148 = vld [vmem:[#allocation2 + $0xc] sm:$0x3]
    %1149 = vst.msk [vmem:[#allocation3 + $0x6] sm:$0x3] %vm1102, %v1148
    %v1150 = vld [vmem:[#allocation2 + $0xe] sm:$0x3]
    %v1153 = vunpack.c.l.s4 1983009808
    %v1154 = vunpack.c.0.s8 %v1153
    %v1155 = vlaneseq
    %v1156 = vshrl.u32 %v1155, 7
    %v1157 = vsub.s32 %v1154, %v1156
    %v1158 = vrot.slane %v1150, %v1157
    %1159 = vrot.lane.b32.xlu0 %v1158, 64
    %v1160 = vpop.permute.xlu0 %1159
    %1162 = vst.msk [vmem:[#allocation3 + $0x6] sm:$0x3] %vm1116, %v1160
    %v1163 = vld [vmem:[#allocation2 + $0x10] sm:$0x3]
    %1164 = vst.msk [vmem:[#allocation3 + $0x8] sm:$0x3] %vm1102, %v1163
    %v1165 = vld [vmem:[#allocation2 + $0x12] sm:$0x3]
    %v1168 = vunpack.c.l.s4 1983009808
    %v1169 = vunpack.c.0.s8 %v1168
    %v1170 = vlaneseq
    %v1171 = vshrl.u32 %v1170, 7
    %v1172 = vsub.s32 %v1169, %v1171
    %v1173 = vrot.slane %v1165, %v1172
    %1174 = vrot.lane.b32.xlu0 %v1173, 64
    %v1175 = vpop.permute.xlu0 %1174
    %1177 = vst.msk [vmem:[#allocation3 + $0x8] sm:$0x3] %vm1116, %v1175
    %v1178 = vld [vmem:[#allocation2 + $0x14] sm:$0x3]
    %1179 = vst.msk [vmem:[#allocation3 + $0xa] sm:$0x3] %vm1102, %v1178
    %v1180 = vld [vmem:[#allocation2 + $0x16] sm:$0x3]
    %v1183 = vunpack.c.l.s4 1983009808
    %v1184 = vunpack.c.0.s8 %v1183
    %v1185 = vlaneseq
    %v1186 = vshrl.u32 %v1185, 7
    %v1187 = vsub.s32 %v1184, %v1186
    %v1188 = vrot.slane %v1180, %v1187
    %1189 = vrot.lane.b32.xlu0 %v1188, 64
    %v1190 = vpop.permute.xlu0 %1189
    %1192 = vst.msk [vmem:[#allocation3 + $0xa] sm:$0x3] %vm1116, %v1190
    %v1193 = vld [vmem:[#allocation2 + $0x18] sm:$0x3]
    %1194 = vst.msk [vmem:[#allocation3 + $0xc] sm:$0x3] %vm1102, %v1193
    %v1195 = vld [vmem:[#allocation2 + $0x1a] sm:$0x3]
    %v1198 = vunpack.c.l.s4 1983009808
    %v1199 = vunpack.c.0.s8 %v1198
    %v1200 = vlaneseq
    %v1201 = vshrl.u32 %v1200, 7
    %v1202 = vsub.s32 %v1199, %v1201
    %v1203 = vrot.slane %v1195, %v1202
    %1204 = vrot.lane.b32.xlu0 %v1203, 64
    %v1205 = vpop.permute.xlu0 %1204
    %1207 = vst.msk [vmem:[#allocation3 + $0xc] sm:$0x3] %vm1116, %v1205
    %v1208 = vld [vmem:[#allocation2 + $0x1c] sm:$0x3]
    %1209 = vst.msk [vmem:[#allocation3 + $0xe] sm:$0x3] %vm1102, %v1208
    %v1210 = vld [vmem:[#allocation2 + $0x1e] sm:$0x3]
    %v1213 = vunpack.c.l.s4 1983009808
    %v1214 = vunpack.c.0.s8 %v1213
    %v1215 = vlaneseq
    %v1216 = vshrl.u32 %v1215, 7
    %v1217 = vsub.s32 %v1214, %v1216
    %v1218 = vrot.slane %v1210, %v1217
    %1219 = vrot.lane.b32.xlu0 %v1218, 64
    %v1220 = vpop.permute.xlu0 %1219
    %1222 = vst.msk [vmem:[#allocation3 + $0xe] sm:$0x3] %vm1116, %v1220
    %v1223 = vld [vmem:[#allocation2 + $0x20] sm:$0x3]
    %1224 = vst.msk [vmem:[#allocation3 + $0x10] sm:$0x3] %vm1102, %v1223
    %v1225 = vld [vmem:[#allocation2 + $0x22] sm:$0x3]
    %v1228 = vunpack.c.l.s4 1983009808
    %v1229 = vunpack.c.0.s8 %v1228
    %v1230 = vlaneseq
    %v1231 = vshrl.u32 %v1230, 7
    %v1232 = vsub.s32 %v1229, %v1231
    %v1233 = vrot.slane %v1225, %v1232
    %1234 = vrot.lane.b32.xlu0 %v1233, 64
    %v1235 = vpop.permute.xlu0 %1234
    %1237 = vst.msk [vmem:[#allocation3 + $0x10] sm:$0x3] %vm1116, %v1235
    %v1238 = vld [vmem:[#allocation2 + $0x24] sm:$0x3]
    %1239 = vst.msk [vmem:[#allocation3 + $0x12] sm:$0x3] %vm1102, %v1238
    %v1240 = vld [vmem:[#allocation2 + $0x26] sm:$0x3]
    %v1243 = vunpack.c.l.s4 1983009808
    %v1244 = vunpack.c.0.s8 %v1243
    %v1245 = vlaneseq
    %v1246 = vshrl.u32 %v1245, 7
    %v1247 = vsub.s32 %v1244, %v1246
    %v1248 = vrot.slane %v1240, %v1247
    %1249 = vrot.lane.b32.xlu0 %v1248, 64
    %v1250 = vpop.permute.xlu0 %1249
    %1252 = vst.msk [vmem:[#allocation3 + $0x12] sm:$0x3] %vm1116, %v1250
    %v1253 = vld [vmem:[#allocation2 + $0x28] sm:$0x3]
    %1254 = vst.msk [vmem:[#allocation3 + $0x14] sm:$0x3] %vm1102, %v1253
    %v1255 = vld [vmem:[#allocation2 + $0x2a] sm:$0x3]
    %v1258 = vunpack.c.l.s4 1983009808
    %v1259 = vunpack.c.0.s8 %v1258
    %v1260 = vlaneseq
    %v1261 = vshrl.u32 %v1260, 7
    %v1262 = vsub.s32 %v1259, %v1261
    %v1263 = vrot.slane %v1255, %v1262
    %1264 = vrot.lane.b32.xlu0 %v1263, 64
    %v1265 = vpop.permute.xlu0 %1264
    %1267 = vst.msk [vmem:[#allocation3 + $0x14] sm:$0x3] %vm1116, %v1265
    %v1268 = vld [vmem:[#allocation2 + $0x2c] sm:$0x3]
    %1269 = vst.msk [vmem:[#allocation3 + $0x16] sm:$0x3] %vm1102, %v1268
    %v1270 = vld [vmem:[#allocation2 + $0x2e] sm:$0x3]
    %v1273 = vunpack.c.l.s4 1983009808
    %v1274 = vunpack.c.0.s8 %v1273
    %v1275 = vlaneseq
    %v1276 = vshrl.u32 %v1275, 7
    %v1277 = vsub.s32 %v1274, %v1276
    %v1278 = vrot.slane %v1270, %v1277
    %1279 = vrot.lane.b32.xlu0 %v1278, 64
    %v1280 = vpop.permute.xlu0 %1279
    %1282 = vst.msk [vmem:[#allocation3 + $0x16] sm:$0x3] %vm1116, %v1280
    %v1283 = vld [vmem:[#allocation2 + $0x30] sm:$0x3]
    %1284 = vst.msk [vmem:[#allocation3 + $0x18] sm:$0x3] %vm1102, %v1283
    %v1285 = vld [vmem:[#allocation2 + $0x32] sm:$0x3]
    %v1288 = vunpack.c.l.s4 1983009808
    %v1289 = vunpack.c.0.s8 %v1288
    %v1290 = vlaneseq
    %v1291 = vshrl.u32 %v1290, 7
    %v1292 = vsub.s32 %v1289, %v1291
    %v1293 = vrot.slane %v1285, %v1292
    %1294 = vrot.lane.b32.xlu0 %v1293, 64
    %v1295 = vpop.permute.xlu0 %1294
    %1297 = vst.msk [vmem:[#allocation3 + $0x18] sm:$0x3] %vm1116, %v1295
    %v1298 = vld [vmem:[#allocation2 + $0x34] sm:$0x3]
    %1299 = vst.msk [vmem:[#allocation3 + $0x1a] sm:$0x3] %vm1102, %v1298
    %v1300 = vld [vmem:[#allocation2 + $0x36] sm:$0x3]
    %v1303 = vunpack.c.l.s4 1983009808
    %v1304 = vunpack.c.0.s8 %v1303
    %v1305 = vlaneseq
    %v1306 = vshrl.u32 %v1305, 7
    %v1307 = vsub.s32 %v1304, %v1306
    %v1308 = vrot.slane %v1300, %v1307
    %1309 = vrot.lane.b32.xlu0 %v1308, 64
    %v1310 = vpop.permute.xlu0 %1309
    %1312 = vst.msk [vmem:[#allocation3 + $0x1a] sm:$0x3] %vm1116, %v1310
    %v1313 = vld [vmem:[#allocation2 + $0x38] sm:$0x3]
    %1314 = vst.msk [vmem:[#allocation3 + $0x1c] sm:$0x3] %vm1102, %v1313
    %v1315 = vld [vmem:[#allocation2 + $0x3a] sm:$0x3]
    %v1318 = vunpack.c.l.s4 1983009808
    %v1319 = vunpack.c.0.s8 %v1318
    %v1320 = vlaneseq
    %v1321 = vshrl.u32 %v1320, 7
    %v1322 = vsub.s32 %v1319, %v1321
    %v1323 = vrot.slane %v1315, %v1322
    %1324 = vrot.lane.b32.xlu0 %v1323, 64
    %v1325 = vpop.permute.xlu0 %1324
    %1327 = vst.msk [vmem:[#allocation3 + $0x1c] sm:$0x3] %vm1116, %v1325
    %v1328 = vld [vmem:[#allocation2 + $0x3c] sm:$0x3]
    %1329 = vst.msk [vmem:[#allocation3 + $0x1e] sm:$0x3] %vm1102, %v1328
    %v1330 = vld [vmem:[#allocation2 + $0x3e] sm:$0x3]
    %v1333 = vunpack.c.l.s4 1983009808
    %v1334 = vunpack.c.0.s8 %v1333
    %v1335 = vlaneseq
    %v1336 = vshrl.u32 %v1335, 7
    %v1337 = vsub.s32 %v1334, %v1336
    %v1338 = vrot.slane %v1330, %v1337
    %1339 = vrot.lane.b32.xlu0 %v1338, 64
    %v1340 = vpop.permute.xlu0 %1339
    %1342 = vst.msk [vmem:[#allocation3 + $0x1e] sm:$0x3] %vm1116, %v1340
    %v1343 = vld [vmem:[#allocation2 + $0x40] sm:$0x3]
    %1344 = vst.msk [vmem:[#allocation3 + $0x20] sm:$0x3] %vm1102, %v1343
    %v1345 = vld [vmem:[#allocation2 + $0x42] sm:$0x3]
    %v1348 = vunpack.c.l.s4 1983009808
    %v1349 = vunpack.c.0.s8 %v1348
    %v1350 = vlaneseq
    %v1351 = vshrl.u32 %v1350, 7
    %v1352 = vsub.s32 %v1349, %v1351
    %v1353 = vrot.slane %v1345, %v1352
    %1354 = vrot.lane.b32.xlu0 %v1353, 64
    %v1355 = vpop.permute.xlu0 %1354
    %1357 = vst.msk [vmem:[#allocation3 + $0x20] sm:$0x3] %vm1116, %v1355
    %v1358 = vld [vmem:[#allocation2 + $0x44] sm:$0x3]
    %1359 = vst.msk [vmem:[#allocation3 + $0x22] sm:$0x3] %vm1102, %v1358
    %v1360 = vld [vmem:[#allocation2 + $0x46] sm:$0x3]
    %v1363 = vunpack.c.l.s4 1983009808
    %v1364 = vunpack.c.0.s8 %v1363
    %v1365 = vlaneseq
    %v1366 = vshrl.u32 %v1365, 7
    %v1367 = vsub.s32 %v1364, %v1366
    %v1368 = vrot.slane %v1360, %v1367
    %1369 = vrot.lane.b32.xlu0 %v1368, 64
    %v1370 = vpop.permute.xlu0 %1369
    %1372 = vst.msk [vmem:[#allocation3 + $0x22] sm:$0x3] %vm1116, %v1370
    %v1373 = vld [vmem:[#allocation2 + $0x48] sm:$0x3]
    %1374 = vst.msk [vmem:[#allocation3 + $0x24] sm:$0x3] %vm1102, %v1373
    %v1375 = vld [vmem:[#allocation2 + $0x4a] sm:$0x3]
    %v1378 = vunpack.c.l.s4 1983009808
    %v1379 = vunpack.c.0.s8 %v1378
    %v1380 = vlaneseq
    %v1381 = vshrl.u32 %v1380, 7
    %v1382 = vsub.s32 %v1379, %v1381
    %v1383 = vrot.slane %v1375, %v1382
    %1384 = vrot.lane.b32.xlu0 %v1383, 64
    %v1385 = vpop.permute.xlu0 %1384
    %1387 = vst.msk [vmem:[#allocation3 + $0x24] sm:$0x3] %vm1116, %v1385
    %v1388 = vld [vmem:[#allocation2 + $0x4c] sm:$0x3]
    %1389 = vst.msk [vmem:[#allocation3 + $0x26] sm:$0x3] %vm1102, %v1388
    %v1390 = vld [vmem:[#allocation2 + $0x4e] sm:$0x3]
    %v1393 = vunpack.c.l.s4 1983009808
    %v1394 = vunpack.c.0.s8 %v1393
    %v1395 = vlaneseq
    %v1396 = vshrl.u32 %v1395, 7
    %v1397 = vsub.s32 %v1394, %v1396
    %v1398 = vrot.slane %v1390, %v1397
    %1399 = vrot.lane.b32.xlu0 %v1398, 64
    %v1400 = vpop.permute.xlu0 %1399
    %1402 = vst.msk [vmem:[#allocation3 + $0x26] sm:$0x3] %vm1116, %v1400
    %v1403 = vld [vmem:[#allocation2 + $0x50] sm:$0x3]
    %1404 = vst.msk [vmem:[#allocation3 + $0x28] sm:$0x3] %vm1102, %v1403
    %v1405 = vld [vmem:[#allocation2 + $0x52] sm:$0x3]
    %v1408 = vunpack.c.l.s4 1983009808
    %v1409 = vunpack.c.0.s8 %v1408
    %v1410 = vlaneseq
    %v1411 = vshrl.u32 %v1410, 7
    %v1412 = vsub.s32 %v1409, %v1411
    %v1413 = vrot.slane %v1405, %v1412
    %1414 = vrot.lane.b32.xlu0 %v1413, 64
    %v1415 = vpop.permute.xlu0 %1414
    %1417 = vst.msk [vmem:[#allocation3 + $0x28] sm:$0x3] %vm1116, %v1415
    %v1418 = vld [vmem:[#allocation2 + $0x54] sm:$0x3]
    %1419 = vst.msk [vmem:[#allocation3 + $0x2a] sm:$0x3] %vm1102, %v1418
    %v1420 = vld [vmem:[#allocation2 + $0x56] sm:$0x3]
    %v1423 = vunpack.c.l.s4 1983009808
    %v1424 = vunpack.c.0.s8 %v1423
    %v1425 = vlaneseq
    %v1426 = vshrl.u32 %v1425, 7
    %v1427 = vsub.s32 %v1424, %v1426
    %v1428 = vrot.slane %v1420, %v1427
    %1429 = vrot.lane.b32.xlu0 %v1428, 64
    %v1430 = vpop.permute.xlu0 %1429
    %1432 = vst.msk [vmem:[#allocation3 + $0x2a] sm:$0x3] %vm1116, %v1430
    %v1433 = vld [vmem:[#allocation2 + $0x58] sm:$0x3]
    %1434 = vst.msk [vmem:[#allocation3 + $0x2c] sm:$0x3] %vm1102, %v1433
    %v1435 = vld [vmem:[#allocation2 + $0x5a] sm:$0x3]
    %v1438 = vunpack.c.l.s4 1983009808
    %v1439 = vunpack.c.0.s8 %v1438
    %v1440 = vlaneseq
    %v1441 = vshrl.u32 %v1440, 7
    %v1442 = vsub.s32 %v1439, %v1441
    %v1443 = vrot.slane %v1435, %v1442
    %1444 = vrot.lane.b32.xlu0 %v1443, 64
    %v1445 = vpop.permute.xlu0 %1444
    %1447 = vst.msk [vmem:[#allocation3 + $0x2c] sm:$0x3] %vm1116, %v1445
    %v1448 = vld [vmem:[#allocation2 + $0x5c] sm:$0x3]
    %1449 = vst.msk [vmem:[#allocation3 + $0x2e] sm:$0x3] %vm1102, %v1448
    %v1450 = vld [vmem:[#allocation2 + $0x5e] sm:$0x3]
    %v1453 = vunpack.c.l.s4 1983009808
    %v1454 = vunpack.c.0.s8 %v1453
    %v1455 = vlaneseq
    %v1456 = vshrl.u32 %v1455, 7
    %v1457 = vsub.s32 %v1454, %v1456
    %v1458 = vrot.slane %v1450, %v1457
    %1459 = vrot.lane.b32.xlu0 %v1458, 64
    %v1460 = vpop.permute.xlu0 %1459
    %1462 = vst.msk [vmem:[#allocation3 + $0x2e] sm:$0x3] %vm1116, %v1460
    %v1463 = vld [vmem:[#allocation2 + $0x60] sm:$0x3]
    %1464 = vst.msk [vmem:[#allocation3 + $0x30] sm:$0x3] %vm1102, %v1463
    %v1465 = vld [vmem:[#allocation2 + $0x62] sm:$0x3]
    %v1468 = vunpack.c.l.s4 1983009808
    %v1469 = vunpack.c.0.s8 %v1468
    %v1470 = vlaneseq
    %v1471 = vshrl.u32 %v1470, 7
    %v1472 = vsub.s32 %v1469, %v1471
    %v1473 = vrot.slane %v1465, %v1472
    %1474 = vrot.lane.b32.xlu0 %v1473, 64
    %v1475 = vpop.permute.xlu0 %1474
    %1477 = vst.msk [vmem:[#allocation3 + $0x30] sm:$0x3] %vm1116, %v1475
    %v1478 = vld [vmem:[#allocation2 + $0x64] sm:$0x3]
    %1479 = vst.msk [vmem:[#allocation3 + $0x32] sm:$0x3] %vm1102, %v1478
    %v1480 = vld [vmem:[#allocation2 + $0x66] sm:$0x3]
    %v1483 = vunpack.c.l.s4 1983009808
    %v1484 = vunpack.c.0.s8 %v1483
    %v1485 = vlaneseq
    %v1486 = vshrl.u32 %v1485, 7
    %v1487 = vsub.s32 %v1484, %v1486
    %v1488 = vrot.slane %v1480, %v1487
    %1489 = vrot.lane.b32.xlu0 %v1488, 64
    %v1490 = vpop.permute.xlu0 %1489
    %1492 = vst.msk [vmem:[#allocation3 + $0x32] sm:$0x3] %vm1116, %v1490
    %v1493 = vld [vmem:[#allocation2 + $0x68] sm:$0x3]
    %1494 = vst.msk [vmem:[#allocation3 + $0x34] sm:$0x3] %vm1102, %v1493
    %v1495 = vld [vmem:[#allocation2 + $0x6a] sm:$0x3]
    %v1498 = vunpack.c.l.s4 1983009808
    %v1499 = vunpack.c.0.s8 %v1498
    %v1500 = vlaneseq
    %v1501 = vshrl.u32 %v1500, 7
    %v1502 = vsub.s32 %v1499, %v1501
    %v1503 = vrot.slane %v1495, %v1502
    %1504 = vrot.lane.b32.xlu0 %v1503, 64
    %v1505 = vpop.permute.xlu0 %1504
    %1507 = vst.msk [vmem:[#allocation3 + $0x34] sm:$0x3] %vm1116, %v1505
    %v1508 = vld [vmem:[#allocation2 + $0x6c] sm:$0x3]
    %1509 = vst.msk [vmem:[#allocation3 + $0x36] sm:$0x3] %vm1102, %v1508
    %v1510 = vld [vmem:[#allocation2 + $0x6e] sm:$0x3]
    %v1513 = vunpack.c.l.s4 1983009808
    %v1514 = vunpack.c.0.s8 %v1513
    %v1515 = vlaneseq
    %v1516 = vshrl.u32 %v1515, 7
    %v1517 = vsub.s32 %v1514, %v1516
    %v1518 = vrot.slane %v1510, %v1517
    %1519 = vrot.lane.b32.xlu0 %v1518, 64
    %v1520 = vpop.permute.xlu0 %1519
    %1522 = vst.msk [vmem:[#allocation3 + $0x36] sm:$0x3] %vm1116, %v1520
    %v1523 = vld [vmem:[#allocation2 + $0x70] sm:$0x3]
    %1524 = vst.msk [vmem:[#allocation3 + $0x38] sm:$0x3] %vm1102, %v1523
    %v1525 = vld [vmem:[#allocation2 + $0x72] sm:$0x3]
    %v1528 = vunpack.c.l.s4 1983009808
    %v1529 = vunpack.c.0.s8 %v1528
    %v1530 = vlaneseq
    %v1531 = vshrl.u32 %v1530, 7
    %v1532 = vsub.s32 %v1529, %v1531
    %v1533 = vrot.slane %v1525, %v1532
    %1534 = vrot.lane.b32.xlu0 %v1533, 64
    %v1535 = vpop.permute.xlu0 %1534
    %1537 = vst.msk [vmem:[#allocation3 + $0x38] sm:$0x3] %vm1116, %v1535
    %v1538 = vld [vmem:[#allocation2 + $0x74] sm:$0x3]
    %1539 = vst.msk [vmem:[#allocation3 + $0x3a] sm:$0x3] %vm1102, %v1538
    %v1540 = vld [vmem:[#allocation2 + $0x76] sm:$0x3]
    %v1543 = vunpack.c.l.s4 1983009808
    %v1544 = vunpack.c.0.s8 %v1543
    %v1545 = vlaneseq
    %v1546 = vshrl.u32 %v1545, 7
    %v1547 = vsub.s32 %v1544, %v1546
    %v1548 = vrot.slane %v1540, %v1547
    %1549 = vrot.lane.b32.xlu0 %v1548, 64
    %v1550 = vpop.permute.xlu0 %1549
    %1552 = vst.msk [vmem:[#allocation3 + $0x3a] sm:$0x3] %vm1116, %v1550
    %v1553 = vld [vmem:[#allocation2 + $0x78] sm:$0x3]
    %1554 = vst.msk [vmem:[#allocation3 + $0x3c] sm:$0x3] %vm1102, %v1553
    %v1555 = vld [vmem:[#allocation2 + $0x7a] sm:$0x3]
    %v1558 = vunpack.c.l.s4 1983009808
    %v1559 = vunpack.c.0.s8 %v1558
    %v1560 = vlaneseq
    %v1561 = vshrl.u32 %v1560, 7
    %v1562 = vsub.s32 %v1559, %v1561
    %v1563 = vrot.slane %v1555, %v1562
    %1564 = vrot.lane.b32.xlu0 %v1563, 64
    %v1565 = vpop.permute.xlu0 %1564
    %1567 = vst.msk [vmem:[#allocation3 + $0x3c] sm:$0x3] %vm1116, %v1565
    %v1568 = vld [vmem:[#allocation2 + $0x7c] sm:$0x3]
    %1569 = vst.msk [vmem:[#allocation3 + $0x3e] sm:$0x3] %vm1102, %v1568
    %v1570 = vld [vmem:[#allocation2 + $0x7e] sm:$0x3]
    %v1573 = vunpack.c.l.s4 1983009808
    %v1574 = vunpack.c.0.s8 %v1573
    %v1575 = vlaneseq
    %v1576 = vshrl.u32 %v1575, 7
    %v1577 = vsub.s32 %v1574, %v1576
    %v1578 = vrot.slane %v1570, %v1577
    %1579 = vrot.lane.b32.xlu0 %v1578, 64
    %v1580 = vpop.permute.xlu0 %1579
    %1582 = vst.msk [vmem:[#allocation3 + $0x3e] sm:$0x3] %vm1116, %v1580
    %v1583 = vld [vmem:[#allocation2 + $0x80] sm:$0x3]
    %1584 = vst.msk [vmem:[#allocation3 + $0x40] sm:$0x3] %vm1102, %v1583
    %v1585 = vld [vmem:[#allocation2 + $0x82] sm:$0x3]
    %v1588 = vunpack.c.l.s4 1983009808
    %v1589 = vunpack.c.0.s8 %v1588
    %v1590 = vlaneseq
    %v1591 = vshrl.u32 %v1590, 7
    %v1592 = vsub.s32 %v1589, %v1591
    %v1593 = vrot.slane %v1585, %v1592
    %1594 = vrot.lane.b32.xlu0 %v1593, 64
    %v1595 = vpop.permute.xlu0 %1594
    %1597 = vst.msk [vmem:[#allocation3 + $0x40] sm:$0x3] %vm1116, %v1595
    %v1598 = vld [vmem:[#allocation2 + $0x84] sm:$0x3]
    %1599 = vst.msk [vmem:[#allocation3 + $0x42] sm:$0x3] %vm1102, %v1598
    %v1600 = vld [vmem:[#allocation2 + $0x86] sm:$0x3]
    %v1603 = vunpack.c.l.s4 1983009808
    %v1604 = vunpack.c.0.s8 %v1603
    %v1605 = vlaneseq
    %v1606 = vshrl.u32 %v1605, 7
    %v1607 = vsub.s32 %v1604, %v1606
    %v1608 = vrot.slane %v1600, %v1607
    %1609 = vrot.lane.b32.xlu0 %v1608, 64
    %v1610 = vpop.permute.xlu0 %1609
    %1612 = vst.msk [vmem:[#allocation3 + $0x42] sm:$0x3] %vm1116, %v1610
    %v1613 = vld [vmem:[#allocation2 + $0x88] sm:$0x3]
    %1614 = vst.msk [vmem:[#allocation3 + $0x44] sm:$0x3] %vm1102, %v1613
    %v1615 = vld [vmem:[#allocation2 + $0x8a] sm:$0x3]
    %v1618 = vunpack.c.l.s4 1983009808
    %v1619 = vunpack.c.0.s8 %v1618
    %v1620 = vlaneseq
    %v1621 = vshrl.u32 %v1620, 7
    %v1622 = vsub.s32 %v1619, %v1621
    %v1623 = vrot.slane %v1615, %v1622
    %1624 = vrot.lane.b32.xlu0 %v1623, 64
    %v1625 = vpop.permute.xlu0 %1624
    %1627 = vst.msk [vmem:[#allocation3 + $0x44] sm:$0x3] %vm1116, %v1625
    %v1628 = vld [vmem:[#allocation2 + $0x8c] sm:$0x3]
    %1629 = vst.msk [vmem:[#allocation3 + $0x46] sm:$0x3] %vm1102, %v1628
    %v1630 = vld [vmem:[#allocation2 + $0x8e] sm:$0x3]
    %v1633 = vunpack.c.l.s4 1983009808
    %v1634 = vunpack.c.0.s8 %v1633
    %v1635 = vlaneseq
    %v1636 = vshrl.u32 %v1635, 7
    %v1637 = vsub.s32 %v1634, %v1636
    %v1638 = vrot.slane %v1630, %v1637
    %1639 = vrot.lane.b32.xlu0 %v1638, 64
    %v1640 = vpop.permute.xlu0 %1639
    %1642 = vst.msk [vmem:[#allocation3 + $0x46] sm:$0x3] %vm1116, %v1640
    %v1643 = vld [vmem:[#allocation2 + $0x90] sm:$0x3]
    %1644 = vst.msk [vmem:[#allocation3 + $0x48] sm:$0x3] %vm1102, %v1643
    %v1645 = vld [vmem:[#allocation2 + $0x92] sm:$0x3]
    %v1648 = vunpack.c.l.s4 1983009808
    %v1649 = vunpack.c.0.s8 %v1648
    %v1650 = vlaneseq
    %v1651 = vshrl.u32 %v1650, 7
    %v1652 = vsub.s32 %v1649, %v1651
    %v1653 = vrot.slane %v1645, %v1652
    %1654 = vrot.lane.b32.xlu0 %v1653, 64
    %v1655 = vpop.permute.xlu0 %1654
    %1657 = vst.msk [vmem:[#allocation3 + $0x48] sm:$0x3] %vm1116, %v1655
    %v1658 = vld [vmem:[#allocation2 + $0x94] sm:$0x3]
    %1659 = vst.msk [vmem:[#allocation3 + $0x4a] sm:$0x3] %vm1102, %v1658
    %v1660 = vld [vmem:[#allocation2 + $0x96] sm:$0x3]
    %v1663 = vunpack.c.l.s4 1983009808
    %v1664 = vunpack.c.0.s8 %v1663
    %v1665 = vlaneseq
    %v1666 = vshrl.u32 %v1665, 7
    %v1667 = vsub.s32 %v1664, %v1666
    %v1668 = vrot.slane %v1660, %v1667
    %1669 = vrot.lane.b32.xlu0 %v1668, 64
    %v1670 = vpop.permute.xlu0 %1669
    %1672 = vst.msk [vmem:[#allocation3 + $0x4a] sm:$0x3] %vm1116, %v1670
    %v1673 = vld [vmem:[#allocation2 + $0x98] sm:$0x3]
    %1674 = vst.msk [vmem:[#allocation3 + $0x4c] sm:$0x3] %vm1102, %v1673
    %v1675 = vld [vmem:[#allocation2 + $0x9a] sm:$0x3]
    %v1678 = vunpack.c.l.s4 1983009808
    %v1679 = vunpack.c.0.s8 %v1678
    %v1680 = vlaneseq
    %v1681 = vshrl.u32 %v1680, 7
    %v1682 = vsub.s32 %v1679, %v1681
    %v1683 = vrot.slane %v1675, %v1682
    %1684 = vrot.lane.b32.xlu0 %v1683, 64
    %v1685 = vpop.permute.xlu0 %1684
    %1687 = vst.msk [vmem:[#allocation3 + $0x4c] sm:$0x3] %vm1116, %v1685
    %v1688 = vld [vmem:[#allocation2 + $0x9c] sm:$0x3]
    %1689 = vst.msk [vmem:[#allocation3 + $0x4e] sm:$0x3] %vm1102, %v1688
    %v1690 = vld [vmem:[#allocation2 + $0x9e] sm:$0x3]
    %v1693 = vunpack.c.l.s4 1983009808
    %v1694 = vunpack.c.0.s8 %v1693
    %v1695 = vlaneseq
    %v1696 = vshrl.u32 %v1695, 7
    %v1697 = vsub.s32 %v1694, %v1696
    %v1698 = vrot.slane %v1690, %v1697
    %1699 = vrot.lane.b32.xlu0 %v1698, 64
    %v1700 = vpop.permute.xlu0 %1699
    %1702 = vst.msk [vmem:[#allocation3 + $0x4e] sm:$0x3] %vm1116, %v1700
    %v1703 = vld [vmem:[#allocation2 + $0xa0] sm:$0x3]
    %1704 = vst.msk [vmem:[#allocation3 + $0x50] sm:$0x3] %vm1102, %v1703
    %v1705 = vld [vmem:[#allocation2 + $0xa2] sm:$0x3]
    %v1708 = vunpack.c.l.s4 1983009808
    %v1709 = vunpack.c.0.s8 %v1708
    %v1710 = vlaneseq
    %v1711 = vshrl.u32 %v1710, 7
    %v1712 = vsub.s32 %v1709, %v1711
    %v1713 = vrot.slane %v1705, %v1712
    %1714 = vrot.lane.b32.xlu0 %v1713, 64
    %v1715 = vpop.permute.xlu0 %1714
    %1717 = vst.msk [vmem:[#allocation3 + $0x50] sm:$0x3] %vm1116, %v1715
    %v1718 = vld [vmem:[#allocation2 + $0xa4] sm:$0x3]
    %1719 = vst.msk [vmem:[#allocation3 + $0x52] sm:$0x3] %vm1102, %v1718
    %v1720 = vld [vmem:[#allocation2 + $0xa6] sm:$0x3]
    %v1723 = vunpack.c.l.s4 1983009808
    %v1724 = vunpack.c.0.s8 %v1723
    %v1725 = vlaneseq
    %v1726 = vshrl.u32 %v1725, 7
    %v1727 = vsub.s32 %v1724, %v1726
    %v1728 = vrot.slane %v1720, %v1727
    %1729 = vrot.lane.b32.xlu0 %v1728, 64
    %v1730 = vpop.permute.xlu0 %1729
    %1732 = vst.msk [vmem:[#allocation3 + $0x52] sm:$0x3] %vm1116, %v1730
    %v1733 = vld [vmem:[#allocation2 + $0xa8] sm:$0x3]
    %1734 = vst.msk [vmem:[#allocation3 + $0x54] sm:$0x3] %vm1102, %v1733
    %v1735 = vld [vmem:[#allocation2 + $0xaa] sm:$0x3]
    %v1738 = vunpack.c.l.s4 1983009808
    %v1739 = vunpack.c.0.s8 %v1738
    %v1740 = vlaneseq
    %v1741 = vshrl.u32 %v1740, 7
    %v1742 = vsub.s32 %v1739, %v1741
    %v1743 = vrot.slane %v1735, %v1742
    %1744 = vrot.lane.b32.xlu0 %v1743, 64
    %v1745 = vpop.permute.xlu0 %1744
    %1747 = vst.msk [vmem:[#allocation3 + $0x54] sm:$0x3] %vm1116, %v1745
    %v1748 = vld [vmem:[#allocation2 + $0xac] sm:$0x3]
    %1749 = vst.msk [vmem:[#allocation3 + $0x56] sm:$0x3] %vm1102, %v1748
    %v1750 = vld [vmem:[#allocation2 + $0xae] sm:$0x3]
    %v1753 = vunpack.c.l.s4 1983009808
    %v1754 = vunpack.c.0.s8 %v1753
    %v1755 = vlaneseq
    %v1756 = vshrl.u32 %v1755, 7
    %v1757 = vsub.s32 %v1754, %v1756
    %v1758 = vrot.slane %v1750, %v1757
    %1759 = vrot.lane.b32.xlu0 %v1758, 64
    %v1760 = vpop.permute.xlu0 %1759
    %1762 = vst.msk [vmem:[#allocation3 + $0x56] sm:$0x3] %vm1116, %v1760
    %v1763 = vld [vmem:[#allocation2 + $0xb0] sm:$0x3]
    %1764 = vst.msk [vmem:[#allocation3 + $0x58] sm:$0x3] %vm1102, %v1763
    %v1765 = vld [vmem:[#allocation2 + $0xb2] sm:$0x3]
    %v1768 = vunpack.c.l.s4 1983009808
    %v1769 = vunpack.c.0.s8 %v1768
    %v1770 = vlaneseq
    %v1771 = vshrl.u32 %v1770, 7
    %v1772 = vsub.s32 %v1769, %v1771
    %v1773 = vrot.slane %v1765, %v1772
    %1774 = vrot.lane.b32.xlu0 %v1773, 64
    %v1775 = vpop.permute.xlu0 %1774
    %1777 = vst.msk [vmem:[#allocation3 + $0x58] sm:$0x3] %vm1116, %v1775
    %v1778 = vld [vmem:[#allocation2 + $0xb4] sm:$0x3]
    %1779 = vst.msk [vmem:[#allocation3 + $0x5a] sm:$0x3] %vm1102, %v1778
    %v1780 = vld [vmem:[#allocation2 + $0xb6] sm:$0x3]
    %v1783 = vunpack.c.l.s4 1983009808
    %v1784 = vunpack.c.0.s8 %v1783
    %v1785 = vlaneseq
    %v1786 = vshrl.u32 %v1785, 7
    %v1787 = vsub.s32 %v1784, %v1786
    %v1788 = vrot.slane %v1780, %v1787
    %1789 = vrot.lane.b32.xlu0 %v1788, 64
    %v1790 = vpop.permute.xlu0 %1789
    %1792 = vst.msk [vmem:[#allocation3 + $0x5a] sm:$0x3] %vm1116, %v1790
    %v1793 = vld [vmem:[#allocation2 + $0xb8] sm:$0x3]
    %1794 = vst.msk [vmem:[#allocation3 + $0x5c] sm:$0x3] %vm1102, %v1793
    %v1795 = vld [vmem:[#allocation2 + $0xba] sm:$0x3]
    %v1798 = vunpack.c.l.s4 1983009808
    %v1799 = vunpack.c.0.s8 %v1798
    %v1800 = vlaneseq
    %v1801 = vshrl.u32 %v1800, 7
    %v1802 = vsub.s32 %v1799, %v1801
    %v1803 = vrot.slane %v1795, %v1802
    %1804 = vrot.lane.b32.xlu0 %v1803, 64
    %v1805 = vpop.permute.xlu0 %1804
    %1807 = vst.msk [vmem:[#allocation3 + $0x5c] sm:$0x3] %vm1116, %v1805
    %v1808 = vld [vmem:[#allocation2 + $0xbc] sm:$0x3]
    %1809 = vst.msk [vmem:[#allocation3 + $0x5e] sm:$0x3] %vm1102, %v1808
    %v1810 = vld [vmem:[#allocation2 + $0xbe] sm:$0x3]
    %v1813 = vunpack.c.l.s4 1983009808
    %v1814 = vunpack.c.0.s8 %v1813
    %v1815 = vlaneseq
    %v1816 = vshrl.u32 %v1815, 7
    %v1817 = vsub.s32 %v1814, %v1816
    %v1818 = vrot.slane %v1810, %v1817
    %1819 = vrot.lane.b32.xlu0 %v1818, 64
    %v1820 = vpop.permute.xlu0 %1819
    %1822 = vst.msk [vmem:[#allocation3 + $0x5e] sm:$0x3] %vm1116, %v1820
    %v1823 = vld [vmem:[#allocation2 + $0xc0] sm:$0x3]
    %1824 = vst.msk [vmem:[#allocation3 + $0x60] sm:$0x3] %vm1102, %v1823
    %v1825 = vld [vmem:[#allocation2 + $0xc2] sm:$0x3]
    %v1828 = vunpack.c.l.s4 1983009808
    %v1829 = vunpack.c.0.s8 %v1828
    %v1830 = vlaneseq
    %v1831 = vshrl.u32 %v1830, 7
    %v1832 = vsub.s32 %v1829, %v1831
    %v1833 = vrot.slane %v1825, %v1832
    %1834 = vrot.lane.b32.xlu0 %v1833, 64
    %v1835 = vpop.permute.xlu0 %1834
    %1837 = vst.msk [vmem:[#allocation3 + $0x60] sm:$0x3] %vm1116, %v1835
    %v1838 = vld [vmem:[#allocation2 + $0xc4] sm:$0x3]
    %1839 = vst.msk [vmem:[#allocation3 + $0x62] sm:$0x3] %vm1102, %v1838
    %v1840 = vld [vmem:[#allocation2 + $0xc6] sm:$0x3]
    %v1843 = vunpack.c.l.s4 1983009808
    %v1844 = vunpack.c.0.s8 %v1843
    %v1845 = vlaneseq
    %v1846 = vshrl.u32 %v1845, 7
    %v1847 = vsub.s32 %v1844, %v1846
    %v1848 = vrot.slane %v1840, %v1847
    %1849 = vrot.lane.b32.xlu0 %v1848, 64
    %v1850 = vpop.permute.xlu0 %1849
    %1852 = vst.msk [vmem:[#allocation3 + $0x62] sm:$0x3] %vm1116, %v1850
    %s1853 = smul.u32 8, 4
    %s1854 = smul.u32 %s1853, 50
    %s1855 = sshll.u32 %s1854, 4
    %1856 = dma.done [#allocation5], %s1855
    %v1857 = vld [vmem:[#allocation3] sm:$0xff]
    %v1858 = vld [vmem:[#allocation3 + $0x8] sm:$0xff]
    %v1859 = vld [vmem:[#allocation3 + $0x10] sm:$0xff]
    %v1860 = vld [vmem:[#allocation3 + $0x18] sm:$0xff]
    %v1861 = vld [vmem:[#allocation3 + $0x20] sm:$0xff]
    %v1862 = vld [vmem:[#allocation3 + $0x28] sm:$0xff]
    %v1863 = vld [vmem:[#allocation3 + $0x30] sm:$0xff]
    %v1864 = vld [vmem:[#allocation3 + $0x38] sm:$0xff]
    %v1865 = vld [vmem:[#allocation3 + $0x40] sm:$0xff]
    %v1866 = vld [vmem:[#allocation3 + $0x48] sm:$0xff]
    %v1867 = vld [vmem:[#allocation3 + $0x50] sm:$0xff]
    %v1868 = vld [vmem:[#allocation3 + $0x58] sm:$0xff]
    %v1869 = vld [vmem:[#allocation3 + $0x60] sm:$0xf]
    %v1870 = vld [vmem:[#allocation4] sm:$0xff]
    %v1871 = vld [vmem:[#allocation4 + $0x8] sm:$0xff]
    %v1872 = vld [vmem:[#allocation4 + $0x10] sm:$0xff]
    %v1873 = vld [vmem:[#allocation4 + $0x18] sm:$0xff]
    %v1874 = vld [vmem:[#allocation4 + $0x20] sm:$0xff]
    %v1875 = vld [vmem:[#allocation4 + $0x28] sm:$0xff]
    %v1876 = vld [vmem:[#allocation4 + $0x30] sm:$0xff]
    %v1877 = vld [vmem:[#allocation4 + $0x38] sm:$0xff]
    %v1878 = vld [vmem:[#allocation4 + $0x40] sm:$0xff]
    %v1879 = vld [vmem:[#allocation4 + $0x48] sm:$0xff]
    %v1880 = vld [vmem:[#allocation4 + $0x50] sm:$0xff]
    %v1881 = vld [vmem:[#allocation4 + $0x58] sm:$0xff]
    %v1882 = vld [vmem:[#allocation4 + $0x60] sm:$0xff]
    %v1883 = vld [vmem:[#allocation4 + $0x68] sm:$0xff]
    %v1884 = vld [vmem:[#allocation4 + $0x70] sm:$0xff]
    %v1885 = vld [vmem:[#allocation4 + $0x78] sm:$0xff]
    %v1886 = vld [vmem:[#allocation4 + $0x80] sm:$0xff]
    %v1887 = vld [vmem:[#allocation4 + $0x88] sm:$0xff]
    %v1888 = vld [vmem:[#allocation4 + $0x90] sm:$0xff]
    %v1889 = vld [vmem:[#allocation4 + $0x98] sm:$0xff]
    %v1890 = vld [vmem:[#allocation4 + $0xa0] sm:$0xff]
    %v1891 = vld [vmem:[#allocation4 + $0xa8] sm:$0xff]
    %v1892 = vld [vmem:[#allocation4 + $0xb0] sm:$0xff]
    %v1893 = vld [vmem:[#allocation4 + $0xb8] sm:$0xff]
    %v1894 = vld [vmem:[#allocation4 + $0xc0] sm:$0xff]
    %v1895 = vld [vmem:[#allocation4 + $0xc8] sm:$0xff]
    %v1896 = vld [vmem:[#allocation4 + $0xd0] sm:$0xff]
    %v1897 = vld [vmem:[#allocation4 + $0xd8] sm:$0xff]
    %v1898 = vld [vmem:[#allocation4 + $0xe0] sm:$0xff]
    %v1899 = vld [vmem:[#allocation4 + $0xe8] sm:$0xff]
    %v1900 = vld [vmem:[#allocation4 + $0xf0] sm:$0xff]
    %v1901 = vld [vmem:[#allocation4 + $0xf8] sm:$0xff]
    %v1902 = vld [vmem:[#allocation4 + $0x100] sm:$0xff]
    %v1903 = vld [vmem:[#allocation4 + $0x108] sm:$0xff]
    %v1904 = vld [vmem:[#allocation4 + $0x110] sm:$0xff]
    %v1905 = vld [vmem:[#allocation4 + $0x118] sm:$0xff]
    %v1906 = vld [vmem:[#allocation4 + $0x120] sm:$0xff]
    %v1907 = vld [vmem:[#allocation4 + $0x128] sm:$0xff]
    %v1908 = vld [vmem:[#allocation4 + $0x130] sm:$0xff]
    %v1909 = vld [vmem:[#allocation4 + $0x138] sm:$0xff]
    %v1910 = vld [vmem:[#allocation4 + $0x140] sm:$0xff]
    %v1911 = vld [vmem:[#allocation4 + $0x148] sm:$0xff]
    %v1912 = vld [vmem:[#allocation4 + $0x150] sm:$0xff]
    %v1913 = vld [vmem:[#allocation4 + $0x158] sm:$0xff]
    %v1914 = vld [vmem:[#allocation4 + $0x160] sm:$0xff]
    %v1915 = vld [vmem:[#allocation4 + $0x168] sm:$0xff]
    %v1916 = vld [vmem:[#allocation4 + $0x170] sm:$0xff]
    %v1917 = vld [vmem:[#allocation4 + $0x178] sm:$0xff]
    %v1918 = vld [vmem:[#allocation4 + $0x180] sm:$0xff]
    %v1919 = vld [vmem:[#allocation4 + $0x188] sm:$0xff]
    %v1920 = vld [vmem:[#allocation4 + $0x190] sm:$0xff]
    %v1921 = vld [vmem:[#allocation4 + $0x198] sm:$0xff]
    %v1922 = vld [vmem:[#allocation4 + $0x1a0] sm:$0xff]
    %v1923 = vld [vmem:[#allocation4 + $0x1a8] sm:$0xff]
    %v1924 = vld [vmem:[#allocation4 + $0x1b0] sm:$0xff]
    %v1925 = vld [vmem:[#allocation4 + $0x1b8] sm:$0xff]
    %v1926 = vld [vmem:[#allocation4 + $0x1c0] sm:$0xff]
    %v1927 = vld [vmem:[#allocation4 + $0x1c8] sm:$0xff]
    %v1928 = vld [vmem:[#allocation4 + $0x1d0] sm:$0xff]
    %v1929 = vld [vmem:[#allocation4 + $0x1d8] sm:$0xff]
    %v1930 = vld [vmem:[#allocation4 + $0x1e0] sm:$0xff]
    %v1931 = vld [vmem:[#allocation4 + $0x1e8] sm:$0xff]
    %v1932 = vld [vmem:[#allocation4 + $0x1f0] sm:$0xff]
    %v1933 = vld [vmem:[#allocation4 + $0x1f8] sm:$0xff]
    %v1934 = vld [vmem:[#allocation4 + $0x200] sm:$0xff]
    %v1935 = vld [vmem:[#allocation4 + $0x208] sm:$0xff]
    %v1936 = vld [vmem:[#allocation4 + $0x210] sm:$0xff]
    %v1937 = vld [vmem:[#allocation4 + $0x218] sm:$0xff]
    %v1938 = vld [vmem:[#allocation4 + $0x220] sm:$0xff]
    %v1939 = vld [vmem:[#allocation4 + $0x228] sm:$0xff]
    %v1940 = vld [vmem:[#allocation4 + $0x230] sm:$0xff]
    %v1941 = vld [vmem:[#allocation4 + $0x238] sm:$0xff]
    %v1942 = vld [vmem:[#allocation4 + $0x240] sm:$0xff]
    %v1943 = vld [vmem:[#allocation4 + $0x248] sm:$0xff]
    %v1944 = vld [vmem:[#allocation4 + $0x250] sm:$0xff]
    %v1945 = vld [vmem:[#allocation4 + $0x258] sm:$0xff]
    %v1946 = vld [vmem:[#allocation4 + $0x260] sm:$0xff]
    %v1947 = vld [vmem:[#allocation4 + $0x268] sm:$0xff]
    %v1948 = vld [vmem:[#allocation4 + $0x270] sm:$0xff]
    %v1949 = vld [vmem:[#allocation4 + $0x278] sm:$0xff]
    %v1950 = vld [vmem:[#allocation4 + $0x280] sm:$0xff]
    %v1951 = vld [vmem:[#allocation4 + $0x288] sm:$0xff]
    %v1952 = vld [vmem:[#allocation4 + $0x290] sm:$0xff]
    %v1953 = vld [vmem:[#allocation4 + $0x298] sm:$0xff]
    %v1954 = vld [vmem:[#allocation4 + $0x2a0] sm:$0xff]
    %v1955 = vld [vmem:[#allocation4 + $0x2a8] sm:$0xff]
    %v1956 = vld [vmem:[#allocation4 + $0x2b0] sm:$0xff]
    %v1957 = vld [vmem:[#allocation4 + $0x2b8] sm:$0xff]
    %v1958 = vld [vmem:[#allocation4 + $0x2c0] sm:$0xff]
    %v1959 = vld [vmem:[#allocation4 + $0x2c8] sm:$0xff]
    %v1960 = vld [vmem:[#allocation4 + $0x2d0] sm:$0xff]
    %v1961 = vld [vmem:[#allocation4 + $0x2d8] sm:$0xff]
    %v1962 = vld [vmem:[#allocation4 + $0x2e0] sm:$0xff]
    %v1963 = vld [vmem:[#allocation4 + $0x2e8] sm:$0xff]
    %v1964 = vld [vmem:[#allocation4 + $0x2f0] sm:$0xff]
    %v1965 = vld [vmem:[#allocation4 + $0x2f8] sm:$0xff]
    %v1966 = vld [vmem:[#allocation4 + $0x300] sm:$0xff]
    %v1967 = vld [vmem:[#allocation4 + $0x308] sm:$0xff]
    %v1968 = vld [vmem:[#allocation4 + $0x310] sm:$0xff]
    %v1969 = vld [vmem:[#allocation4 + $0x318] sm:$0xff]
    %v1970 = vld [vmem:[#allocation4 + $0x320] sm:$0xff]
    %v1971 = vld [vmem:[#allocation4 + $0x328] sm:$0xff]
    %v1972 = vld [vmem:[#allocation4 + $0x330] sm:$0xff]
    %v1973 = vld [vmem:[#allocation4 + $0x338] sm:$0xff]
    %v1974 = vld [vmem:[#allocation4 + $0x340] sm:$0xff]
    %v1975 = vld [vmem:[#allocation4 + $0x348] sm:$0xff]
    %v1976 = vld [vmem:[#allocation4 + $0x350] sm:$0xff]
    %v1977 = vld [vmem:[#allocation4 + $0x358] sm:$0xff]
    %v1978 = vld [vmem:[#allocation4 + $0x360] sm:$0xff]
    %v1979 = vld [vmem:[#allocation4 + $0x368] sm:$0xff]
    %v1980 = vld [vmem:[#allocation4 + $0x370] sm:$0xff]
    %v1981 = vld [vmem:[#allocation4 + $0x378] sm:$0xff]
    %v1982 = vld [vmem:[#allocation4 + $0x380] sm:$0xff]
    %v1983 = vld [vmem:[#allocation4 + $0x388] sm:$0xff]
    %v1984 = vld [vmem:[#allocation4 + $0x390] sm:$0xff]
    %v1985 = vld [vmem:[#allocation4 + $0x398] sm:$0xff]
    %v1986 = vld [vmem:[#allocation4 + $0x3a0] sm:$0xff]
    %v1987 = vld [vmem:[#allocation4 + $0x3a8] sm:$0xff]
    %v1988 = vld [vmem:[#allocation4 + $0x3b0] sm:$0xff]
    %v1989 = vld [vmem:[#allocation4 + $0x3b8] sm:$0xff]
    %v1990 = vld [vmem:[#allocation4 + $0x3c0] sm:$0xff]
    %v1991 = vld [vmem:[#allocation4 + $0x3c8] sm:$0xff]
    %v1992 = vld [vmem:[#allocation4 + $0x3d0] sm:$0xff]
    %v1993 = vld [vmem:[#allocation4 + $0x3d8] sm:$0xff]
    %v1994 = vld [vmem:[#allocation4 + $0x3e0] sm:$0xff]
    %v1995 = vld [vmem:[#allocation4 + $0x3e8] sm:$0xff]
    %v1996 = vld [vmem:[#allocation4 + $0x3f0] sm:$0xff]
    %v1997 = vld [vmem:[#allocation4 + $0x3f8] sm:$0xff]
    %v1998 = vld [vmem:[#allocation4 + $0x400] sm:$0xff]
    %v1999 = vld [vmem:[#allocation4 + $0x408] sm:$0xff]
    %v2000 = vld [vmem:[#allocation4 + $0x410] sm:$0xff]
    %v2001 = vld [vmem:[#allocation4 + $0x418] sm:$0xff]
    %v2002 = vld [vmem:[#allocation4 + $0x420] sm:$0xff]
    %v2003 = vld [vmem:[#allocation4 + $0x428] sm:$0xff]
    %v2004 = vld [vmem:[#allocation4 + $0x430] sm:$0xff]
    %v2005 = vld [vmem:[#allocation4 + $0x438] sm:$0xff]
    %v2006 = vld [vmem:[#allocation4 + $0x440] sm:$0xff]
    %v2007 = vld [vmem:[#allocation4 + $0x448] sm:$0xff]
    %v2008 = vld [vmem:[#allocation4 + $0x450] sm:$0xff]
    %v2009 = vld [vmem:[#allocation4 + $0x458] sm:$0xff]
    %v2010 = vld [vmem:[#allocation4 + $0x460] sm:$0xff]
    %v2011 = vld [vmem:[#allocation4 + $0x468] sm:$0xff]
    %v2012 = vld [vmem:[#allocation4 + $0x470] sm:$0xff]
    %v2013 = vld [vmem:[#allocation4 + $0x478] sm:$0xff]
    %v2014 = vld [vmem:[#allocation4 + $0x480] sm:$0xff]
    %v2015 = vld [vmem:[#allocation4 + $0x488] sm:$0xff]
    %v2016 = vld [vmem:[#allocation4 + $0x490] sm:$0xff]
    %v2017 = vld [vmem:[#allocation4 + $0x498] sm:$0xff]
    %v2018 = vld [vmem:[#allocation4 + $0x4a0] sm:$0xff]
    %v2019 = vld [vmem:[#allocation4 + $0x4a8] sm:$0xff]
    %v2020 = vld [vmem:[#allocation4 + $0x4b0] sm:$0xff]
    %v2021 = vld [vmem:[#allocation4 + $0x4b8] sm:$0xff]
    %v2022 = vld [vmem:[#allocation4 + $0x4c0] sm:$0xff]
    %v2023 = vld [vmem:[#allocation4 + $0x4c8] sm:$0xff]
    %v2024 = vld [vmem:[#allocation4 + $0x4d0] sm:$0xff]
    %v2025 = vld [vmem:[#allocation4 + $0x4d8] sm:$0xff]
    %v2026 = vld [vmem:[#allocation4 + $0x4e0] sm:$0xff]
    %v2027 = vld [vmem:[#allocation4 + $0x4e8] sm:$0xff]
    %v2028 = vld [vmem:[#allocation4 + $0x4f0] sm:$0xff]
    %v2029 = vld [vmem:[#allocation4 + $0x4f8] sm:$0xff]
    %v2030 = vld [vmem:[#allocation4 + $0x500] sm:$0xff]
    %v2031 = vld [vmem:[#allocation4 + $0x508] sm:$0xff]
    %v2032 = vld [vmem:[#allocation4 + $0x510] sm:$0xff]
    %v2033 = vld [vmem:[#allocation4 + $0x518] sm:$0xff]
    %v2034 = vld [vmem:[#allocation4 + $0x520] sm:$0xff]
    %v2035 = vld [vmem:[#allocation4 + $0x528] sm:$0xff]
    %v2036 = vld [vmem:[#allocation4 + $0x530] sm:$0xff]
    %v2037 = vld [vmem:[#allocation4 + $0x538] sm:$0xff]
    %v2038 = vld [vmem:[#allocation4 + $0x540] sm:$0xff]
    %v2039 = vld [vmem:[#allocation4 + $0x548] sm:$0xff]
    %v2040 = vld [vmem:[#allocation4 + $0x550] sm:$0xff]
    %v2041 = vld [vmem:[#allocation4 + $0x558] sm:$0xff]
    %v2042 = vld [vmem:[#allocation4 + $0x560] sm:$0xff]
    %v2043 = vld [vmem:[#allocation4 + $0x568] sm:$0xff]
    %v2044 = vld [vmem:[#allocation4 + $0x570] sm:$0xff]
    %v2045 = vld [vmem:[#allocation4 + $0x578] sm:$0xff]
    %v2046 = vld [vmem:[#allocation4 + $0x580] sm:$0xff]
    %v2047 = vld [vmem:[#allocation4 + $0x588] sm:$0xff]
    %v2048 = vld [vmem:[#allocation4 + $0x590] sm:$0xff]
    %v2049 = vld [vmem:[#allocation4 + $0x598] sm:$0xff]
    %v2050 = vld [vmem:[#allocation4 + $0x5a0] sm:$0xff]
    %v2051 = vld [vmem:[#allocation4 + $0x5a8] sm:$0xff]
    %v2052 = vld [vmem:[#allocation4 + $0x5b0] sm:$0xff]
    %v2053 = vld [vmem:[#allocation4 + $0x5b8] sm:$0xff]
    %v2054 = vld [vmem:[#allocation4 + $0x5c0] sm:$0xff]
    %v2055 = vld [vmem:[#allocation4 + $0x5c8] sm:$0xff]
    %v2056 = vld [vmem:[#allocation4 + $0x5d0] sm:$0xff]
    %v2057 = vld [vmem:[#allocation4 + $0x5d8] sm:$0xff]
    %v2058 = vld [vmem:[#allocation4 + $0x5e0] sm:$0xff]
    %v2059 = vld [vmem:[#allocation4 + $0x5e8] sm:$0xff]
    %v2060 = vld [vmem:[#allocation4 + $0x5f0] sm:$0xff]
    %v2061 = vld [vmem:[#allocation4 + $0x5f8] sm:$0xff]
    %v2062 = vld [vmem:[#allocation4 + $0x600] sm:$0xff]
    %v2063 = vld [vmem:[#allocation4 + $0x608] sm:$0xff]
    %v2064 = vld [vmem:[#allocation4 + $0x610] sm:$0xff]
    %v2065 = vld [vmem:[#allocation4 + $0x618] sm:$0xff]
    %v2066 = vld [vmem:[#allocation4 + $0x620] sm:$0xff]
    %v2067 = vld [vmem:[#allocation4 + $0x628] sm:$0xff]
    %v2068 = vld [vmem:[#allocation4 + $0x630] sm:$0xff]
    %v2069 = vld [vmem:[#allocation4 + $0x638] sm:$0xff]
    %v2070 = vld [vmem:[%s4] sm:$0x1]
    %v2072 = vlaneseq
    %v2073 = vshrl.u32 %v2072, 7
    %v2074 = vsub.s32 0, %v2073
    %v2075 = vrot.slane %v2070, %v2074
    %v2090 = vcombine.high %v1857, %v1857
    %v2092 = vunpack.c.l.s4 1983009808
    %v2093 = vunpack.c.0.s8 %v2092
    %v2094 = vlaneseq
    %v2095 = vshrl.u32 %v2094, 7
    %v2096 = vsub.s32 %v2093, %v2095
    %v2097 = vrot.slane %v1857, %v2096
    %v2099 = vunpack.c.l.s4 1983009808
    %v2100 = vunpack.c.0.s8 %v2099
    %v2101 = vlaneseq
    %v2102 = vshrl.u32 %v2101, 7
    %v2103 = vsub.s32 %v2100, %v2102
    %v2104 = vrot.slane %v2090, %v2103
    %v2105 = vcombine.high %v2097, %v2097
    %v2106 = vcombine.high %v2104, %v2104
    %v2107 = vcombine.high %v1858, %v1858
    %v2109 = vunpack.c.l.s4 1983009808
    %v2110 = vunpack.c.0.s8 %v2109
    %v2111 = vlaneseq
    %v2112 = vshrl.u32 %v2111, 7
    %v2113 = vsub.s32 %v2110, %v2112
    %v2114 = vrot.slane %v1858, %v2113
    %v2116 = vunpack.c.l.s4 1983009808
    %v2117 = vunpack.c.0.s8 %v2116
    %v2118 = vlaneseq
    %v2119 = vshrl.u32 %v2118, 7
    %v2120 = vsub.s32 %v2117, %v2119
    %v2121 = vrot.slane %v2107, %v2120
    %v2122 = vcombine.high %v2114, %v2114
    %v2123 = vcombine.high %v2121, %v2121
    %v2124 = vcombine.high %v1859, %v1859
    %v2126 = vunpack.c.l.s4 1983009808
    %v2127 = vunpack.c.0.s8 %v2126
    %v2128 = vlaneseq
    %v2129 = vshrl.u32 %v2128, 7
    %v2130 = vsub.s32 %v2127, %v2129
    %v2131 = vrot.slane %v1859, %v2130
    %v2133 = vunpack.c.l.s4 1983009808
    %v2134 = vunpack.c.0.s8 %v2133
    %v2135 = vlaneseq
    %v2136 = vshrl.u32 %v2135, 7
    %v2137 = vsub.s32 %v2134, %v2136
    %v2138 = vrot.slane %v2124, %v2137
    %v2139 = vcombine.high %v2131, %v2131
    %v2140 = vcombine.high %v2138, %v2138
    %v2141 = vcombine.high %v1860, %v1860
    %v2143 = vunpack.c.l.s4 1983009808
    %v2144 = vunpack.c.0.s8 %v2143
    %v2145 = vlaneseq
    %v2146 = vshrl.u32 %v2145, 7
    %v2147 = vsub.s32 %v2144, %v2146
    %v2148 = vrot.slane %v1860, %v2147
    %v2150 = vunpack.c.l.s4 1983009808
    %v2151 = vunpack.c.0.s8 %v2150
    %v2152 = vlaneseq
    %v2153 = vshrl.u32 %v2152, 7
    %v2154 = vsub.s32 %v2151, %v2153
    %v2155 = vrot.slane %v2141, %v2154
    %v2156 = vcombine.high %v2148, %v2148
    %v2157 = vcombine.high %v2155, %v2155
    %v2158 = vcombine.high %v1861, %v1861
    %v2160 = vunpack.c.l.s4 1983009808
    %v2161 = vunpack.c.0.s8 %v2160
    %v2162 = vlaneseq
    %v2163 = vshrl.u32 %v2162, 7
    %v2164 = vsub.s32 %v2161, %v2163
    %v2165 = vrot.slane %v1861, %v2164
    %v2167 = vunpack.c.l.s4 1983009808
    %v2168 = vunpack.c.0.s8 %v2167
    %v2169 = vlaneseq
    %v2170 = vshrl.u32 %v2169, 7
    %v2171 = vsub.s32 %v2168, %v2170
    %v2172 = vrot.slane %v2158, %v2171
    %v2173 = vcombine.high %v2165, %v2165
    %v2174 = vcombine.high %v2172, %v2172
    %v2175 = vcombine.high %v1862, %v1862
    %v2177 = vunpack.c.l.s4 1983009808
    %v2178 = vunpack.c.0.s8 %v2177
    %v2179 = vlaneseq
    %v2180 = vshrl.u32 %v2179, 7
    %v2181 = vsub.s32 %v2178, %v2180
    %v2182 = vrot.slane %v1862, %v2181
    %v2184 = vunpack.c.l.s4 1983009808
    %v2185 = vunpack.c.0.s8 %v2184
    %v2186 = vlaneseq
    %v2187 = vshrl.u32 %v2186, 7
    %v2188 = vsub.s32 %v2185, %v2187
    %v2189 = vrot.slane %v2175, %v2188
    %v2190 = vcombine.high %v2182, %v2182
    %v2191 = vcombine.high %v2189, %v2189
    %v2192 = vcombine.high %v1863, %v1863
    %v2194 = vunpack.c.l.s4 1983009808
    %v2195 = vunpack.c.0.s8 %v2194
    %v2196 = vlaneseq
    %v2197 = vshrl.u32 %v2196, 7
    %v2198 = vsub.s32 %v2195, %v2197
    %v2199 = vrot.slane %v1863, %v2198
    %v2201 = vunpack.c.l.s4 1983009808
    %v2202 = vunpack.c.0.s8 %v2201
    %v2203 = vlaneseq
    %v2204 = vshrl.u32 %v2203, 7
    %v2205 = vsub.s32 %v2202, %v2204
    %v2206 = vrot.slane %v2192, %v2205
    %v2207 = vcombine.high %v2199, %v2199
    %v2208 = vcombine.high %v2206, %v2206
    %v2209 = vcombine.high %v1864, %v1864
    %v2211 = vunpack.c.l.s4 1983009808
    %v2212 = vunpack.c.0.s8 %v2211
    %v2213 = vlaneseq
    %v2214 = vshrl.u32 %v2213, 7
    %v2215 = vsub.s32 %v2212, %v2214
    %v2216 = vrot.slane %v1864, %v2215
    %v2218 = vunpack.c.l.s4 1983009808
    %v2219 = vunpack.c.0.s8 %v2218
    %v2220 = vlaneseq
    %v2221 = vshrl.u32 %v2220, 7
    %v2222 = vsub.s32 %v2219, %v2221
    %v2223 = vrot.slane %v2209, %v2222
    %v2224 = vcombine.high %v2216, %v2216
    %v2225 = vcombine.high %v2223, %v2223
    %v2226 = vcombine.high %v1865, %v1865
    %v2228 = vunpack.c.l.s4 1983009808
    %v2229 = vunpack.c.0.s8 %v2228
    %v2230 = vlaneseq
    %v2231 = vshrl.u32 %v2230, 7
    %v2232 = vsub.s32 %v2229, %v2231
    %v2233 = vrot.slane %v1865, %v2232
    %v2235 = vunpack.c.l.s4 1983009808
    %v2236 = vunpack.c.0.s8 %v2235
    %v2237 = vlaneseq
    %v2238 = vshrl.u32 %v2237, 7
    %v2239 = vsub.s32 %v2236, %v2238
    %v2240 = vrot.slane %v2226, %v2239
    %v2241 = vcombine.high %v2233, %v2233
    %v2242 = vcombine.high %v2240, %v2240
    %v2243 = vcombine.high %v1866, %v1866
    %v2245 = vunpack.c.l.s4 1983009808
    %v2246 = vunpack.c.0.s8 %v2245
    %v2247 = vlaneseq
    %v2248 = vshrl.u32 %v2247, 7
    %v2249 = vsub.s32 %v2246, %v2248
    %v2250 = vrot.slane %v1866, %v2249
    %v2252 = vunpack.c.l.s4 1983009808
    %v2253 = vunpack.c.0.s8 %v2252
    %v2254 = vlaneseq
    %v2255 = vshrl.u32 %v2254, 7
    %v2256 = vsub.s32 %v2253, %v2255
    %v2257 = vrot.slane %v2243, %v2256
    %v2258 = vcombine.high %v2250, %v2250
    %v2259 = vcombine.high %v2257, %v2257
    %v2260 = vcombine.high %v1867, %v1867
    %v2262 = vunpack.c.l.s4 1983009808
    %v2263 = vunpack.c.0.s8 %v2262
    %v2264 = vlaneseq
    %v2265 = vshrl.u32 %v2264, 7
    %v2266 = vsub.s32 %v2263, %v2265
    %v2267 = vrot.slane %v1867, %v2266
    %v2269 = vunpack.c.l.s4 1983009808
    %v2270 = vunpack.c.0.s8 %v2269
    %v2271 = vlaneseq
    %v2272 = vshrl.u32 %v2271, 7
    %v2273 = vsub.s32 %v2270, %v2272
    %v2274 = vrot.slane %v2260, %v2273
    %v2275 = vcombine.high %v2267, %v2267
    %v2276 = vcombine.high %v2274, %v2274
    %v2277 = vcombine.high %v1868, %v1868
    %v2279 = vunpack.c.l.s4 1983009808
    %v2280 = vunpack.c.0.s8 %v2279
    %v2281 = vlaneseq
    %v2282 = vshrl.u32 %v2281, 7
    %v2283 = vsub.s32 %v2280, %v2282
    %v2284 = vrot.slane %v1868, %v2283
    %v2286 = vunpack.c.l.s4 1983009808
    %v2287 = vunpack.c.0.s8 %v2286
    %v2288 = vlaneseq
    %v2289 = vshrl.u32 %v2288, 7
    %v2290 = vsub.s32 %v2287, %v2289
    %v2291 = vrot.slane %v2277, %v2290
    %v2292 = vcombine.high %v2284, %v2284
    %v2293 = vcombine.high %v2291, %v2291
    %v2295 = vunpack.c.l.s4 1983009808
    %v2296 = vunpack.c.0.s8 %v2295
    %v2297 = vlaneseq
    %v2298 = vshrl.u32 %v2297, 7
    %v2299 = vsub.s32 %v2296, %v2298
    %v2300 = vrot.slane %v1869, %v2299
    %v2301 = vcombine.high %v2300, %v2300
    %2352 = vmatprep.subr.mxu0 0.0
    %2353 = vmatpush1.xpose.msra.mxu0 0.0
    %2354 = vmatprep.subr.mxu0 0.0
    %2355 = vmatpush1.xpose.msra.mxu0 0.0
    %2356 = vmatprep.subr.mxu0 0.0
    %2357 = vmatpush1.xpose.msra.mxu0 0.0
    %2358 = vmatprep.subr.mxu0 0.0
    %2359 = vmatpush1.xpose.msra.mxu0 0.0
    %2360 = vmatprep.subr.mxu0 0.0
    %2361 = vmatpush1.xpose.msra.mxu0 0.0
    %2362 = vmatprep.subr.mxu0 0.0
    %2363 = vmatpush1.xpose.msra.mxu0 0.0
    %2364 = vmatprep.subr.mxu0 0.0
    %2365 = vmatpush1.xpose.msra.mxu0 0.0
    %2366 = vmatprep.subr.mxu0 0.0
    %2367 = vmatpush1.xpose.msra.mxu0 0.0
    %2368 = vmatprep.subr.mxu0 0.0
    %2369 = vmatpush1.xpose.msra.mxu0 0.0
    %2370 = vmatprep.subr.mxu0 0.0
    %2371 = vmatpush1.xpose.msra.mxu0 0.0
    %2372 = vmatprep.subr.mxu0 0.0
    %2373 = vmatpush1.xpose.msra.mxu0 0.0
    %2374 = vmatprep.subr.mxu0 0.0
    %2375 = vmatpush1.xpose.msra.mxu0 0.0
    %2376 = vmatprep.subr.mxu0 %v2021
    %2377 = vmatpush1.xpose.msra.mxu0 %v2020
    %2378 = vmatprep.subr.mxu0 %v1971
    %2379 = vmatpush1.xpose.msra.mxu0 %v1970
    %2380 = vmatprep.subr.mxu0 %v1921
    %2381 = vmatpush1.xpose.msra.mxu0 %v1920
    %2382 = vmatprep.subr.mxu0 %v1871
    %2383 = vmatpush1.xpose.msra.mxu0 %v1870
    %2384 = vmatprep.subr.mxu0 0.0
    %2385 = vmatpush2.xpose.msra.mxu0 0.0
    %2386 = vmatprep.subr.mxu0 0.0
    %2387 = vmatpush2.xpose.msra.mxu0 0.0
    %2388 = vmatprep.subr.mxu0 0.0
    %2389 = vmatpush2.xpose.msra.mxu0 0.0
    %2390 = vmatprep.subr.mxu0 0.0
    %2391 = vmatpush2.xpose.msra.mxu0 0.0
    %2392 = vmatprep.subr.mxu0 0.0
    %2393 = vmatpush2.xpose.msra.mxu0 0.0
    %2394 = vmatprep.subr.mxu0 0.0
    %2395 = vmatpush2.xpose.msra.mxu0 0.0
    %2396 = vmatprep.subr.mxu0 0.0
    %2397 = vmatpush2.xpose.msra.mxu0 0.0
    %2398 = vmatprep.subr.mxu0 0.0
    %2399 = vmatpush2.xpose.msra.mxu0 0.0
    %2400 = vmatprep.subr.mxu0 0.0
    %2401 = vmatpush2.xpose.msra.mxu0 0.0
    %2402 = vmatprep.subr.mxu0 0.0
    %2403 = vmatpush2.xpose.msra.mxu0 0.0
    %2404 = vmatprep.subr.mxu0 0.0
    %2405 = vmatpush2.xpose.msra.mxu0 0.0
    %2406 = vmatprep.subr.mxu0 0.0
    %2407 = vmatpush2.xpose.msra.mxu0 0.0
    %2408 = vmatprep.subr.mxu0 0.0
    %2409 = vmatpush2.xpose.msra.mxu0 0.0
    %2410 = vmatprep.subr.mxu0 0.0
    %2411 = vmatpush2.xpose.msra.mxu0 0.0
    %2412 = vmatprep.subr.mxu0 0.0
    %2413 = vmatpush2.xpose.msra.mxu0 0.0
    %2414 = vmatprep.subr.mxu0 0.0
    %2415 = vmatpush2.xpose.msra.mxu0 0.0
    %2416 = vmatprep.mubr.f32.mxu0 %v2105
    %2417 = vmatmul.mubr.f32.gmra.mxu0 %v2097
    %v2418 = vpop.f32.mrf.mxu0
    %v2419 = vadd.f32 %v2075, %v2418
    %v2420 = vpop.f32.mrf.mxu0
    %2421 = vdwg.mxu0
    %2422 = vmatprep.subr.mxu0 0.0
    %2423 = vmatpush1.xpose.msra.mxu0 0.0
    %2424 = vmatprep.subr.mxu0 0.0
    %2425 = vmatpush1.xpose.msra.mxu0 0.0
    %2426 = vmatprep.subr.mxu0 0.0
    %2427 = vmatpush1.xpose.msra.mxu0 0.0
    %2428 = vmatprep.subr.mxu0 0.0
    %2429 = vmatpush1.xpose.msra.mxu0 0.0
    %2430 = vmatprep.subr.mxu0 0.0
    %2431 = vmatpush1.xpose.msra.mxu0 0.0
    %2432 = vmatprep.subr.mxu0 0.0
    %2433 = vmatpush1.xpose.msra.mxu0 0.0
    %2434 = vmatprep.subr.mxu0 0.0
    %2435 = vmatpush1.xpose.msra.mxu0 0.0
    %2436 = vmatprep.subr.mxu0 0.0
    %2437 = vmatpush1.xpose.msra.mxu0 0.0
    %2438 = vmatprep.subr.mxu0 0.0
    %2439 = vmatpush1.xpose.msra.mxu0 0.0
    %2440 = vmatprep.subr.mxu0 0.0
    %2441 = vmatpush1.xpose.msra.mxu0 0.0
    %2442 = vmatprep.subr.mxu0 0.0
    %2443 = vmatpush1.xpose.msra.mxu0 0.0
    %2444 = vmatprep.subr.mxu0 0.0
    %2445 = vmatpush1.xpose.msra.mxu0 0.0
    %2446 = vmatprep.subr.mxu0 %v2023
    %2447 = vmatpush1.xpose.msra.mxu0 %v2022
    %2448 = vmatprep.subr.mxu0 %v1973
    %2449 = vmatpush1.xpose.msra.mxu0 %v1972
    %2450 = vmatprep.subr.mxu0 %v1923
    %2451 = vmatpush1.xpose.msra.mxu0 %v1922
    %2452 = vmatprep.subr.mxu0 %v1873
    %2453 = vmatpush1.xpose.msra.mxu0 %v1872
    %2454 = vmatprep.subr.mxu0 0.0
    %2455 = vmatpush2.xpose.msra.mxu0 0.0
    %2456 = vmatprep.subr.mxu0 0.0
    %2457 = vmatpush2.xpose.msra.mxu0 0.0
    %2458 = vmatprep.subr.mxu0 0.0
    %2459 = vmatpush2.xpose.msra.mxu0 0.0
    %2460 = vmatprep.subr.mxu0 0.0
    %2461 = vmatpush2.xpose.msra.mxu0 0.0
    %2462 = vmatprep.subr.mxu0 0.0
    %2463 = vmatpush2.xpose.msra.mxu0 0.0
    %2464 = vmatprep.subr.mxu0 0.0
    %2465 = vmatpush2.xpose.msra.mxu0 0.0
    %2466 = vmatprep.subr.mxu0 0.0
    %2467 = vmatpush2.xpose.msra.mxu0 0.0
    %2468 = vmatprep.subr.mxu0 0.0
    %2469 = vmatpush2.xpose.msra.mxu0 0.0
    %2470 = vmatprep.subr.mxu0 0.0
    %2471 = vmatpush2.xpose.msra.mxu0 0.0
    %2472 = vmatprep.subr.mxu0 0.0
    %2473 = vmatpush2.xpose.msra.mxu0 0.0
    %2474 = vmatprep.subr.mxu0 0.0
    %2475 = vmatpush2.xpose.msra.mxu0 0.0
    %2476 = vmatprep.subr.mxu0 0.0
    %2477 = vmatpush2.xpose.msra.mxu0 0.0
    %2478 = vmatprep.subr.mxu0 0.0
    %2479 = vmatpush2.xpose.msra.mxu0 0.0
    %2480 = vmatprep.subr.mxu0 0.0
    %2481 = vmatpush2.xpose.msra.mxu0 0.0
    %2482 = vmatprep.subr.mxu0 0.0
    %2483 = vmatpush2.xpose.msra.mxu0 0.0
    %2484 = vmatprep.subr.mxu0 0.0
    %2485 = vmatpush2.xpose.msra.mxu0 0.0
    %2486 = vmatprep.mubr.f32.mxu0 %v2106
    %2487 = vmatmul.mubr.f32.gmra.mxu0 %v2104
    %v2488 = vpop.f32.mrf.mxu0
    %v2489 = vadd.f32 %v2419, %v2488
    %v2490 = vpop.f32.mrf.mxu0
    %2491 = vdwg.mxu0
    %2492 = vmatprep.subr.mxu0 0.0
    %2493 = vmatpush1.xpose.msra.mxu0 0.0
    %2494 = vmatprep.subr.mxu0 0.0
    %2495 = vmatpush1.xpose.msra.mxu0 0.0
    %2496 = vmatprep.subr.mxu0 0.0
    %2497 = vmatpush1.xpose.msra.mxu0 0.0
    %2498 = vmatprep.subr.mxu0 0.0
    %2499 = vmatpush1.xpose.msra.mxu0 0.0
    %2500 = vmatprep.subr.mxu0 0.0
    %2501 = vmatpush1.xpose.msra.mxu0 0.0
    %2502 = vmatprep.subr.mxu0 0.0
    %2503 = vmatpush1.xpose.msra.mxu0 0.0
    %2504 = vmatprep.subr.mxu0 0.0
    %2505 = vmatpush1.xpose.msra.mxu0 0.0
    %2506 = vmatprep.subr.mxu0 0.0
    %2507 = vmatpush1.xpose.msra.mxu0 0.0
    %2508 = vmatprep.subr.mxu0 0.0
    %2509 = vmatpush1.xpose.msra.mxu0 0.0
    %2510 = vmatprep.subr.mxu0 0.0
    %2511 = vmatpush1.xpose.msra.mxu0 0.0
    %2512 = vmatprep.subr.mxu0 0.0
    %2513 = vmatpush1.xpose.msra.mxu0 0.0
    %2514 = vmatprep.subr.mxu0 0.0
    %2515 = vmatpush1.xpose.msra.mxu0 0.0
    %2516 = vmatprep.subr.mxu0 %v2025
    %2517 = vmatpush1.xpose.msra.mxu0 %v2024
    %2518 = vmatprep.subr.mxu0 %v1975
    %2519 = vmatpush1.xpose.msra.mxu0 %v1974
    %2520 = vmatprep.subr.mxu0 %v1925
    %2521 = vmatpush1.xpose.msra.mxu0 %v1924
    %2522 = vmatprep.subr.mxu0 %v1875
    %2523 = vmatpush1.xpose.msra.mxu0 %v1874
    %2524 = vmatprep.subr.mxu0 0.0
    %2525 = vmatpush2.xpose.msra.mxu0 0.0
    %2526 = vmatprep.subr.mxu0 0.0
    %2527 = vmatpush2.xpose.msra.mxu0 0.0
    %2528 = vmatprep.subr.mxu0 0.0
    %2529 = vmatpush2.xpose.msra.mxu0 0.0
    %2530 = vmatprep.subr.mxu0 0.0
    %2531 = vmatpush2.xpose.msra.mxu0 0.0
    %2532 = vmatprep.subr.mxu0 0.0
    %2533 = vmatpush2.xpose.msra.mxu0 0.0
    %2534 = vmatprep.subr.mxu0 0.0
    %2535 = vmatpush2.xpose.msra.mxu0 0.0
    %2536 = vmatprep.subr.mxu0 0.0
    %2537 = vmatpush2.xpose.msra.mxu0 0.0
    %2538 = vmatprep.subr.mxu0 0.0
    %2539 = vmatpush2.xpose.msra.mxu0 0.0
    %2540 = vmatprep.subr.mxu0 0.0
    %2541 = vmatpush2.xpose.msra.mxu0 0.0
    %2542 = vmatprep.subr.mxu0 0.0
    %2543 = vmatpush2.xpose.msra.mxu0 0.0
    %2544 = vmatprep.subr.mxu0 0.0
    %2545 = vmatpush2.xpose.msra.mxu0 0.0
    %2546 = vmatprep.subr.mxu0 0.0
    %2547 = vmatpush2.xpose.msra.mxu0 0.0
    %2548 = vmatprep.subr.mxu0 0.0
    %2549 = vmatpush2.xpose.msra.mxu0 0.0
    %2550 = vmatprep.subr.mxu0 0.0
    %2551 = vmatpush2.xpose.msra.mxu0 0.0
    %2552 = vmatprep.subr.mxu0 0.0
    %2553 = vmatpush2.xpose.msra.mxu0 0.0
    %2554 = vmatprep.subr.mxu0 0.0
    %2555 = vmatpush2.xpose.msra.mxu0 0.0
    %2556 = vmatprep.mubr.f32.mxu0 %v2122
    %2557 = vmatmul.mubr.f32.gmra.mxu0 %v2114
    %v2558 = vpop.f32.mrf.mxu0
    %v2559 = vadd.f32 %v2489, %v2558
    %v2560 = vpop.f32.mrf.mxu0
    %2561 = vdwg.mxu0
    %2562 = vmatprep.subr.mxu0 0.0
    %2563 = vmatpush1.xpose.msra.mxu0 0.0
    %2564 = vmatprep.subr.mxu0 0.0
    %2565 = vmatpush1.xpose.msra.mxu0 0.0
    %2566 = vmatprep.subr.mxu0 0.0
    %2567 = vmatpush1.xpose.msra.mxu0 0.0
    %2568 = vmatprep.subr.mxu0 0.0
    %2569 = vmatpush1.xpose.msra.mxu0 0.0
    %2570 = vmatprep.subr.mxu0 0.0
    %2571 = vmatpush1.xpose.msra.mxu0 0.0
    %2572 = vmatprep.subr.mxu0 0.0
    %2573 = vmatpush1.xpose.msra.mxu0 0.0
    %2574 = vmatprep.subr.mxu0 0.0
    %2575 = vmatpush1.xpose.msra.mxu0 0.0
    %2576 = vmatprep.subr.mxu0 0.0
    %2577 = vmatpush1.xpose.msra.mxu0 0.0
    %2578 = vmatprep.subr.mxu0 0.0
    %2579 = vmatpush1.xpose.msra.mxu0 0.0
    %2580 = vmatprep.subr.mxu0 0.0
    %2581 = vmatpush1.xpose.msra.mxu0 0.0
    %2582 = vmatprep.subr.mxu0 0.0
    %2583 = vmatpush1.xpose.msra.mxu0 0.0
    %2584 = vmatprep.subr.mxu0 0.0
    %2585 = vmatpush1.xpose.msra.mxu0 0.0
    %2586 = vmatprep.subr.mxu0 %v2027
    %2587 = vmatpush1.xpose.msra.mxu0 %v2026
    %2588 = vmatprep.subr.mxu0 %v1977
    %2589 = vmatpush1.xpose.msra.mxu0 %v1976
    %2590 = vmatprep.subr.mxu0 %v1927
    %2591 = vmatpush1.xpose.msra.mxu0 %v1926
    %2592 = vmatprep.subr.mxu0 %v1877
    %2593 = vmatpush1.xpose.msra.mxu0 %v1876
    %2594 = vmatprep.subr.mxu0 0.0
    %2595 = vmatpush2.xpose.msra.mxu0 0.0
    %2596 = vmatprep.subr.mxu0 0.0
    %2597 = vmatpush2.xpose.msra.mxu0 0.0
    %2598 = vmatprep.subr.mxu0 0.0
    %2599 = vmatpush2.xpose.msra.mxu0 0.0
    %2600 = vmatprep.subr.mxu0 0.0
    %2601 = vmatpush2.xpose.msra.mxu0 0.0
    %2602 = vmatprep.subr.mxu0 0.0
    %2603 = vmatpush2.xpose.msra.mxu0 0.0
    %2604 = vmatprep.subr.mxu0 0.0
    %2605 = vmatpush2.xpose.msra.mxu0 0.0
    %2606 = vmatprep.subr.mxu0 0.0
    %2607 = vmatpush2.xpose.msra.mxu0 0.0
    %2608 = vmatprep.subr.mxu0 0.0
    %2609 = vmatpush2.xpose.msra.mxu0 0.0
    %2610 = vmatprep.subr.mxu0 0.0
    %2611 = vmatpush2.xpose.msra.mxu0 0.0
    %2612 = vmatprep.subr.mxu0 0.0
    %2613 = vmatpush2.xpose.msra.mxu0 0.0
    %2614 = vmatprep.subr.mxu0 0.0
    %2615 = vmatpush2.xpose.msra.mxu0 0.0
    %2616 = vmatprep.subr.mxu0 0.0
    %2617 = vmatpush2.xpose.msra.mxu0 0.0
    %2618 = vmatprep.subr.mxu0 0.0
    %2619 = vmatpush2.xpose.msra.mxu0 0.0
    %2620 = vmatprep.subr.mxu0 0.0
    %2621 = vmatpush2.xpose.msra.mxu0 0.0
    %2622 = vmatprep.subr.mxu0 0.0
    %2623 = vmatpush2.xpose.msra.mxu0 0.0
    %2624 = vmatprep.subr.mxu0 0.0
    %2625 = vmatpush2.xpose.msra.mxu0 0.0
    %2626 = vmatprep.mubr.f32.mxu0 %v2123
    %2627 = vmatmul.mubr.f32.gmra.mxu0 %v2121
    %v2628 = vpop.f32.mrf.mxu0
    %v2629 = vadd.f32 %v2559, %v2628
    %v2630 = vpop.f32.mrf.mxu0
    %2631 = vdwg.mxu0
    %2632 = vmatprep.subr.mxu0 0.0
    %2633 = vmatpush1.xpose.msra.mxu0 0.0
    %2634 = vmatprep.subr.mxu0 0.0
    %2635 = vmatpush1.xpose.msra.mxu0 0.0
    %2636 = vmatprep.subr.mxu0 0.0
    %2637 = vmatpush1.xpose.msra.mxu0 0.0
    %2638 = vmatprep.subr.mxu0 0.0
    %2639 = vmatpush1.xpose.msra.mxu0 0.0
    %2640 = vmatprep.subr.mxu0 0.0
    %2641 = vmatpush1.xpose.msra.mxu0 0.0
    %2642 = vmatprep.subr.mxu0 0.0
    %2643 = vmatpush1.xpose.msra.mxu0 0.0
    %2644 = vmatprep.subr.mxu0 0.0
    %2645 = vmatpush1.xpose.msra.mxu0 0.0
    %2646 = vmatprep.subr.mxu0 0.0
    %2647 = vmatpush1.xpose.msra.mxu0 0.0
    %2648 = vmatprep.subr.mxu0 0.0
    %2649 = vmatpush1.xpose.msra.mxu0 0.0
    %2650 = vmatprep.subr.mxu0 0.0
    %2651 = vmatpush1.xpose.msra.mxu0 0.0
    %2652 = vmatprep.subr.mxu0 0.0
    %2653 = vmatpush1.xpose.msra.mxu0 0.0
    %2654 = vmatprep.subr.mxu0 0.0
    %2655 = vmatpush1.xpose.msra.mxu0 0.0
    %2656 = vmatprep.subr.mxu0 %v2029
    %2657 = vmatpush1.xpose.msra.mxu0 %v2028
    %2658 = vmatprep.subr.mxu0 %v1979
    %2659 = vmatpush1.xpose.msra.mxu0 %v1978
    %2660 = vmatprep.subr.mxu0 %v1929
    %2661 = vmatpush1.xpose.msra.mxu0 %v1928
    %2662 = vmatprep.subr.mxu0 %v1879
    %2663 = vmatpush1.xpose.msra.mxu0 %v1878
    %2664 = vmatprep.subr.mxu0 0.0
    %2665 = vmatpush2.xpose.msra.mxu0 0.0
    %2666 = vmatprep.subr.mxu0 0.0
    %2667 = vmatpush2.xpose.msra.mxu0 0.0
    %2668 = vmatprep.subr.mxu0 0.0
    %2669 = vmatpush2.xpose.msra.mxu0 0.0
    %2670 = vmatprep.subr.mxu0 0.0
    %2671 = vmatpush2.xpose.msra.mxu0 0.0
    %2672 = vmatprep.subr.mxu0 0.0
    %2673 = vmatpush2.xpose.msra.mxu0 0.0
    %2674 = vmatprep.subr.mxu0 0.0
    %2675 = vmatpush2.xpose.msra.mxu0 0.0
    %2676 = vmatprep.subr.mxu0 0.0
    %2677 = vmatpush2.xpose.msra.mxu0 0.0
    %2678 = vmatprep.subr.mxu0 0.0
    %2679 = vmatpush2.xpose.msra.mxu0 0.0
    %2680 = vmatprep.subr.mxu0 0.0
    %2681 = vmatpush2.xpose.msra.mxu0 0.0
    %2682 = vmatprep.subr.mxu0 0.0
    %2683 = vmatpush2.xpose.msra.mxu0 0.0
    %2684 = vmatprep.subr.mxu0 0.0
    %2685 = vmatpush2.xpose.msra.mxu0 0.0
    %2686 = vmatprep.subr.mxu0 0.0
    %2687 = vmatpush2.xpose.msra.mxu0 0.0
    %2688 = vmatprep.subr.mxu0 0.0
    %2689 = vmatpush2.xpose.msra.mxu0 0.0
    %2690 = vmatprep.subr.mxu0 0.0
    %2691 = vmatpush2.xpose.msra.mxu0 0.0
    %2692 = vmatprep.subr.mxu0 0.0
    %2693 = vmatpush2.xpose.msra.mxu0 0.0
    %2694 = vmatprep.subr.mxu0 0.0
    %2695 = vmatpush2.xpose.msra.mxu0 0.0
    %2696 = vmatprep.mubr.f32.mxu0 %v2139
    %2697 = vmatmul.mubr.f32.gmra.mxu0 %v2131
    %v2698 = vpop.f32.mrf.mxu0
    %v2699 = vadd.f32 %v2629, %v2698
    %v2700 = vpop.f32.mrf.mxu0
    %2701 = vdwg.mxu0
    %2702 = vmatprep.subr.mxu0 0.0
    %2703 = vmatpush1.xpose.msra.mxu0 0.0
    %2704 = vmatprep.subr.mxu0 0.0
    %2705 = vmatpush1.xpose.msra.mxu0 0.0
    %2706 = vmatprep.subr.mxu0 0.0
    %2707 = vmatpush1.xpose.msra.mxu0 0.0
    %2708 = vmatprep.subr.mxu0 0.0
    %2709 = vmatpush1.xpose.msra.mxu0 0.0
    %2710 = vmatprep.subr.mxu0 0.0
    %2711 = vmatpush1.xpose.msra.mxu0 0.0
    %2712 = vmatprep.subr.mxu0 0.0
    %2713 = vmatpush1.xpose.msra.mxu0 0.0
    %2714 = vmatprep.subr.mxu0 0.0
    %2715 = vmatpush1.xpose.msra.mxu0 0.0
    %2716 = vmatprep.subr.mxu0 0.0
    %2717 = vmatpush1.xpose.msra.mxu0 0.0
    %2718 = vmatprep.subr.mxu0 0.0
    %2719 = vmatpush1.xpose.msra.mxu0 0.0
    %2720 = vmatprep.subr.mxu0 0.0
    %2721 = vmatpush1.xpose.msra.mxu0 0.0
    %2722 = vmatprep.subr.mxu0 0.0
    %2723 = vmatpush1.xpose.msra.mxu0 0.0
    %2724 = vmatprep.subr.mxu0 0.0
    %2725 = vmatpush1.xpose.msra.mxu0 0.0
    %2726 = vmatprep.subr.mxu0 %v2031
    %2727 = vmatpush1.xpose.msra.mxu0 %v2030
    %2728 = vmatprep.subr.mxu0 %v1981
    %2729 = vmatpush1.xpose.msra.mxu0 %v1980
    %2730 = vmatprep.subr.mxu0 %v1931
    %2731 = vmatpush1.xpose.msra.mxu0 %v1930
    %2732 = vmatprep.subr.mxu0 %v1881
    %2733 = vmatpush1.xpose.msra.mxu0 %v1880
    %2734 = vmatprep.subr.mxu0 0.0
    %2735 = vmatpush2.xpose.msra.mxu0 0.0
    %2736 = vmatprep.subr.mxu0 0.0
    %2737 = vmatpush2.xpose.msra.mxu0 0.0
    %2738 = vmatprep.subr.mxu0 0.0
    %2739 = vmatpush2.xpose.msra.mxu0 0.0
    %2740 = vmatprep.subr.mxu0 0.0
    %2741 = vmatpush2.xpose.msra.mxu0 0.0
    %2742 = vmatprep.subr.mxu0 0.0
    %2743 = vmatpush2.xpose.msra.mxu0 0.0
    %2744 = vmatprep.subr.mxu0 0.0
    %2745 = vmatpush2.xpose.msra.mxu0 0.0
    %2746 = vmatprep.subr.mxu0 0.0
    %2747 = vmatpush2.xpose.msra.mxu0 0.0
    %2748 = vmatprep.subr.mxu0 0.0
    %2749 = vmatpush2.xpose.msra.mxu0 0.0
    %2750 = vmatprep.subr.mxu0 0.0
    %2751 = vmatpush2.xpose.msra.mxu0 0.0
    %2752 = vmatprep.subr.mxu0 0.0
    %2753 = vmatpush2.xpose.msra.mxu0 0.0
    %2754 = vmatprep.subr.mxu0 0.0
    %2755 = vmatpush2.xpose.msra.mxu0 0.0
    %2756 = vmatprep.subr.mxu0 0.0
    %2757 = vmatpush2.xpose.msra.mxu0 0.0
    %2758 = vmatprep.subr.mxu0 0.0
    %2759 = vmatpush2.xpose.msra.mxu0 0.0
    %2760 = vmatprep.subr.mxu0 0.0
    %2761 = vmatpush2.xpose.msra.mxu0 0.0
    %2762 = vmatprep.subr.mxu0 0.0
    %2763 = vmatpush2.xpose.msra.mxu0 0.0
    %2764 = vmatprep.subr.mxu0 0.0
    %2765 = vmatpush2.xpose.msra.mxu0 0.0
    %2766 = vmatprep.mubr.f32.mxu0 %v2140
    %2767 = vmatmul.mubr.f32.gmra.mxu0 %v2138
    %v2768 = vpop.f32.mrf.mxu0
    %v2769 = vadd.f32 %v2699, %v2768
    %v2770 = vpop.f32.mrf.mxu0
    %2771 = vdwg.mxu0
    %2772 = vmatprep.subr.mxu0 0.0
    %2773 = vmatpush1.xpose.msra.mxu0 0.0
    %2774 = vmatprep.subr.mxu0 0.0
    %2775 = vmatpush1.xpose.msra.mxu0 0.0
    %2776 = vmatprep.subr.mxu0 0.0
    %2777 = vmatpush1.xpose.msra.mxu0 0.0
    %2778 = vmatprep.subr.mxu0 0.0
    %2779 = vmatpush1.xpose.msra.mxu0 0.0
    %2780 = vmatprep.subr.mxu0 0.0
    %2781 = vmatpush1.xpose.msra.mxu0 0.0
    %2782 = vmatprep.subr.mxu0 0.0
    %2783 = vmatpush1.xpose.msra.mxu0 0.0
    %2784 = vmatprep.subr.mxu0 0.0
    %2785 = vmatpush1.xpose.msra.mxu0 0.0
    %2786 = vmatprep.subr.mxu0 0.0
    %2787 = vmatpush1.xpose.msra.mxu0 0.0
    %2788 = vmatprep.subr.mxu0 0.0
    %2789 = vmatpush1.xpose.msra.mxu0 0.0
    %2790 = vmatprep.subr.mxu0 0.0
    %2791 = vmatpush1.xpose.msra.mxu0 0.0
    %2792 = vmatprep.subr.mxu0 0.0
    %2793 = vmatpush1.xpose.msra.mxu0 0.0
    %2794 = vmatprep.subr.mxu0 0.0
    %2795 = vmatpush1.xpose.msra.mxu0 0.0
    %2796 = vmatprep.subr.mxu0 %v2033
    %2797 = vmatpush1.xpose.msra.mxu0 %v2032
    %2798 = vmatprep.subr.mxu0 %v1983
    %2799 = vmatpush1.xpose.msra.mxu0 %v1982
    %2800 = vmatprep.subr.mxu0 %v1933
    %2801 = vmatpush1.xpose.msra.mxu0 %v1932
    %2802 = vmatprep.subr.mxu0 %v1883
    %2803 = vmatpush1.xpose.msra.mxu0 %v1882
    %2804 = vmatprep.subr.mxu0 0.0
    %2805 = vmatpush2.xpose.msra.mxu0 0.0
    %2806 = vmatprep.subr.mxu0 0.0
    %2807 = vmatpush2.xpose.msra.mxu0 0.0
    %2808 = vmatprep.subr.mxu0 0.0
    %2809 = vmatpush2.xpose.msra.mxu0 0.0
    %2810 = vmatprep.subr.mxu0 0.0
    %2811 = vmatpush2.xpose.msra.mxu0 0.0
    %2812 = vmatprep.subr.mxu0 0.0
    %2813 = vmatpush2.xpose.msra.mxu0 0.0
    %2814 = vmatprep.subr.mxu0 0.0
    %2815 = vmatpush2.xpose.msra.mxu0 0.0
    %2816 = vmatprep.subr.mxu0 0.0
    %2817 = vmatpush2.xpose.msra.mxu0 0.0
    %2818 = vmatprep.subr.mxu0 0.0
    %2819 = vmatpush2.xpose.msra.mxu0 0.0
    %2820 = vmatprep.subr.mxu0 0.0
    %2821 = vmatpush2.xpose.msra.mxu0 0.0
    %2822 = vmatprep.subr.mxu0 0.0
    %2823 = vmatpush2.xpose.msra.mxu0 0.0
    %2824 = vmatprep.subr.mxu0 0.0
    %2825 = vmatpush2.xpose.msra.mxu0 0.0
    %2826 = vmatprep.subr.mxu0 0.0
    %2827 = vmatpush2.xpose.msra.mxu0 0.0
    %2828 = vmatprep.subr.mxu0 0.0
    %2829 = vmatpush2.xpose.msra.mxu0 0.0
    %2830 = vmatprep.subr.mxu0 0.0
    %2831 = vmatpush2.xpose.msra.mxu0 0.0
    %2832 = vmatprep.subr.mxu0 0.0
    %2833 = vmatpush2.xpose.msra.mxu0 0.0
    %2834 = vmatprep.subr.mxu0 0.0
    %2835 = vmatpush2.xpose.msra.mxu0 0.0
    %2836 = vmatprep.mubr.f32.mxu0 %v2156
    %2837 = vmatmul.mubr.f32.gmra.mxu0 %v2148
    %v2838 = vpop.f32.mrf.mxu0
    %v2839 = vadd.f32 %v2769, %v2838
    %v2840 = vpop.f32.mrf.mxu0
    %2841 = vdwg.mxu0
    %2842 = vmatprep.subr.mxu0 0.0
    %2843 = vmatpush1.xpose.msra.mxu0 0.0
    %2844 = vmatprep.subr.mxu0 0.0
    %2845 = vmatpush1.xpose.msra.mxu0 0.0
    %2846 = vmatprep.subr.mxu0 0.0
    %2847 = vmatpush1.xpose.msra.mxu0 0.0
    %2848 = vmatprep.subr.mxu0 0.0
    %2849 = vmatpush1.xpose.msra.mxu0 0.0
    %2850 = vmatprep.subr.mxu0 0.0
    %2851 = vmatpush1.xpose.msra.mxu0 0.0
    %2852 = vmatprep.subr.mxu0 0.0
    %2853 = vmatpush1.xpose.msra.mxu0 0.0
    %2854 = vmatprep.subr.mxu0 0.0
    %2855 = vmatpush1.xpose.msra.mxu0 0.0
    %2856 = vmatprep.subr.mxu0 0.0
    %2857 = vmatpush1.xpose.msra.mxu0 0.0
    %2858 = vmatprep.subr.mxu0 0.0
    %2859 = vmatpush1.xpose.msra.mxu0 0.0
    %2860 = vmatprep.subr.mxu0 0.0
    %2861 = vmatpush1.xpose.msra.mxu0 0.0
    %2862 = vmatprep.subr.mxu0 0.0
    %2863 = vmatpush1.xpose.msra.mxu0 0.0
    %2864 = vmatprep.subr.mxu0 0.0
    %2865 = vmatpush1.xpose.msra.mxu0 0.0
    %2866 = vmatprep.subr.mxu0 %v2035
    %2867 = vmatpush1.xpose.msra.mxu0 %v2034
    %2868 = vmatprep.subr.mxu0 %v1985
    %2869 = vmatpush1.xpose.msra.mxu0 %v1984
    %2870 = vmatprep.subr.mxu0 %v1935
    %2871 = vmatpush1.xpose.msra.mxu0 %v1934
    %2872 = vmatprep.subr.mxu0 %v1885
    %2873 = vmatpush1.xpose.msra.mxu0 %v1884
    %2874 = vmatprep.subr.mxu0 0.0
    %2875 = vmatpush2.xpose.msra.mxu0 0.0
    %2876 = vmatprep.subr.mxu0 0.0
    %2877 = vmatpush2.xpose.msra.mxu0 0.0
    %2878 = vmatprep.subr.mxu0 0.0
    %2879 = vmatpush2.xpose.msra.mxu0 0.0
    %2880 = vmatprep.subr.mxu0 0.0
    %2881 = vmatpush2.xpose.msra.mxu0 0.0
    %2882 = vmatprep.subr.mxu0 0.0
    %2883 = vmatpush2.xpose.msra.mxu0 0.0
    %2884 = vmatprep.subr.mxu0 0.0
    %2885 = vmatpush2.xpose.msra.mxu0 0.0
    %2886 = vmatprep.subr.mxu0 0.0
    %2887 = vmatpush2.xpose.msra.mxu0 0.0
    %2888 = vmatprep.subr.mxu0 0.0
    %2889 = vmatpush2.xpose.msra.mxu0 0.0
    %2890 = vmatprep.subr.mxu0 0.0
    %2891 = vmatpush2.xpose.msra.mxu0 0.0
    %2892 = vmatprep.subr.mxu0 0.0
    %2893 = vmatpush2.xpose.msra.mxu0 0.0
    %2894 = vmatprep.subr.mxu0 0.0
    %2895 = vmatpush2.xpose.msra.mxu0 0.0
    %2896 = vmatprep.subr.mxu0 0.0
    %2897 = vmatpush2.xpose.msra.mxu0 0.0
    %2898 = vmatprep.subr.mxu0 0.0
    %2899 = vmatpush2.xpose.msra.mxu0 0.0
    %2900 = vmatprep.subr.mxu0 0.0
    %2901 = vmatpush2.xpose.msra.mxu0 0.0
    %2902 = vmatprep.subr.mxu0 0.0
    %2903 = vmatpush2.xpose.msra.mxu0 0.0
    %2904 = vmatprep.subr.mxu0 0.0
    %2905 = vmatpush2.xpose.msra.mxu0 0.0
    %2906 = vmatprep.mubr.f32.mxu0 %v2157
    %2907 = vmatmul.mubr.f32.gmra.mxu0 %v2155
    %v2908 = vpop.f32.mrf.mxu0
    %v2909 = vadd.f32 %v2839, %v2908
    %v2910 = vpop.f32.mrf.mxu0
    %2911 = vdwg.mxu0
    %2912 = vmatprep.subr.mxu0 0.0
    %2913 = vmatpush1.xpose.msra.mxu0 0.0
    %2914 = vmatprep.subr.mxu0 0.0
    %2915 = vmatpush1.xpose.msra.mxu0 0.0
    %2916 = vmatprep.subr.mxu0 0.0
    %2917 = vmatpush1.xpose.msra.mxu0 0.0
    %2918 = vmatprep.subr.mxu0 0.0
    %2919 = vmatpush1.xpose.msra.mxu0 0.0
    %2920 = vmatprep.subr.mxu0 0.0
    %2921 = vmatpush1.xpose.msra.mxu0 0.0
    %2922 = vmatprep.subr.mxu0 0.0
    %2923 = vmatpush1.xpose.msra.mxu0 0.0
    %2924 = vmatprep.subr.mxu0 0.0
    %2925 = vmatpush1.xpose.msra.mxu0 0.0
    %2926 = vmatprep.subr.mxu0 0.0
    %2927 = vmatpush1.xpose.msra.mxu0 0.0
    %2928 = vmatprep.subr.mxu0 0.0
    %2929 = vmatpush1.xpose.msra.mxu0 0.0
    %2930 = vmatprep.subr.mxu0 0.0
    %2931 = vmatpush1.xpose.msra.mxu0 0.0
    %2932 = vmatprep.subr.mxu0 0.0
    %2933 = vmatpush1.xpose.msra.mxu0 0.0
    %2934 = vmatprep.subr.mxu0 0.0
    %2935 = vmatpush1.xpose.msra.mxu0 0.0
    %2936 = vmatprep.subr.mxu0 %v2037
    %2937 = vmatpush1.xpose.msra.mxu0 %v2036
    %2938 = vmatprep.subr.mxu0 %v1987
    %2939 = vmatpush1.xpose.msra.mxu0 %v1986
    %2940 = vmatprep.subr.mxu0 %v1937
    %2941 = vmatpush1.xpose.msra.mxu0 %v1936
    %2942 = vmatprep.subr.mxu0 %v1887
    %2943 = vmatpush1.xpose.msra.mxu0 %v1886
    %2944 = vmatprep.subr.mxu0 0.0
    %2945 = vmatpush2.xpose.msra.mxu0 0.0
    %2946 = vmatprep.subr.mxu0 0.0
    %2947 = vmatpush2.xpose.msra.mxu0 0.0
    %2948 = vmatprep.subr.mxu0 0.0
    %2949 = vmatpush2.xpose.msra.mxu0 0.0
    %2950 = vmatprep.subr.mxu0 0.0
    %2951 = vmatpush2.xpose.msra.mxu0 0.0
    %2952 = vmatprep.subr.mxu0 0.0
    %2953 = vmatpush2.xpose.msra.mxu0 0.0
    %2954 = vmatprep.subr.mxu0 0.0
    %2955 = vmatpush2.xpose.msra.mxu0 0.0
    %2956 = vmatprep.subr.mxu0 0.0
    %2957 = vmatpush2.xpose.msra.mxu0 0.0
    %2958 = vmatprep.subr.mxu0 0.0
    %2959 = vmatpush2.xpose.msra.mxu0 0.0
    %2960 = vmatprep.subr.mxu0 0.0
    %2961 = vmatpush2.xpose.msra.mxu0 0.0
    %2962 = vmatprep.subr.mxu0 0.0
    %2963 = vmatpush2.xpose.msra.mxu0 0.0
    %2964 = vmatprep.subr.mxu0 0.0
    %2965 = vmatpush2.xpose.msra.mxu0 0.0
    %2966 = vmatprep.subr.mxu0 0.0
    %2967 = vmatpush2.xpose.msra.mxu0 0.0
    %2968 = vmatprep.subr.mxu0 0.0
    %2969 = vmatpush2.xpose.msra.mxu0 0.0
    %2970 = vmatprep.subr.mxu0 0.0
    %2971 = vmatpush2.xpose.msra.mxu0 0.0
    %2972 = vmatprep.subr.mxu0 0.0
    %2973 = vmatpush2.xpose.msra.mxu0 0.0
    %2974 = vmatprep.subr.mxu0 0.0
    %2975 = vmatpush2.xpose.msra.mxu0 0.0
    %2976 = vmatprep.mubr.f32.mxu0 %v2173
    %2977 = vmatmul.mubr.f32.gmra.mxu0 %v2165
    %v2978 = vpop.f32.mrf.mxu0
    %v2979 = vadd.f32 %v2909, %v2978
    %v2980 = vpop.f32.mrf.mxu0
    %2981 = vdwg.mxu0
    %2982 = vmatprep.subr.mxu0 0.0
    %2983 = vmatpush1.xpose.msra.mxu0 0.0
    %2984 = vmatprep.subr.mxu0 0.0
    %2985 = vmatpush1.xpose.msra.mxu0 0.0
    %2986 = vmatprep.subr.mxu0 0.0
    %2987 = vmatpush1.xpose.msra.mxu0 0.0
    %2988 = vmatprep.subr.mxu0 0.0
    %2989 = vmatpush1.xpose.msra.mxu0 0.0
    %2990 = vmatprep.subr.mxu0 0.0
    %2991 = vmatpush1.xpose.msra.mxu0 0.0
    %2992 = vmatprep.subr.mxu0 0.0
    %2993 = vmatpush1.xpose.msra.mxu0 0.0
    %2994 = vmatprep.subr.mxu0 0.0
    %2995 = vmatpush1.xpose.msra.mxu0 0.0
    %2996 = vmatprep.subr.mxu0 0.0
    %2997 = vmatpush1.xpose.msra.mxu0 0.0
    %2998 = vmatprep.subr.mxu0 0.0
    %2999 = vmatpush1.xpose.msra.mxu0 0.0
    %3000 = vmatprep.subr.mxu0 0.0
    %3001 = vmatpush1.xpose.msra.mxu0 0.0
    %3002 = vmatprep.subr.mxu0 0.0
    %3003 = vmatpush1.xpose.msra.mxu0 0.0
    %3004 = vmatprep.subr.mxu0 0.0
    %3005 = vmatpush1.xpose.msra.mxu0 0.0
    %3006 = vmatprep.subr.mxu0 %v2039
    %3007 = vmatpush1.xpose.msra.mxu0 %v2038
    %3008 = vmatprep.subr.mxu0 %v1989
    %3009 = vmatpush1.xpose.msra.mxu0 %v1988
    %3010 = vmatprep.subr.mxu0 %v1939
    %3011 = vmatpush1.xpose.msra.mxu0 %v1938
    %3012 = vmatprep.subr.mxu0 %v1889
    %3013 = vmatpush1.xpose.msra.mxu0 %v1888
    %3014 = vmatprep.subr.mxu0 0.0
    %3015 = vmatpush2.xpose.msra.mxu0 0.0
    %3016 = vmatprep.subr.mxu0 0.0
    %3017 = vmatpush2.xpose.msra.mxu0 0.0
    %3018 = vmatprep.subr.mxu0 0.0
    %3019 = vmatpush2.xpose.msra.mxu0 0.0
    %3020 = vmatprep.subr.mxu0 0.0
    %3021 = vmatpush2.xpose.msra.mxu0 0.0
    %3022 = vmatprep.subr.mxu0 0.0
    %3023 = vmatpush2.xpose.msra.mxu0 0.0
    %3024 = vmatprep.subr.mxu0 0.0
    %3025 = vmatpush2.xpose.msra.mxu0 0.0
    %3026 = vmatprep.subr.mxu0 0.0
    %3027 = vmatpush2.xpose.msra.mxu0 0.0
    %3028 = vmatprep.subr.mxu0 0.0
    %3029 = vmatpush2.xpose.msra.mxu0 0.0
    %3030 = vmatprep.subr.mxu0 0.0
    %3031 = vmatpush2.xpose.msra.mxu0 0.0
    %3032 = vmatprep.subr.mxu0 0.0
    %3033 = vmatpush2.xpose.msra.mxu0 0.0
    %3034 = vmatprep.subr.mxu0 0.0
    %3035 = vmatpush2.xpose.msra.mxu0 0.0
    %3036 = vmatprep.subr.mxu0 0.0
    %3037 = vmatpush2.xpose.msra.mxu0 0.0
    %3038 = vmatprep.subr.mxu0 0.0
    %3039 = vmatpush2.xpose.msra.mxu0 0.0
    %3040 = vmatprep.subr.mxu0 0.0
    %3041 = vmatpush2.xpose.msra.mxu0 0.0
    %3042 = vmatprep.subr.mxu0 0.0
    %3043 = vmatpush2.xpose.msra.mxu0 0.0
    %3044 = vmatprep.subr.mxu0 0.0
    %3045 = vmatpush2.xpose.msra.mxu0 0.0
    %3046 = vmatprep.mubr.f32.mxu0 %v2174
    %3047 = vmatmul.mubr.f32.gmra.mxu0 %v2172
    %v3048 = vpop.f32.mrf.mxu0
    %v3049 = vadd.f32 %v2979, %v3048
    %v3050 = vpop.f32.mrf.mxu0
    %3051 = vdwg.mxu0
    %3052 = vmatprep.subr.mxu0 0.0
    %3053 = vmatpush1.xpose.msra.mxu0 0.0
    %3054 = vmatprep.subr.mxu0 0.0
    %3055 = vmatpush1.xpose.msra.mxu0 0.0
    %3056 = vmatprep.subr.mxu0 0.0
    %3057 = vmatpush1.xpose.msra.mxu0 0.0
    %3058 = vmatprep.subr.mxu0 0.0
    %3059 = vmatpush1.xpose.msra.mxu0 0.0
    %3060 = vmatprep.subr.mxu0 0.0
    %3061 = vmatpush1.xpose.msra.mxu0 0.0
    %3062 = vmatprep.subr.mxu0 0.0
    %3063 = vmatpush1.xpose.msra.mxu0 0.0
    %3064 = vmatprep.subr.mxu0 0.0
    %3065 = vmatpush1.xpose.msra.mxu0 0.0
    %3066 = vmatprep.subr.mxu0 0.0
    %3067 = vmatpush1.xpose.msra.mxu0 0.0
    %3068 = vmatprep.subr.mxu0 0.0
    %3069 = vmatpush1.xpose.msra.mxu0 0.0
    %3070 = vmatprep.subr.mxu0 0.0
    %3071 = vmatpush1.xpose.msra.mxu0 0.0
    %3072 = vmatprep.subr.mxu0 0.0
    %3073 = vmatpush1.xpose.msra.mxu0 0.0
    %3074 = vmatprep.subr.mxu0 0.0
    %3075 = vmatpush1.xpose.msra.mxu0 0.0
    %3076 = vmatprep.subr.mxu0 %v2041
    %3077 = vmatpush1.xpose.msra.mxu0 %v2040
    %3078 = vmatprep.subr.mxu0 %v1991
    %3079 = vmatpush1.xpose.msra.mxu0 %v1990
    %3080 = vmatprep.subr.mxu0 %v1941
    %3081 = vmatpush1.xpose.msra.mxu0 %v1940
    %3082 = vmatprep.subr.mxu0 %v1891
    %3083 = vmatpush1.xpose.msra.mxu0 %v1890
    %3084 = vmatprep.subr.mxu0 0.0
    %3085 = vmatpush2.xpose.msra.mxu0 0.0
    %3086 = vmatprep.subr.mxu0 0.0
    %3087 = vmatpush2.xpose.msra.mxu0 0.0
    %3088 = vmatprep.subr.mxu0 0.0
    %3089 = vmatpush2.xpose.msra.mxu0 0.0
    %3090 = vmatprep.subr.mxu0 0.0
    %3091 = vmatpush2.xpose.msra.mxu0 0.0
    %3092 = vmatprep.subr.mxu0 0.0
    %3093 = vmatpush2.xpose.msra.mxu0 0.0
    %3094 = vmatprep.subr.mxu0 0.0
    %3095 = vmatpush2.xpose.msra.mxu0 0.0
    %3096 = vmatprep.subr.mxu0 0.0
    %3097 = vmatpush2.xpose.msra.mxu0 0.0
    %3098 = vmatprep.subr.mxu0 0.0
    %3099 = vmatpush2.xpose.msra.mxu0 0.0
    %3100 = vmatprep.subr.mxu0 0.0
    %3101 = vmatpush2.xpose.msra.mxu0 0.0
    %3102 = vmatprep.subr.mxu0 0.0
    %3103 = vmatpush2.xpose.msra.mxu0 0.0
    %3104 = vmatprep.subr.mxu0 0.0
    %3105 = vmatpush2.xpose.msra.mxu0 0.0
    %3106 = vmatprep.subr.mxu0 0.0
    %3107 = vmatpush2.xpose.msra.mxu0 0.0
    %3108 = vmatprep.subr.mxu0 0.0
    %3109 = vmatpush2.xpose.msra.mxu0 0.0
    %3110 = vmatprep.subr.mxu0 0.0
    %3111 = vmatpush2.xpose.msra.mxu0 0.0
    %3112 = vmatprep.subr.mxu0 0.0
    %3113 = vmatpush2.xpose.msra.mxu0 0.0
    %3114 = vmatprep.subr.mxu0 0.0
    %3115 = vmatpush2.xpose.msra.mxu0 0.0
    %3116 = vmatprep.mubr.f32.mxu0 %v2190
    %3117 = vmatmul.mubr.f32.gmra.mxu0 %v2182
    %v3118 = vpop.f32.mrf.mxu0
    %v3119 = vadd.f32 %v3049, %v3118
    %v3120 = vpop.f32.mrf.mxu0
    %3121 = vdwg.mxu0
    %3122 = vmatprep.subr.mxu0 0.0
    %3123 = vmatpush1.xpose.msra.mxu0 0.0
    %3124 = vmatprep.subr.mxu0 0.0
    %3125 = vmatpush1.xpose.msra.mxu0 0.0
    %3126 = vmatprep.subr.mxu0 0.0
    %3127 = vmatpush1.xpose.msra.mxu0 0.0
    %3128 = vmatprep.subr.mxu0 0.0
    %3129 = vmatpush1.xpose.msra.mxu0 0.0
    %3130 = vmatprep.subr.mxu0 0.0
    %3131 = vmatpush1.xpose.msra.mxu0 0.0
    %3132 = vmatprep.subr.mxu0 0.0
    %3133 = vmatpush1.xpose.msra.mxu0 0.0
    %3134 = vmatprep.subr.mxu0 0.0
    %3135 = vmatpush1.xpose.msra.mxu0 0.0
    %3136 = vmatprep.subr.mxu0 0.0
    %3137 = vmatpush1.xpose.msra.mxu0 0.0
    %3138 = vmatprep.subr.mxu0 0.0
    %3139 = vmatpush1.xpose.msra.mxu0 0.0
    %3140 = vmatprep.subr.mxu0 0.0
    %3141 = vmatpush1.xpose.msra.mxu0 0.0
    %3142 = vmatprep.subr.mxu0 0.0
    %3143 = vmatpush1.xpose.msra.mxu0 0.0
    %3144 = vmatprep.subr.mxu0 0.0
    %3145 = vmatpush1.xpose.msra.mxu0 0.0
    %3146 = vmatprep.subr.mxu0 %v2043
    %3147 = vmatpush1.xpose.msra.mxu0 %v2042
    %3148 = vmatprep.subr.mxu0 %v1993
    %3149 = vmatpush1.xpose.msra.mxu0 %v1992
    %3150 = vmatprep.subr.mxu0 %v1943
    %3151 = vmatpush1.xpose.msra.mxu0 %v1942
    %3152 = vmatprep.subr.mxu0 %v1893
    %3153 = vmatpush1.xpose.msra.mxu0 %v1892
    %3154 = vmatprep.subr.mxu0 0.0
    %3155 = vmatpush2.xpose.msra.mxu0 0.0
    %3156 = vmatprep.subr.mxu0 0.0
    %3157 = vmatpush2.xpose.msra.mxu0 0.0
    %3158 = vmatprep.subr.mxu0 0.0
    %3159 = vmatpush2.xpose.msra.mxu0 0.0
    %3160 = vmatprep.subr.mxu0 0.0
    %3161 = vmatpush2.xpose.msra.mxu0 0.0
    %3162 = vmatprep.subr.mxu0 0.0
    %3163 = vmatpush2.xpose.msra.mxu0 0.0
    %3164 = vmatprep.subr.mxu0 0.0
    %3165 = vmatpush2.xpose.msra.mxu0 0.0
    %3166 = vmatprep.subr.mxu0 0.0
    %3167 = vmatpush2.xpose.msra.mxu0 0.0
    %3168 = vmatprep.subr.mxu0 0.0
    %3169 = vmatpush2.xpose.msra.mxu0 0.0
    %3170 = vmatprep.subr.mxu0 0.0
    %3171 = vmatpush2.xpose.msra.mxu0 0.0
    %3172 = vmatprep.subr.mxu0 0.0
    %3173 = vmatpush2.xpose.msra.mxu0 0.0
    %3174 = vmatprep.subr.mxu0 0.0
    %3175 = vmatpush2.xpose.msra.mxu0 0.0
    %3176 = vmatprep.subr.mxu0 0.0
    %3177 = vmatpush2.xpose.msra.mxu0 0.0
    %3178 = vmatprep.subr.mxu0 0.0
    %3179 = vmatpush2.xpose.msra.mxu0 0.0
    %3180 = vmatprep.subr.mxu0 0.0
    %3181 = vmatpush2.xpose.msra.mxu0 0.0
    %3182 = vmatprep.subr.mxu0 0.0
    %3183 = vmatpush2.xpose.msra.mxu0 0.0
    %3184 = vmatprep.subr.mxu0 0.0
    %3185 = vmatpush2.xpose.msra.mxu0 0.0
    %3186 = vmatprep.mubr.f32.mxu0 %v2191
    %3187 = vmatmul.mubr.f32.gmra.mxu0 %v2189
    %v3188 = vpop.f32.mrf.mxu0
    %v3189 = vadd.f32 %v3119, %v3188
    %v3190 = vpop.f32.mrf.mxu0
    %3191 = vdwg.mxu0
    %3192 = vmatprep.subr.mxu0 0.0
    %3193 = vmatpush1.xpose.msra.mxu0 0.0
    %3194 = vmatprep.subr.mxu0 0.0
    %3195 = vmatpush1.xpose.msra.mxu0 0.0
    %3196 = vmatprep.subr.mxu0 0.0
    %3197 = vmatpush1.xpose.msra.mxu0 0.0
    %3198 = vmatprep.subr.mxu0 0.0
    %3199 = vmatpush1.xpose.msra.mxu0 0.0
    %3200 = vmatprep.subr.mxu0 0.0
    %3201 = vmatpush1.xpose.msra.mxu0 0.0
    %3202 = vmatprep.subr.mxu0 0.0
    %3203 = vmatpush1.xpose.msra.mxu0 0.0
    %3204 = vmatprep.subr.mxu0 0.0
    %3205 = vmatpush1.xpose.msra.mxu0 0.0
    %3206 = vmatprep.subr.mxu0 0.0
    %3207 = vmatpush1.xpose.msra.mxu0 0.0
    %3208 = vmatprep.subr.mxu0 0.0
    %3209 = vmatpush1.xpose.msra.mxu0 0.0
    %3210 = vmatprep.subr.mxu0 0.0
    %3211 = vmatpush1.xpose.msra.mxu0 0.0
    %3212 = vmatprep.subr.mxu0 0.0
    %3213 = vmatpush1.xpose.msra.mxu0 0.0
    %3214 = vmatprep.subr.mxu0 0.0
    %3215 = vmatpush1.xpose.msra.mxu0 0.0
    %3216 = vmatprep.subr.mxu0 %v2045
    %3217 = vmatpush1.xpose.msra.mxu0 %v2044
    %3218 = vmatprep.subr.mxu0 %v1995
    %3219 = vmatpush1.xpose.msra.mxu0 %v1994
    %3220 = vmatprep.subr.mxu0 %v1945
    %3221 = vmatpush1.xpose.msra.mxu0 %v1944
    %3222 = vmatprep.subr.mxu0 %v1895
    %3223 = vmatpush1.xpose.msra.mxu0 %v1894
    %3224 = vmatprep.subr.mxu0 0.0
    %3225 = vmatpush2.xpose.msra.mxu0 0.0
    %3226 = vmatprep.subr.mxu0 0.0
    %3227 = vmatpush2.xpose.msra.mxu0 0.0
    %3228 = vmatprep.subr.mxu0 0.0
    %3229 = vmatpush2.xpose.msra.mxu0 0.0
    %3230 = vmatprep.subr.mxu0 0.0
    %3231 = vmatpush2.xpose.msra.mxu0 0.0
    %3232 = vmatprep.subr.mxu0 0.0
    %3233 = vmatpush2.xpose.msra.mxu0 0.0
    %3234 = vmatprep.subr.mxu0 0.0
    %3235 = vmatpush2.xpose.msra.mxu0 0.0
    %3236 = vmatprep.subr.mxu0 0.0
    %3237 = vmatpush2.xpose.msra.mxu0 0.0
    %3238 = vmatprep.subr.mxu0 0.0
    %3239 = vmatpush2.xpose.msra.mxu0 0.0
    %3240 = vmatprep.subr.mxu0 0.0
    %3241 = vmatpush2.xpose.msra.mxu0 0.0
    %3242 = vmatprep.subr.mxu0 0.0
    %3243 = vmatpush2.xpose.msra.mxu0 0.0
    %3244 = vmatprep.subr.mxu0 0.0
    %3245 = vmatpush2.xpose.msra.mxu0 0.0
    %3246 = vmatprep.subr.mxu0 0.0
    %3247 = vmatpush2.xpose.msra.mxu0 0.0
    %3248 = vmatprep.subr.mxu0 0.0
    %3249 = vmatpush2.xpose.msra.mxu0 0.0
    %3250 = vmatprep.subr.mxu0 0.0
    %3251 = vmatpush2.xpose.msra.mxu0 0.0
    %3252 = vmatprep.subr.mxu0 0.0
    %3253 = vmatpush2.xpose.msra.mxu0 0.0
    %3254 = vmatprep.subr.mxu0 0.0
    %3255 = vmatpush2.xpose.msra.mxu0 0.0
    %3256 = vmatprep.mubr.f32.mxu0 %v2207
    %3257 = vmatmul.mubr.f32.gmra.mxu0 %v2199
    %v3258 = vpop.f32.mrf.mxu0
    %v3259 = vadd.f32 %v3189, %v3258
    %v3260 = vpop.f32.mrf.mxu0
    %3261 = vdwg.mxu0
    %3262 = vmatprep.subr.mxu0 0.0
    %3263 = vmatpush1.xpose.msra.mxu0 0.0
    %3264 = vmatprep.subr.mxu0 0.0
    %3265 = vmatpush1.xpose.msra.mxu0 0.0
    %3266 = vmatprep.subr.mxu0 0.0
    %3267 = vmatpush1.xpose.msra.mxu0 0.0
    %3268 = vmatprep.subr.mxu0 0.0
    %3269 = vmatpush1.xpose.msra.mxu0 0.0
    %3270 = vmatprep.subr.mxu0 0.0
    %3271 = vmatpush1.xpose.msra.mxu0 0.0
    %3272 = vmatprep.subr.mxu0 0.0
    %3273 = vmatpush1.xpose.msra.mxu0 0.0
    %3274 = vmatprep.subr.mxu0 0.0
    %3275 = vmatpush1.xpose.msra.mxu0 0.0
    %3276 = vmatprep.subr.mxu0 0.0
    %3277 = vmatpush1.xpose.msra.mxu0 0.0
    %3278 = vmatprep.subr.mxu0 0.0
    %3279 = vmatpush1.xpose.msra.mxu0 0.0
    %3280 = vmatprep.subr.mxu0 0.0
    %3281 = vmatpush1.xpose.msra.mxu0 0.0
    %3282 = vmatprep.subr.mxu0 0.0
    %3283 = vmatpush1.xpose.msra.mxu0 0.0
    %3284 = vmatprep.subr.mxu0 0.0
    %3285 = vmatpush1.xpose.msra.mxu0 0.0
    %3286 = vmatprep.subr.mxu0 %v2047
    %3287 = vmatpush1.xpose.msra.mxu0 %v2046
    %3288 = vmatprep.subr.mxu0 %v1997
    %3289 = vmatpush1.xpose.msra.mxu0 %v1996
    %3290 = vmatprep.subr.mxu0 %v1947
    %3291 = vmatpush1.xpose.msra.mxu0 %v1946
    %3292 = vmatprep.subr.mxu0 %v1897
    %3293 = vmatpush1.xpose.msra.mxu0 %v1896
    %3294 = vmatprep.subr.mxu0 0.0
    %3295 = vmatpush2.xpose.msra.mxu0 0.0
    %3296 = vmatprep.subr.mxu0 0.0
    %3297 = vmatpush2.xpose.msra.mxu0 0.0
    %3298 = vmatprep.subr.mxu0 0.0
    %3299 = vmatpush2.xpose.msra.mxu0 0.0
    %3300 = vmatprep.subr.mxu0 0.0
    %3301 = vmatpush2.xpose.msra.mxu0 0.0
    %3302 = vmatprep.subr.mxu0 0.0
    %3303 = vmatpush2.xpose.msra.mxu0 0.0
    %3304 = vmatprep.subr.mxu0 0.0
    %3305 = vmatpush2.xpose.msra.mxu0 0.0
    %3306 = vmatprep.subr.mxu0 0.0
    %3307 = vmatpush2.xpose.msra.mxu0 0.0
    %3308 = vmatprep.subr.mxu0 0.0
    %3309 = vmatpush2.xpose.msra.mxu0 0.0
    %3310 = vmatprep.subr.mxu0 0.0
    %3311 = vmatpush2.xpose.msra.mxu0 0.0
    %3312 = vmatprep.subr.mxu0 0.0
    %3313 = vmatpush2.xpose.msra.mxu0 0.0
    %3314 = vmatprep.subr.mxu0 0.0
    %3315 = vmatpush2.xpose.msra.mxu0 0.0
    %3316 = vmatprep.subr.mxu0 0.0
    %3317 = vmatpush2.xpose.msra.mxu0 0.0
    %3318 = vmatprep.subr.mxu0 0.0
    %3319 = vmatpush2.xpose.msra.mxu0 0.0
    %3320 = vmatprep.subr.mxu0 0.0
    %3321 = vmatpush2.xpose.msra.mxu0 0.0
    %3322 = vmatprep.subr.mxu0 0.0
    %3323 = vmatpush2.xpose.msra.mxu0 0.0
    %3324 = vmatprep.subr.mxu0 0.0
    %3325 = vmatpush2.xpose.msra.mxu0 0.0
    %3326 = vmatprep.mubr.f32.mxu0 %v2208
    %3327 = vmatmul.mubr.f32.gmra.mxu0 %v2206
    %v3328 = vpop.f32.mrf.mxu0
    %v3329 = vadd.f32 %v3259, %v3328
    %v3330 = vpop.f32.mrf.mxu0
    %3331 = vdwg.mxu0
    %3332 = vmatprep.subr.mxu0 0.0
    %3333 = vmatpush1.xpose.msra.mxu0 0.0
    %3334 = vmatprep.subr.mxu0 0.0
    %3335 = vmatpush1.xpose.msra.mxu0 0.0
    %3336 = vmatprep.subr.mxu0 0.0
    %3337 = vmatpush1.xpose.msra.mxu0 0.0
    %3338 = vmatprep.subr.mxu0 0.0
    %3339 = vmatpush1.xpose.msra.mxu0 0.0
    %3340 = vmatprep.subr.mxu0 0.0
    %3341 = vmatpush1.xpose.msra.mxu0 0.0
    %3342 = vmatprep.subr.mxu0 0.0
    %3343 = vmatpush1.xpose.msra.mxu0 0.0
    %3344 = vmatprep.subr.mxu0 0.0
    %3345 = vmatpush1.xpose.msra.mxu0 0.0
    %3346 = vmatprep.subr.mxu0 0.0
    %3347 = vmatpush1.xpose.msra.mxu0 0.0
    %3348 = vmatprep.subr.mxu0 0.0
    %3349 = vmatpush1.xpose.msra.mxu0 0.0
    %3350 = vmatprep.subr.mxu0 0.0
    %3351 = vmatpush1.xpose.msra.mxu0 0.0
    %3352 = vmatprep.subr.mxu0 0.0
    %3353 = vmatpush1.xpose.msra.mxu0 0.0
    %3354 = vmatprep.subr.mxu0 0.0
    %3355 = vmatpush1.xpose.msra.mxu0 0.0
    %3356 = vmatprep.subr.mxu0 %v2049
    %3357 = vmatpush1.xpose.msra.mxu0 %v2048
    %3358 = vmatprep.subr.mxu0 %v1999
    %3359 = vmatpush1.xpose.msra.mxu0 %v1998
    %3360 = vmatprep.subr.mxu0 %v1949
    %3361 = vmatpush1.xpose.msra.mxu0 %v1948
    %3362 = vmatprep.subr.mxu0 %v1899
    %3363 = vmatpush1.xpose.msra.mxu0 %v1898
    %3364 = vmatprep.subr.mxu0 0.0
    %3365 = vmatpush2.xpose.msra.mxu0 0.0
    %3366 = vmatprep.subr.mxu0 0.0
    %3367 = vmatpush2.xpose.msra.mxu0 0.0
    %3368 = vmatprep.subr.mxu0 0.0
    %3369 = vmatpush2.xpose.msra.mxu0 0.0
    %3370 = vmatprep.subr.mxu0 0.0
    %3371 = vmatpush2.xpose.msra.mxu0 0.0
    %3372 = vmatprep.subr.mxu0 0.0
    %3373 = vmatpush2.xpose.msra.mxu0 0.0
    %3374 = vmatprep.subr.mxu0 0.0
    %3375 = vmatpush2.xpose.msra.mxu0 0.0
    %3376 = vmatprep.subr.mxu0 0.0
    %3377 = vmatpush2.xpose.msra.mxu0 0.0
    %3378 = vmatprep.subr.mxu0 0.0
    %3379 = vmatpush2.xpose.msra.mxu0 0.0
    %3380 = vmatprep.subr.mxu0 0.0
    %3381 = vmatpush2.xpose.msra.mxu0 0.0
    %3382 = vmatprep.subr.mxu0 0.0
    %3383 = vmatpush2.xpose.msra.mxu0 0.0
    %3384 = vmatprep.subr.mxu0 0.0
    %3385 = vmatpush2.xpose.msra.mxu0 0.0
    %3386 = vmatprep.subr.mxu0 0.0
    %3387 = vmatpush2.xpose.msra.mxu0 0.0
    %3388 = vmatprep.subr.mxu0 0.0
    %3389 = vmatpush2.xpose.msra.mxu0 0.0
    %3390 = vmatprep.subr.mxu0 0.0
    %3391 = vmatpush2.xpose.msra.mxu0 0.0
    %3392 = vmatprep.subr.mxu0 0.0
    %3393 = vmatpush2.xpose.msra.mxu0 0.0
    %3394 = vmatprep.subr.mxu0 0.0
    %3395 = vmatpush2.xpose.msra.mxu0 0.0
    %3396 = vmatprep.mubr.f32.mxu0 %v2224
    %3397 = vmatmul.mubr.f32.gmra.mxu0 %v2216
    %v3398 = vpop.f32.mrf.mxu0
    %v3399 = vadd.f32 %v3329, %v3398
    %v3400 = vpop.f32.mrf.mxu0
    %3401 = vdwg.mxu0
    %3402 = vmatprep.subr.mxu0 0.0
    %3403 = vmatpush1.xpose.msra.mxu0 0.0
    %3404 = vmatprep.subr.mxu0 0.0
    %3405 = vmatpush1.xpose.msra.mxu0 0.0
    %3406 = vmatprep.subr.mxu0 0.0
    %3407 = vmatpush1.xpose.msra.mxu0 0.0
    %3408 = vmatprep.subr.mxu0 0.0
    %3409 = vmatpush1.xpose.msra.mxu0 0.0
    %3410 = vmatprep.subr.mxu0 0.0
    %3411 = vmatpush1.xpose.msra.mxu0 0.0
    %3412 = vmatprep.subr.mxu0 0.0
    %3413 = vmatpush1.xpose.msra.mxu0 0.0
    %3414 = vmatprep.subr.mxu0 0.0
    %3415 = vmatpush1.xpose.msra.mxu0 0.0
    %3416 = vmatprep.subr.mxu0 0.0
    %3417 = vmatpush1.xpose.msra.mxu0 0.0
    %3418 = vmatprep.subr.mxu0 0.0
    %3419 = vmatpush1.xpose.msra.mxu0 0.0
    %3420 = vmatprep.subr.mxu0 0.0
    %3421 = vmatpush1.xpose.msra.mxu0 0.0
    %3422 = vmatprep.subr.mxu0 0.0
    %3423 = vmatpush1.xpose.msra.mxu0 0.0
    %3424 = vmatprep.subr.mxu0 0.0
    %3425 = vmatpush1.xpose.msra.mxu0 0.0
    %3426 = vmatprep.subr.mxu0 %v2051
    %3427 = vmatpush1.xpose.msra.mxu0 %v2050
    %3428 = vmatprep.subr.mxu0 %v2001
    %3429 = vmatpush1.xpose.msra.mxu0 %v2000
    %3430 = vmatprep.subr.mxu0 %v1951
    %3431 = vmatpush1.xpose.msra.mxu0 %v1950
    %3432 = vmatprep.subr.mxu0 %v1901
    %3433 = vmatpush1.xpose.msra.mxu0 %v1900
    %3434 = vmatprep.subr.mxu0 0.0
    %3435 = vmatpush2.xpose.msra.mxu0 0.0
    %3436 = vmatprep.subr.mxu0 0.0
    %3437 = vmatpush2.xpose.msra.mxu0 0.0
    %3438 = vmatprep.subr.mxu0 0.0
    %3439 = vmatpush2.xpose.msra.mxu0 0.0
    %3440 = vmatprep.subr.mxu0 0.0
    %3441 = vmatpush2.xpose.msra.mxu0 0.0
    %3442 = vmatprep.subr.mxu0 0.0
    %3443 = vmatpush2.xpose.msra.mxu0 0.0
    %3444 = vmatprep.subr.mxu0 0.0
    %3445 = vmatpush2.xpose.msra.mxu0 0.0
    %3446 = vmatprep.subr.mxu0 0.0
    %3447 = vmatpush2.xpose.msra.mxu0 0.0
    %3448 = vmatprep.subr.mxu0 0.0
    %3449 = vmatpush2.xpose.msra.mxu0 0.0
    %3450 = vmatprep.subr.mxu0 0.0
    %3451 = vmatpush2.xpose.msra.mxu0 0.0
    %3452 = vmatprep.subr.mxu0 0.0
    %3453 = vmatpush2.xpose.msra.mxu0 0.0
    %3454 = vmatprep.subr.mxu0 0.0
    %3455 = vmatpush2.xpose.msra.mxu0 0.0
    %3456 = vmatprep.subr.mxu0 0.0
    %3457 = vmatpush2.xpose.msra.mxu0 0.0
    %3458 = vmatprep.subr.mxu0 0.0
    %3459 = vmatpush2.xpose.msra.mxu0 0.0
    %3460 = vmatprep.subr.mxu0 0.0
    %3461 = vmatpush2.xpose.msra.mxu0 0.0
    %3462 = vmatprep.subr.mxu0 0.0
    %3463 = vmatpush2.xpose.msra.mxu0 0.0
    %3464 = vmatprep.subr.mxu0 0.0
    %3465 = vmatpush2.xpose.msra.mxu0 0.0
    %3466 = vmatprep.mubr.f32.mxu0 %v2225
    %3467 = vmatmul.mubr.f32.gmra.mxu0 %v2223
    %v3468 = vpop.f32.mrf.mxu0
    %v3469 = vadd.f32 %v3399, %v3468
    %v3470 = vpop.f32.mrf.mxu0
    %3471 = vdwg.mxu0
    %3472 = vmatprep.subr.mxu0 0.0
    %3473 = vmatpush1.xpose.msra.mxu0 0.0
    %3474 = vmatprep.subr.mxu0 0.0
    %3475 = vmatpush1.xpose.msra.mxu0 0.0
    %3476 = vmatprep.subr.mxu0 0.0
    %3477 = vmatpush1.xpose.msra.mxu0 0.0
    %3478 = vmatprep.subr.mxu0 0.0
    %3479 = vmatpush1.xpose.msra.mxu0 0.0
    %3480 = vmatprep.subr.mxu0 0.0
    %3481 = vmatpush1.xpose.msra.mxu0 0.0
    %3482 = vmatprep.subr.mxu0 0.0
    %3483 = vmatpush1.xpose.msra.mxu0 0.0
    %3484 = vmatprep.subr.mxu0 0.0
    %3485 = vmatpush1.xpose.msra.mxu0 0.0
    %3486 = vmatprep.subr.mxu0 0.0
    %3487 = vmatpush1.xpose.msra.mxu0 0.0
    %3488 = vmatprep.subr.mxu0 0.0
    %3489 = vmatpush1.xpose.msra.mxu0 0.0
    %3490 = vmatprep.subr.mxu0 0.0
    %3491 = vmatpush1.xpose.msra.mxu0 0.0
    %3492 = vmatprep.subr.mxu0 0.0
    %3493 = vmatpush1.xpose.msra.mxu0 0.0
    %3494 = vmatprep.subr.mxu0 0.0
    %3495 = vmatpush1.xpose.msra.mxu0 0.0
    %3496 = vmatprep.subr.mxu0 %v2053
    %3497 = vmatpush1.xpose.msra.mxu0 %v2052
    %3498 = vmatprep.subr.mxu0 %v2003
    %3499 = vmatpush1.xpose.msra.mxu0 %v2002
    %3500 = vmatprep.subr.mxu0 %v1953
    %3501 = vmatpush1.xpose.msra.mxu0 %v1952
    %3502 = vmatprep.subr.mxu0 %v1903
    %3503 = vmatpush1.xpose.msra.mxu0 %v1902
    %3504 = vmatprep.subr.mxu0 0.0
    %3505 = vmatpush2.xpose.msra.mxu0 0.0
    %3506 = vmatprep.subr.mxu0 0.0
    %3507 = vmatpush2.xpose.msra.mxu0 0.0
    %3508 = vmatprep.subr.mxu0 0.0
    %3509 = vmatpush2.xpose.msra.mxu0 0.0
    %3510 = vmatprep.subr.mxu0 0.0
    %3511 = vmatpush2.xpose.msra.mxu0 0.0
    %3512 = vmatprep.subr.mxu0 0.0
    %3513 = vmatpush2.xpose.msra.mxu0 0.0
    %3514 = vmatprep.subr.mxu0 0.0
    %3515 = vmatpush2.xpose.msra.mxu0 0.0
    %3516 = vmatprep.subr.mxu0 0.0
    %3517 = vmatpush2.xpose.msra.mxu0 0.0
    %3518 = vmatprep.subr.mxu0 0.0
    %3519 = vmatpush2.xpose.msra.mxu0 0.0
    %3520 = vmatprep.subr.mxu0 0.0
    %3521 = vmatpush2.xpose.msra.mxu0 0.0
    %3522 = vmatprep.subr.mxu0 0.0
    %3523 = vmatpush2.xpose.msra.mxu0 0.0
    %3524 = vmatprep.subr.mxu0 0.0
    %3525 = vmatpush2.xpose.msra.mxu0 0.0
    %3526 = vmatprep.subr.mxu0 0.0
    %3527 = vmatpush2.xpose.msra.mxu0 0.0
    %3528 = vmatprep.subr.mxu0 0.0
    %3529 = vmatpush2.xpose.msra.mxu0 0.0
    %3530 = vmatprep.subr.mxu0 0.0
    %3531 = vmatpush2.xpose.msra.mxu0 0.0
    %3532 = vmatprep.subr.mxu0 0.0
    %3533 = vmatpush2.xpose.msra.mxu0 0.0
    %3534 = vmatprep.subr.mxu0 0.0
    %3535 = vmatpush2.xpose.msra.mxu0 0.0
    %3536 = vmatprep.mubr.f32.mxu0 %v2241
    %3537 = vmatmul.mubr.f32.gmra.mxu0 %v2233
    %v3538 = vpop.f32.mrf.mxu0
    %v3539 = vadd.f32 %v3469, %v3538
    %v3540 = vpop.f32.mrf.mxu0
    %3541 = vdwg.mxu0
    %3542 = vmatprep.subr.mxu0 0.0
    %3543 = vmatpush1.xpose.msra.mxu0 0.0
    %3544 = vmatprep.subr.mxu0 0.0
    %3545 = vmatpush1.xpose.msra.mxu0 0.0
    %3546 = vmatprep.subr.mxu0 0.0
    %3547 = vmatpush1.xpose.msra.mxu0 0.0
    %3548 = vmatprep.subr.mxu0 0.0
    %3549 = vmatpush1.xpose.msra.mxu0 0.0
    %3550 = vmatprep.subr.mxu0 0.0
    %3551 = vmatpush1.xpose.msra.mxu0 0.0
    %3552 = vmatprep.subr.mxu0 0.0
    %3553 = vmatpush1.xpose.msra.mxu0 0.0
    %3554 = vmatprep.subr.mxu0 0.0
    %3555 = vmatpush1.xpose.msra.mxu0 0.0
    %3556 = vmatprep.subr.mxu0 0.0
    %3557 = vmatpush1.xpose.msra.mxu0 0.0
    %3558 = vmatprep.subr.mxu0 0.0
    %3559 = vmatpush1.xpose.msra.mxu0 0.0
    %3560 = vmatprep.subr.mxu0 0.0
    %3561 = vmatpush1.xpose.msra.mxu0 0.0
    %3562 = vmatprep.subr.mxu0 0.0
    %3563 = vmatpush1.xpose.msra.mxu0 0.0
    %3564 = vmatprep.subr.mxu0 0.0
    %3565 = vmatpush1.xpose.msra.mxu0 0.0
    %3566 = vmatprep.subr.mxu0 %v2055
    %3567 = vmatpush1.xpose.msra.mxu0 %v2054
    %3568 = vmatprep.subr.mxu0 %v2005
    %3569 = vmatpush1.xpose.msra.mxu0 %v2004
    %3570 = vmatprep.subr.mxu0 %v1955
    %3571 = vmatpush1.xpose.msra.mxu0 %v1954
    %3572 = vmatprep.subr.mxu0 %v1905
    %3573 = vmatpush1.xpose.msra.mxu0 %v1904
    %3574 = vmatprep.subr.mxu0 0.0
    %3575 = vmatpush2.xpose.msra.mxu0 0.0
    %3576 = vmatprep.subr.mxu0 0.0
    %3577 = vmatpush2.xpose.msra.mxu0 0.0
    %3578 = vmatprep.subr.mxu0 0.0
    %3579 = vmatpush2.xpose.msra.mxu0 0.0
    %3580 = vmatprep.subr.mxu0 0.0
    %3581 = vmatpush2.xpose.msra.mxu0 0.0
    %3582 = vmatprep.subr.mxu0 0.0
    %3583 = vmatpush2.xpose.msra.mxu0 0.0
    %3584 = vmatprep.subr.mxu0 0.0
    %3585 = vmatpush2.xpose.msra.mxu0 0.0
    %3586 = vmatprep.subr.mxu0 0.0
    %3587 = vmatpush2.xpose.msra.mxu0 0.0
    %3588 = vmatprep.subr.mxu0 0.0
    %3589 = vmatpush2.xpose.msra.mxu0 0.0
    %3590 = vmatprep.subr.mxu0 0.0
    %3591 = vmatpush2.xpose.msra.mxu0 0.0
    %3592 = vmatprep.subr.mxu0 0.0
    %3593 = vmatpush2.xpose.msra.mxu0 0.0
    %3594 = vmatprep.subr.mxu0 0.0
    %3595 = vmatpush2.xpose.msra.mxu0 0.0
    %3596 = vmatprep.subr.mxu0 0.0
    %3597 = vmatpush2.xpose.msra.mxu0 0.0
    %3598 = vmatprep.subr.mxu0 0.0
    %3599 = vmatpush2.xpose.msra.mxu0 0.0
    %3600 = vmatprep.subr.mxu0 0.0
    %3601 = vmatpush2.xpose.msra.mxu0 0.0
    %3602 = vmatprep.subr.mxu0 0.0
    %3603 = vmatpush2.xpose.msra.mxu0 0.0
    %3604 = vmatprep.subr.mxu0 0.0
    %3605 = vmatpush2.xpose.msra.mxu0 0.0
    %3606 = vmatprep.mubr.f32.mxu0 %v2242
    %3607 = vmatmul.mubr.f32.gmra.mxu0 %v2240
    %v3608 = vpop.f32.mrf.mxu0
    %v3609 = vadd.f32 %v3539, %v3608
    %v3610 = vpop.f32.mrf.mxu0
    %3611 = vdwg.mxu0
    %3612 = vmatprep.subr.mxu0 0.0
    %3613 = vmatpush1.xpose.msra.mxu0 0.0
    %3614 = vmatprep.subr.mxu0 0.0
    %3615 = vmatpush1.xpose.msra.mxu0 0.0
    %3616 = vmatprep.subr.mxu0 0.0
    %3617 = vmatpush1.xpose.msra.mxu0 0.0
    %3618 = vmatprep.subr.mxu0 0.0
    %3619 = vmatpush1.xpose.msra.mxu0 0.0
    %3620 = vmatprep.subr.mxu0 0.0
    %3621 = vmatpush1.xpose.msra.mxu0 0.0
    %3622 = vmatprep.subr.mxu0 0.0
    %3623 = vmatpush1.xpose.msra.mxu0 0.0
    %3624 = vmatprep.subr.mxu0 0.0
    %3625 = vmatpush1.xpose.msra.mxu0 0.0
    %3626 = vmatprep.subr.mxu0 0.0
    %3627 = vmatpush1.xpose.msra.mxu0 0.0
    %3628 = vmatprep.subr.mxu0 0.0
    %3629 = vmatpush1.xpose.msra.mxu0 0.0
    %3630 = vmatprep.subr.mxu0 0.0
    %3631 = vmatpush1.xpose.msra.mxu0 0.0
    %3632 = vmatprep.subr.mxu0 0.0
    %3633 = vmatpush1.xpose.msra.mxu0 0.0
    %3634 = vmatprep.subr.mxu0 0.0
    %3635 = vmatpush1.xpose.msra.mxu0 0.0
    %3636 = vmatprep.subr.mxu0 %v2057
    %3637 = vmatpush1.xpose.msra.mxu0 %v2056
    %3638 = vmatprep.subr.mxu0 %v2007
    %3639 = vmatpush1.xpose.msra.mxu0 %v2006
    %3640 = vmatprep.subr.mxu0 %v1957
    %3641 = vmatpush1.xpose.msra.mxu0 %v1956
    %3642 = vmatprep.subr.mxu0 %v1907
    %3643 = vmatpush1.xpose.msra.mxu0 %v1906
    %3644 = vmatprep.subr.mxu0 0.0
    %3645 = vmatpush2.xpose.msra.mxu0 0.0
    %3646 = vmatprep.subr.mxu0 0.0
    %3647 = vmatpush2.xpose.msra.mxu0 0.0
    %3648 = vmatprep.subr.mxu0 0.0
    %3649 = vmatpush2.xpose.msra.mxu0 0.0
    %3650 = vmatprep.subr.mxu0 0.0
    %3651 = vmatpush2.xpose.msra.mxu0 0.0
    %3652 = vmatprep.subr.mxu0 0.0
    %3653 = vmatpush2.xpose.msra.mxu0 0.0
    %3654 = vmatprep.subr.mxu0 0.0
    %3655 = vmatpush2.xpose.msra.mxu0 0.0
    %3656 = vmatprep.subr.mxu0 0.0
    %3657 = vmatpush2.xpose.msra.mxu0 0.0
    %3658 = vmatprep.subr.mxu0 0.0
    %3659 = vmatpush2.xpose.msra.mxu0 0.0
    %3660 = vmatprep.subr.mxu0 0.0
    %3661 = vmatpush2.xpose.msra.mxu0 0.0
    %3662 = vmatprep.subr.mxu0 0.0
    %3663 = vmatpush2.xpose.msra.mxu0 0.0
    %3664 = vmatprep.subr.mxu0 0.0
    %3665 = vmatpush2.xpose.msra.mxu0 0.0
    %3666 = vmatprep.subr.mxu0 0.0
    %3667 = vmatpush2.xpose.msra.mxu0 0.0
    %3668 = vmatprep.subr.mxu0 0.0
    %3669 = vmatpush2.xpose.msra.mxu0 0.0
    %3670 = vmatprep.subr.mxu0 0.0
    %3671 = vmatpush2.xpose.msra.mxu0 0.0
    %3672 = vmatprep.subr.mxu0 0.0
    %3673 = vmatpush2.xpose.msra.mxu0 0.0
    %3674 = vmatprep.subr.mxu0 0.0
    %3675 = vmatpush2.xpose.msra.mxu0 0.0
    %3676 = vmatprep.mubr.f32.mxu0 %v2258
    %3677 = vmatmul.mubr.f32.gmra.mxu0 %v2250
    %v3678 = vpop.f32.mrf.mxu0
    %v3679 = vadd.f32 %v3609, %v3678
    %v3680 = vpop.f32.mrf.mxu0
    %3681 = vdwg.mxu0
    %3682 = vmatprep.subr.mxu0 0.0
    %3683 = vmatpush1.xpose.msra.mxu0 0.0
    %3684 = vmatprep.subr.mxu0 0.0
    %3685 = vmatpush1.xpose.msra.mxu0 0.0
    %3686 = vmatprep.subr.mxu0 0.0
    %3687 = vmatpush1.xpose.msra.mxu0 0.0
    %3688 = vmatprep.subr.mxu0 0.0
    %3689 = vmatpush1.xpose.msra.mxu0 0.0
    %3690 = vmatprep.subr.mxu0 0.0
    %3691 = vmatpush1.xpose.msra.mxu0 0.0
    %3692 = vmatprep.subr.mxu0 0.0
    %3693 = vmatpush1.xpose.msra.mxu0 0.0
    %3694 = vmatprep.subr.mxu0 0.0
    %3695 = vmatpush1.xpose.msra.mxu0 0.0
    %3696 = vmatprep.subr.mxu0 0.0
    %3697 = vmatpush1.xpose.msra.mxu0 0.0
    %3698 = vmatprep.subr.mxu0 0.0
    %3699 = vmatpush1.xpose.msra.mxu0 0.0
    %3700 = vmatprep.subr.mxu0 0.0
    %3701 = vmatpush1.xpose.msra.mxu0 0.0
    %3702 = vmatprep.subr.mxu0 0.0
    %3703 = vmatpush1.xpose.msra.mxu0 0.0
    %3704 = vmatprep.subr.mxu0 0.0
    %3705 = vmatpush1.xpose.msra.mxu0 0.0
    %3706 = vmatprep.subr.mxu0 %v2059
    %3707 = vmatpush1.xpose.msra.mxu0 %v2058
    %3708 = vmatprep.subr.mxu0 %v2009
    %3709 = vmatpush1.xpose.msra.mxu0 %v2008
    %3710 = vmatprep.subr.mxu0 %v1959
    %3711 = vmatpush1.xpose.msra.mxu0 %v1958
    %3712 = vmatprep.subr.mxu0 %v1909
    %3713 = vmatpush1.xpose.msra.mxu0 %v1908
    %3714 = vmatprep.subr.mxu0 0.0
    %3715 = vmatpush2.xpose.msra.mxu0 0.0
    %3716 = vmatprep.subr.mxu0 0.0
    %3717 = vmatpush2.xpose.msra.mxu0 0.0
    %3718 = vmatprep.subr.mxu0 0.0
    %3719 = vmatpush2.xpose.msra.mxu0 0.0
    %3720 = vmatprep.subr.mxu0 0.0
    %3721 = vmatpush2.xpose.msra.mxu0 0.0
    %3722 = vmatprep.subr.mxu0 0.0
    %3723 = vmatpush2.xpose.msra.mxu0 0.0
    %3724 = vmatprep.subr.mxu0 0.0
    %3725 = vmatpush2.xpose.msra.mxu0 0.0
    %3726 = vmatprep.subr.mxu0 0.0
    %3727 = vmatpush2.xpose.msra.mxu0 0.0
    %3728 = vmatprep.subr.mxu0 0.0
    %3729 = vmatpush2.xpose.msra.mxu0 0.0
    %3730 = vmatprep.subr.mxu0 0.0
    %3731 = vmatpush2.xpose.msra.mxu0 0.0
    %3732 = vmatprep.subr.mxu0 0.0
    %3733 = vmatpush2.xpose.msra.mxu0 0.0
    %3734 = vmatprep.subr.mxu0 0.0
    %3735 = vmatpush2.xpose.msra.mxu0 0.0
    %3736 = vmatprep.subr.mxu0 0.0
    %3737 = vmatpush2.xpose.msra.mxu0 0.0
    %3738 = vmatprep.subr.mxu0 0.0
    %3739 = vmatpush2.xpose.msra.mxu0 0.0
    %3740 = vmatprep.subr.mxu0 0.0
    %3741 = vmatpush2.xpose.msra.mxu0 0.0
    %3742 = vmatprep.subr.mxu0 0.0
    %3743 = vmatpush2.xpose.msra.mxu0 0.0
    %3744 = vmatprep.subr.mxu0 0.0
    %3745 = vmatpush2.xpose.msra.mxu0 0.0
    %3746 = vmatprep.mubr.f32.mxu0 %v2259
    %3747 = vmatmul.mubr.f32.gmra.mxu0 %v2257
    %v3748 = vpop.f32.mrf.mxu0
    %v3749 = vadd.f32 %v3679, %v3748
    %v3750 = vpop.f32.mrf.mxu0
    %3751 = vdwg.mxu0
    %3752 = vmatprep.subr.mxu0 0.0
    %3753 = vmatpush1.xpose.msra.mxu0 0.0
    %3754 = vmatprep.subr.mxu0 0.0
    %3755 = vmatpush1.xpose.msra.mxu0 0.0
    %3756 = vmatprep.subr.mxu0 0.0
    %3757 = vmatpush1.xpose.msra.mxu0 0.0
    %3758 = vmatprep.subr.mxu0 0.0
    %3759 = vmatpush1.xpose.msra.mxu0 0.0
    %3760 = vmatprep.subr.mxu0 0.0
    %3761 = vmatpush1.xpose.msra.mxu0 0.0
    %3762 = vmatprep.subr.mxu0 0.0
    %3763 = vmatpush1.xpose.msra.mxu0 0.0
    %3764 = vmatprep.subr.mxu0 0.0
    %3765 = vmatpush1.xpose.msra.mxu0 0.0
    %3766 = vmatprep.subr.mxu0 0.0
    %3767 = vmatpush1.xpose.msra.mxu0 0.0
    %3768 = vmatprep.subr.mxu0 0.0
    %3769 = vmatpush1.xpose.msra.mxu0 0.0
    %3770 = vmatprep.subr.mxu0 0.0
    %3771 = vmatpush1.xpose.msra.mxu0 0.0
    %3772 = vmatprep.subr.mxu0 0.0
    %3773 = vmatpush1.xpose.msra.mxu0 0.0
    %3774 = vmatprep.subr.mxu0 0.0
    %3775 = vmatpush1.xpose.msra.mxu0 0.0
    %3776 = vmatprep.subr.mxu0 %v2061
    %3777 = vmatpush1.xpose.msra.mxu0 %v2060
    %3778 = vmatprep.subr.mxu0 %v2011
    %3779 = vmatpush1.xpose.msra.mxu0 %v2010
    %3780 = vmatprep.subr.mxu0 %v1961
    %3781 = vmatpush1.xpose.msra.mxu0 %v1960
    %3782 = vmatprep.subr.mxu0 %v1911
    %3783 = vmatpush1.xpose.msra.mxu0 %v1910
    %3784 = vmatprep.subr.mxu0 0.0
    %3785 = vmatpush2.xpose.msra.mxu0 0.0
    %3786 = vmatprep.subr.mxu0 0.0
    %3787 = vmatpush2.xpose.msra.mxu0 0.0
    %3788 = vmatprep.subr.mxu0 0.0
    %3789 = vmatpush2.xpose.msra.mxu0 0.0
    %3790 = vmatprep.subr.mxu0 0.0
    %3791 = vmatpush2.xpose.msra.mxu0 0.0
    %3792 = vmatprep.subr.mxu0 0.0
    %3793 = vmatpush2.xpose.msra.mxu0 0.0
    %3794 = vmatprep.subr.mxu0 0.0
    %3795 = vmatpush2.xpose.msra.mxu0 0.0
    %3796 = vmatprep.subr.mxu0 0.0
    %3797 = vmatpush2.xpose.msra.mxu0 0.0
    %3798 = vmatprep.subr.mxu0 0.0
    %3799 = vmatpush2.xpose.msra.mxu0 0.0
    %3800 = vmatprep.subr.mxu0 0.0
    %3801 = vmatpush2.xpose.msra.mxu0 0.0
    %3802 = vmatprep.subr.mxu0 0.0
    %3803 = vmatpush2.xpose.msra.mxu0 0.0
    %3804 = vmatprep.subr.mxu0 0.0
    %3805 = vmatpush2.xpose.msra.mxu0 0.0
    %3806 = vmatprep.subr.mxu0 0.0
    %3807 = vmatpush2.xpose.msra.mxu0 0.0
    %3808 = vmatprep.subr.mxu0 0.0
    %3809 = vmatpush2.xpose.msra.mxu0 0.0
    %3810 = vmatprep.subr.mxu0 0.0
    %3811 = vmatpush2.xpose.msra.mxu0 0.0
    %3812 = vmatprep.subr.mxu0 0.0
    %3813 = vmatpush2.xpose.msra.mxu0 0.0
    %3814 = vmatprep.subr.mxu0 0.0
    %3815 = vmatpush2.xpose.msra.mxu0 0.0
    %3816 = vmatprep.mubr.f32.mxu0 %v2275
    %3817 = vmatmul.mubr.f32.gmra.mxu0 %v2267
    %v3818 = vpop.f32.mrf.mxu0
    %v3819 = vadd.f32 %v3749, %v3818
    %v3820 = vpop.f32.mrf.mxu0
    %3821 = vdwg.mxu0
    %3822 = vmatprep.subr.mxu0 0.0
    %3823 = vmatpush1.xpose.msra.mxu0 0.0
    %3824 = vmatprep.subr.mxu0 0.0
    %3825 = vmatpush1.xpose.msra.mxu0 0.0
    %3826 = vmatprep.subr.mxu0 0.0
    %3827 = vmatpush1.xpose.msra.mxu0 0.0
    %3828 = vmatprep.subr.mxu0 0.0
    %3829 = vmatpush1.xpose.msra.mxu0 0.0
    %3830 = vmatprep.subr.mxu0 0.0
    %3831 = vmatpush1.xpose.msra.mxu0 0.0
    %3832 = vmatprep.subr.mxu0 0.0
    %3833 = vmatpush1.xpose.msra.mxu0 0.0
    %3834 = vmatprep.subr.mxu0 0.0
    %3835 = vmatpush1.xpose.msra.mxu0 0.0
    %3836 = vmatprep.subr.mxu0 0.0
    %3837 = vmatpush1.xpose.msra.mxu0 0.0
    %3838 = vmatprep.subr.mxu0 0.0
    %3839 = vmatpush1.xpose.msra.mxu0 0.0
    %3840 = vmatprep.subr.mxu0 0.0
    %3841 = vmatpush1.xpose.msra.mxu0 0.0
    %3842 = vmatprep.subr.mxu0 0.0
    %3843 = vmatpush1.xpose.msra.mxu0 0.0
    %3844 = vmatprep.subr.mxu0 0.0
    %3845 = vmatpush1.xpose.msra.mxu0 0.0
    %3846 = vmatprep.subr.mxu0 %v2063
    %3847 = vmatpush1.xpose.msra.mxu0 %v2062
    %3848 = vmatprep.subr.mxu0 %v2013
    %3849 = vmatpush1.xpose.msra.mxu0 %v2012
    %3850 = vmatprep.subr.mxu0 %v1963
    %3851 = vmatpush1.xpose.msra.mxu0 %v1962
    %3852 = vmatprep.subr.mxu0 %v1913
    %3853 = vmatpush1.xpose.msra.mxu0 %v1912
    %3854 = vmatprep.subr.mxu0 0.0
    %3855 = vmatpush2.xpose.msra.mxu0 0.0
    %3856 = vmatprep.subr.mxu0 0.0
    %3857 = vmatpush2.xpose.msra.mxu0 0.0
    %3858 = vmatprep.subr.mxu0 0.0
    %3859 = vmatpush2.xpose.msra.mxu0 0.0
    %3860 = vmatprep.subr.mxu0 0.0
    %3861 = vmatpush2.xpose.msra.mxu0 0.0
    %3862 = vmatprep.subr.mxu0 0.0
    %3863 = vmatpush2.xpose.msra.mxu0 0.0
    %3864 = vmatprep.subr.mxu0 0.0
    %3865 = vmatpush2.xpose.msra.mxu0 0.0
    %3866 = vmatprep.subr.mxu0 0.0
    %3867 = vmatpush2.xpose.msra.mxu0 0.0
    %3868 = vmatprep.subr.mxu0 0.0
    %3869 = vmatpush2.xpose.msra.mxu0 0.0
    %3870 = vmatprep.subr.mxu0 0.0
    %3871 = vmatpush2.xpose.msra.mxu0 0.0
    %3872 = vmatprep.subr.mxu0 0.0
    %3873 = vmatpush2.xpose.msra.mxu0 0.0
    %3874 = vmatprep.subr.mxu0 0.0
    %3875 = vmatpush2.xpose.msra.mxu0 0.0
    %3876 = vmatprep.subr.mxu0 0.0
    %3877 = vmatpush2.xpose.msra.mxu0 0.0
    %3878 = vmatprep.subr.mxu0 0.0
    %3879 = vmatpush2.xpose.msra.mxu0 0.0
    %3880 = vmatprep.subr.mxu0 0.0
    %3881 = vmatpush2.xpose.msra.mxu0 0.0
    %3882 = vmatprep.subr.mxu0 0.0
    %3883 = vmatpush2.xpose.msra.mxu0 0.0
    %3884 = vmatprep.subr.mxu0 0.0
    %3885 = vmatpush2.xpose.msra.mxu0 0.0
    %3886 = vmatprep.mubr.f32.mxu0 %v2276
    %3887 = vmatmul.mubr.f32.gmra.mxu0 %v2274
    %v3888 = vpop.f32.mrf.mxu0
    %v3889 = vadd.f32 %v3819, %v3888
    %v3890 = vpop.f32.mrf.mxu0
    %3891 = vdwg.mxu0
    %3892 = vmatprep.subr.mxu0 0.0
    %3893 = vmatpush1.xpose.msra.mxu0 0.0
    %3894 = vmatprep.subr.mxu0 0.0
    %3895 = vmatpush1.xpose.msra.mxu0 0.0
    %3896 = vmatprep.subr.mxu0 0.0
    %3897 = vmatpush1.xpose.msra.mxu0 0.0
    %3898 = vmatprep.subr.mxu0 0.0
    %3899 = vmatpush1.xpose.msra.mxu0 0.0
    %3900 = vmatprep.subr.mxu0 0.0
    %3901 = vmatpush1.xpose.msra.mxu0 0.0
    %3902 = vmatprep.subr.mxu0 0.0
    %3903 = vmatpush1.xpose.msra.mxu0 0.0
    %3904 = vmatprep.subr.mxu0 0.0
    %3905 = vmatpush1.xpose.msra.mxu0 0.0
    %3906 = vmatprep.subr.mxu0 0.0
    %3907 = vmatpush1.xpose.msra.mxu0 0.0
    %3908 = vmatprep.subr.mxu0 0.0
    %3909 = vmatpush1.xpose.msra.mxu0 0.0
    %3910 = vmatprep.subr.mxu0 0.0
    %3911 = vmatpush1.xpose.msra.mxu0 0.0
    %3912 = vmatprep.subr.mxu0 0.0
    %3913 = vmatpush1.xpose.msra.mxu0 0.0
    %3914 = vmatprep.subr.mxu0 0.0
    %3915 = vmatpush1.xpose.msra.mxu0 0.0
    %3916 = vmatprep.subr.mxu0 %v2065
    %3917 = vmatpush1.xpose.msra.mxu0 %v2064
    %3918 = vmatprep.subr.mxu0 %v2015
    %3919 = vmatpush1.xpose.msra.mxu0 %v2014
    %3920 = vmatprep.subr.mxu0 %v1965
    %3921 = vmatpush1.xpose.msra.mxu0 %v1964
    %3922 = vmatprep.subr.mxu0 %v1915
    %3923 = vmatpush1.xpose.msra.mxu0 %v1914
    %3924 = vmatprep.subr.mxu0 0.0
    %3925 = vmatpush2.xpose.msra.mxu0 0.0
    %3926 = vmatprep.subr.mxu0 0.0
    %3927 = vmatpush2.xpose.msra.mxu0 0.0
    %3928 = vmatprep.subr.mxu0 0.0
    %3929 = vmatpush2.xpose.msra.mxu0 0.0
    %3930 = vmatprep.subr.mxu0 0.0
    %3931 = vmatpush2.xpose.msra.mxu0 0.0
    %3932 = vmatprep.subr.mxu0 0.0
    %3933 = vmatpush2.xpose.msra.mxu0 0.0
    %3934 = vmatprep.subr.mxu0 0.0
    %3935 = vmatpush2.xpose.msra.mxu0 0.0
    %3936 = vmatprep.subr.mxu0 0.0
    %3937 = vmatpush2.xpose.msra.mxu0 0.0
    %3938 = vmatprep.subr.mxu0 0.0
    %3939 = vmatpush2.xpose.msra.mxu0 0.0
    %3940 = vmatprep.subr.mxu0 0.0
    %3941 = vmatpush2.xpose.msra.mxu0 0.0
    %3942 = vmatprep.subr.mxu0 0.0
    %3943 = vmatpush2.xpose.msra.mxu0 0.0
    %3944 = vmatprep.subr.mxu0 0.0
    %3945 = vmatpush2.xpose.msra.mxu0 0.0
    %3946 = vmatprep.subr.mxu0 0.0
    %3947 = vmatpush2.xpose.msra.mxu0 0.0
    %3948 = vmatprep.subr.mxu0 0.0
    %3949 = vmatpush2.xpose.msra.mxu0 0.0
    %3950 = vmatprep.subr.mxu0 0.0
    %3951 = vmatpush2.xpose.msra.mxu0 0.0
    %3952 = vmatprep.subr.mxu0 0.0
    %3953 = vmatpush2.xpose.msra.mxu0 0.0
    %3954 = vmatprep.subr.mxu0 0.0
    %3955 = vmatpush2.xpose.msra.mxu0 0.0
    %3956 = vmatprep.mubr.f32.mxu0 %v2292
    %3957 = vmatmul.mubr.f32.gmra.mxu0 %v2284
    %v3958 = vpop.f32.mrf.mxu0
    %v3959 = vadd.f32 %v3889, %v3958
    %v3960 = vpop.f32.mrf.mxu0
    %3961 = vdwg.mxu0
    %3962 = vmatprep.subr.mxu0 0.0
    %3963 = vmatpush1.xpose.msra.mxu0 0.0
    %3964 = vmatprep.subr.mxu0 0.0
    %3965 = vmatpush1.xpose.msra.mxu0 0.0
    %3966 = vmatprep.subr.mxu0 0.0
    %3967 = vmatpush1.xpose.msra.mxu0 0.0
    %3968 = vmatprep.subr.mxu0 0.0
    %3969 = vmatpush1.xpose.msra.mxu0 0.0
    %3970 = vmatprep.subr.mxu0 0.0
    %3971 = vmatpush1.xpose.msra.mxu0 0.0
    %3972 = vmatprep.subr.mxu0 0.0
    %3973 = vmatpush1.xpose.msra.mxu0 0.0
    %3974 = vmatprep.subr.mxu0 0.0
    %3975 = vmatpush1.xpose.msra.mxu0 0.0
    %3976 = vmatprep.subr.mxu0 0.0
    %3977 = vmatpush1.xpose.msra.mxu0 0.0
    %3978 = vmatprep.subr.mxu0 0.0
    %3979 = vmatpush1.xpose.msra.mxu0 0.0
    %3980 = vmatprep.subr.mxu0 0.0
    %3981 = vmatpush1.xpose.msra.mxu0 0.0
    %3982 = vmatprep.subr.mxu0 0.0
    %3983 = vmatpush1.xpose.msra.mxu0 0.0
    %3984 = vmatprep.subr.mxu0 0.0
    %3985 = vmatpush1.xpose.msra.mxu0 0.0
    %3986 = vmatprep.subr.mxu0 %v2067
    %3987 = vmatpush1.xpose.msra.mxu0 %v2066
    %3988 = vmatprep.subr.mxu0 %v2017
    %3989 = vmatpush1.xpose.msra.mxu0 %v2016
    %3990 = vmatprep.subr.mxu0 %v1967
    %3991 = vmatpush1.xpose.msra.mxu0 %v1966
    %3992 = vmatprep.subr.mxu0 %v1917
    %3993 = vmatpush1.xpose.msra.mxu0 %v1916
    %3994 = vmatprep.subr.mxu0 0.0
    %3995 = vmatpush2.xpose.msra.mxu0 0.0
    %3996 = vmatprep.subr.mxu0 0.0
    %3997 = vmatpush2.xpose.msra.mxu0 0.0
    %3998 = vmatprep.subr.mxu0 0.0
    %3999 = vmatpush2.xpose.msra.mxu0 0.0
    %4000 = vmatprep.subr.mxu0 0.0
    %4001 = vmatpush2.xpose.msra.mxu0 0.0
    %4002 = vmatprep.subr.mxu0 0.0
    %4003 = vmatpush2.xpose.msra.mxu0 0.0
    %4004 = vmatprep.subr.mxu0 0.0
    %4005 = vmatpush2.xpose.msra.mxu0 0.0
    %4006 = vmatprep.subr.mxu0 0.0
    %4007 = vmatpush2.xpose.msra.mxu0 0.0
    %4008 = vmatprep.subr.mxu0 0.0
    %4009 = vmatpush2.xpose.msra.mxu0 0.0
    %4010 = vmatprep.subr.mxu0 0.0
    %4011 = vmatpush2.xpose.msra.mxu0 0.0
    %4012 = vmatprep.subr.mxu0 0.0
    %4013 = vmatpush2.xpose.msra.mxu0 0.0
    %4014 = vmatprep.subr.mxu0 0.0
    %4015 = vmatpush2.xpose.msra.mxu0 0.0
    %4016 = vmatprep.subr.mxu0 0.0
    %4017 = vmatpush2.xpose.msra.mxu0 0.0
    %4018 = vmatprep.subr.mxu0 0.0
    %4019 = vmatpush2.xpose.msra.mxu0 0.0
    %4020 = vmatprep.subr.mxu0 0.0
    %4021 = vmatpush2.xpose.msra.mxu0 0.0
    %4022 = vmatprep.subr.mxu0 0.0
    %4023 = vmatpush2.xpose.msra.mxu0 0.0
    %4024 = vmatprep.subr.mxu0 0.0
    %4025 = vmatpush2.xpose.msra.mxu0 0.0
    %4026 = vmatprep.mubr.f32.mxu0 %v2293
    %4027 = vmatmul.mubr.f32.gmra.mxu0 %v2291
    %v4028 = vpop.f32.mrf.mxu0
    %v4029 = vadd.f32 %v3959, %v4028
    %v4030 = vpop.f32.mrf.mxu0
    %4031 = vdwg.mxu0
    %4032 = vmatprep.subr.mxu0 0.0
    %4033 = vmatpush1.xpose.msra.mxu0 0.0
    %4034 = vmatprep.subr.mxu0 0.0
    %4035 = vmatpush1.xpose.msra.mxu0 0.0
    %4036 = vmatprep.subr.mxu0 0.0
    %4037 = vmatpush1.xpose.msra.mxu0 0.0
    %4038 = vmatprep.subr.mxu0 0.0
    %4039 = vmatpush1.xpose.msra.mxu0 0.0
    %4040 = vmatprep.subr.mxu0 0.0
    %4041 = vmatpush1.xpose.msra.mxu0 0.0
    %4042 = vmatprep.subr.mxu0 0.0
    %4043 = vmatpush1.xpose.msra.mxu0 0.0
    %4044 = vmatprep.subr.mxu0 0.0
    %4045 = vmatpush1.xpose.msra.mxu0 0.0
    %4046 = vmatprep.subr.mxu0 0.0
    %4047 = vmatpush1.xpose.msra.mxu0 0.0
    %4048 = vmatprep.subr.mxu0 0.0
    %4049 = vmatpush1.xpose.msra.mxu0 0.0
    %4050 = vmatprep.subr.mxu0 0.0
    %4051 = vmatpush1.xpose.msra.mxu0 0.0
    %4052 = vmatprep.subr.mxu0 0.0
    %4053 = vmatpush1.xpose.msra.mxu0 0.0
    %4054 = vmatprep.subr.mxu0 0.0
    %4055 = vmatpush1.xpose.msra.mxu0 0.0
    %4056 = vmatprep.subr.mxu0 %v2069
    %4057 = vmatpush1.xpose.msra.mxu0 %v2068
    %4058 = vmatprep.subr.mxu0 %v2019
    %4059 = vmatpush1.xpose.msra.mxu0 %v2018
    %4060 = vmatprep.subr.mxu0 %v1969
    %4061 = vmatpush1.xpose.msra.mxu0 %v1968
    %4062 = vmatprep.subr.mxu0 %v1919
    %4063 = vmatpush1.xpose.msra.mxu0 %v1918
    %4064 = vmatprep.subr.mxu0 0.0
    %4065 = vmatpush2.xpose.msra.mxu0 0.0
    %4066 = vmatprep.subr.mxu0 0.0
    %4067 = vmatpush2.xpose.msra.mxu0 0.0
    %4068 = vmatprep.subr.mxu0 0.0
    %4069 = vmatpush2.xpose.msra.mxu0 0.0
    %4070 = vmatprep.subr.mxu0 0.0
    %4071 = vmatpush2.xpose.msra.mxu0 0.0
    %4072 = vmatprep.subr.mxu0 0.0
    %4073 = vmatpush2.xpose.msra.mxu0 0.0
    %4074 = vmatprep.subr.mxu0 0.0
    %4075 = vmatpush2.xpose.msra.mxu0 0.0
    %4076 = vmatprep.subr.mxu0 0.0
    %4077 = vmatpush2.xpose.msra.mxu0 0.0
    %4078 = vmatprep.subr.mxu0 0.0
    %4079 = vmatpush2.xpose.msra.mxu0 0.0
    %4080 = vmatprep.subr.mxu0 0.0
    %4081 = vmatpush2.xpose.msra.mxu0 0.0
    %4082 = vmatprep.subr.mxu0 0.0
    %4083 = vmatpush2.xpose.msra.mxu0 0.0
    %4084 = vmatprep.subr.mxu0 0.0
    %4085 = vmatpush2.xpose.msra.mxu0 0.0
    %4086 = vmatprep.subr.mxu0 0.0
    %4087 = vmatpush2.xpose.msra.mxu0 0.0
    %4088 = vmatprep.subr.mxu0 0.0
    %4089 = vmatpush2.xpose.msra.mxu0 0.0
    %4090 = vmatprep.subr.mxu0 0.0
    %4091 = vmatpush2.xpose.msra.mxu0 0.0
    %4092 = vmatprep.subr.mxu0 0.0
    %4093 = vmatpush2.xpose.msra.mxu0 0.0
    %4094 = vmatprep.subr.mxu0 0.0
    %4095 = vmatpush2.xpose.msra.mxu0 0.0
    %4096 = vmatprep.mubr.f32.mxu0 %v2301
    %4097 = vmatmul.mubr.f32.gmra.mxu0 %v2300
    %v4098 = vpop.f32.mrf.mxu0
    %v4099 = vadd.f32 %v4029, %v4098
    %v4100 = vpop.f32.mrf.mxu0
    %4101 = vdwg.mxu0
    %v4102 = vld [vmem:[%s5] sm:$0xff]
    %v4103 = vld [vmem:[%s5 + $0x8] sm:$0xff]
    %v4104 = vld [vmem:[%s5 + $0x10] sm:$0xff]
    %v4105 = vld [vmem:[%s5 + $0x18] sm:$0xff]
    %v4106 = vld [vmem:[%s5 + $0x20] sm:$0xff]
    %v4107 = vld [vmem:[%s5 + $0x28] sm:$0xff]
    %v4108 = vld [vmem:[%s5 + $0x30] sm:$0xff]
    %v4109 = vld [vmem:[%s5 + $0x38] sm:$0xff]
    %v4110 = vld [vmem:[%s5 + $0x40] sm:$0xff]
    %v4111 = vld [vmem:[%s5 + $0x48] sm:$0xff]
    %v4112 = vld [vmem:[%s5 + $0x50] sm:$0xff]
    %v4113 = vld [vmem:[%s5 + $0x58] sm:$0xff]
    %v4114 = vld [vmem:[%s6] sm:$0x1]
    %v4116 = vlaneseq
    %v4117 = vshrl.u32 %v4116, 7
    %v4118 = vsub.s32 0, %v4117
    %v4119 = vrot.slane %v4114, %v4118
    %vm4121 = vcmask 261120
    %v4123 = vsel %vm4121, %v4099, 0
    %v4126 = vsel %vm4121, %v4102, 0
    %v4129 = vsel %vm4121, %v4103, 0
    %v4132 = vsel %vm4121, %v4104, 0
    %v4135 = vsel %vm4121, %v4105, 0
    %v4138 = vsel %vm4121, %v4106, 0
    %v4141 = vsel %vm4121, %v4107, 0
    %v4144 = vsel %vm4121, %v4108, 0
    %v4147 = vsel %vm4121, %v4109, 0
    %v4150 = vsel %vm4121, %v4110, 0
    %v4153 = vsel %vm4121, %v4111, 0
    %v4156 = vsel %vm4121, %v4112, 0
    %v4159 = vsel %vm4121, %v4113, 0
    %4161 = vmatprep.subr.mxu0 0.0
    %4162 = vmatpush1.xpose.msra.mxu0 0.0
    %4163 = vmatprep.subr.mxu0 0.0
    %4164 = vmatpush1.xpose.msra.mxu0 0.0
    %4165 = vmatprep.subr.mxu0 0.0
    %4166 = vmatpush1.xpose.msra.mxu0 0.0
    %4167 = vmatprep.subr.mxu0 0.0
    %4168 = vmatpush1.xpose.msra.mxu0 0.0
    %4169 = vmatprep.subr.mxu0 0.0
    %4170 = vmatpush1.xpose.msra.mxu0 %v4159
    %4171 = vmatprep.subr.mxu0 0.0
    %4172 = vmatpush1.xpose.msra.mxu0 %v4156
    %4173 = vmatprep.subr.mxu0 0.0
    %4174 = vmatpush1.xpose.msra.mxu0 %v4153
    %4175 = vmatprep.subr.mxu0 0.0
    %4176 = vmatpush1.xpose.msra.mxu0 %v4150
    %4177 = vmatprep.subr.mxu0 0.0
    %4178 = vmatpush1.xpose.msra.mxu0 %v4147
    %4179 = vmatprep.subr.mxu0 0.0
    %4180 = vmatpush1.xpose.msra.mxu0 %v4144
    %4181 = vmatprep.subr.mxu0 0.0
    %4182 = vmatpush1.xpose.msra.mxu0 %v4141
    %4183 = vmatprep.subr.mxu0 0.0
    %4184 = vmatpush1.xpose.msra.mxu0 %v4138
    %4185 = vmatprep.subr.mxu0 0.0
    %4186 = vmatpush1.xpose.msra.mxu0 %v4135
    %4187 = vmatprep.subr.mxu0 0.0
    %4188 = vmatpush1.xpose.msra.mxu0 %v4132
    %4189 = vmatprep.subr.mxu0 0.0
    %4190 = vmatpush1.xpose.msra.mxu0 %v4129
    %4191 = vmatprep.subr.mxu0 0.0
    %4192 = vmatpush1.xpose.msra.mxu0 %v4126
    %4193 = vmatprep.subr.mxu0 0.0
    %4194 = vmatpush2.xpose.msra.mxu0 0.0
    %4195 = vmatprep.subr.mxu0 0.0
    %4196 = vmatpush2.xpose.msra.mxu0 0.0
    %4197 = vmatprep.subr.mxu0 0.0
    %4198 = vmatpush2.xpose.msra.mxu0 0.0
    %4199 = vmatprep.subr.mxu0 0.0
    %4200 = vmatpush2.xpose.msra.mxu0 0.0
    %4201 = vmatprep.subr.mxu0 0.0
    %4202 = vmatpush2.xpose.msra.mxu0 0.0
    %4203 = vmatprep.subr.mxu0 0.0
    %4204 = vmatpush2.xpose.msra.mxu0 0.0
    %4205 = vmatprep.subr.mxu0 0.0
    %4206 = vmatpush2.xpose.msra.mxu0 0.0
    %4207 = vmatprep.subr.mxu0 0.0
    %4208 = vmatpush2.xpose.msra.mxu0 0.0
    %4209 = vmatprep.subr.mxu0 0.0
    %4210 = vmatpush2.xpose.msra.mxu0 0.0
    %4211 = vmatprep.subr.mxu0 0.0
    %4212 = vmatpush2.xpose.msra.mxu0 0.0
    %4213 = vmatprep.subr.mxu0 0.0
    %4214 = vmatpush2.xpose.msra.mxu0 0.0
    %4215 = vmatprep.subr.mxu0 0.0
    %4216 = vmatpush2.xpose.msra.mxu0 0.0
    %4217 = vmatprep.subr.mxu0 0.0
    %4218 = vmatpush2.xpose.msra.mxu0 0.0
    %4219 = vmatprep.subr.mxu0 0.0
    %4220 = vmatpush2.xpose.msra.mxu0 0.0
    %4221 = vmatprep.subr.mxu0 0.0
    %4222 = vmatpush2.xpose.msra.mxu0 0.0
    %4223 = vmatprep.subr.mxu0 0.0
    %4224 = vmatpush2.xpose.msra.mxu0 0.0
    %4225 = vmatprep.mubr.f32.mxu0 0.0
    %4226 = vmatmul.mubr.f32.gmra.mxu0 %v4123
    %v4227 = vpop.f32.mrf.mxu0
    %v4228 = vadd.f32 %v4119, %v4227
    %v4229 = vpop.f32.mrf.mxu0
    %4230 = vdwg.mxu0
    %v4231 = vxor.u32 %v4228, 2147483648
    %v4232 = vmul.f32 %v4231, 1.442695
    %v4233 = vpow.pop %v4232
    %v4234 = vadd.f32 %v4233, 1.0
    %v4235 = vrcp.pop %v4234
    %v4236 = vmul.f32 1.0, %v4235
    %v4237 = vtanh.pop %v4228
    %4239 = vrot.lane.b32.xlu0 %v4237, 96
    %v4240 = vpop.permute.xlu0 %4239
    %v4242 = vmul.f32 %v4236, %v4240
    %v4243 = vtanh.pop %v4242
    %4245 = vrot.lane.b32.xlu0 %v4243, 64
    %v4246 = vpop.permute.xlu0 %4245
    %v4248 = vmul.f32 %v4236, %v4246
    %v4249 = vld [vmem:[%s7] sm:$0xff]
    %v4250 = vld [vmem:[%s8] sm:$0x1]
    %v4252 = vlaneseq
    %v4253 = vshrl.u32 %v4252, 7
    %v4254 = vsub.s32 0, %v4253
    %v4255 = vrot.slane %v4250, %v4254
    %4258 = vrot.lane.b32.xlu0 %v4248, 64
    %v4259 = vpop.permute.xlu0 %4258
    %v4260 = vsel %vm4121, %v4259, 0
    %v4263 = vsel %vm4121, %v4249, 0
    %4265 = vmatprep.subr.mxu0 0.0
    %4266 = vmatpush1.xpose.msra.mxu0 0.0
    %4267 = vmatprep.subr.mxu0 0.0
    %4268 = vmatpush1.xpose.msra.mxu0 0.0
    %4269 = vmatprep.subr.mxu0 0.0
    %4270 = vmatpush1.xpose.msra.mxu0 0.0
    %4271 = vmatprep.subr.mxu0 0.0
    %4272 = vmatpush1.xpose.msra.mxu0 0.0
    %4273 = vmatprep.subr.mxu0 0.0
    %4274 = vmatpush1.xpose.msra.mxu0 0.0
    %4275 = vmatprep.subr.mxu0 0.0
    %4276 = vmatpush1.xpose.msra.mxu0 0.0
    %4277 = vmatprep.subr.mxu0 0.0
    %4278 = vmatpush1.xpose.msra.mxu0 0.0
    %4279 = vmatprep.subr.mxu0 0.0
    %4280 = vmatpush1.xpose.msra.mxu0 0.0
    %4281 = vmatprep.subr.mxu0 0.0
    %4282 = vmatpush1.xpose.msra.mxu0 0.0
    %4283 = vmatprep.subr.mxu0 0.0
    %4284 = vmatpush1.xpose.msra.mxu0 0.0
    %4285 = vmatprep.subr.mxu0 0.0
    %4286 = vmatpush1.xpose.msra.mxu0 0.0
    %4287 = vmatprep.subr.mxu0 0.0
    %4288 = vmatpush1.xpose.msra.mxu0 0.0
    %4289 = vmatprep.subr.mxu0 0.0
    %4290 = vmatpush1.xpose.msra.mxu0 0.0
    %4291 = vmatprep.subr.mxu0 0.0
    %4292 = vmatpush1.xpose.msra.mxu0 0.0
    %4293 = vmatprep.subr.mxu0 0.0
    %4294 = vmatpush1.xpose.msra.mxu0 0.0
    %4295 = vmatprep.subr.mxu0 0.0
    %4296 = vmatpush1.xpose.msra.mxu0 %v4263
    %4297 = vmatprep.subr.mxu0 0.0
    %4298 = vmatpush2.xpose.msra.mxu0 0.0
    %4299 = vmatprep.subr.mxu0 0.0
    %4300 = vmatpush2.xpose.msra.mxu0 0.0
    %4301 = vmatprep.subr.mxu0 0.0
    %4302 = vmatpush2.xpose.msra.mxu0 0.0
    %4303 = vmatprep.subr.mxu0 0.0
    %4304 = vmatpush2.xpose.msra.mxu0 0.0
    %4305 = vmatprep.subr.mxu0 0.0
    %4306 = vmatpush2.xpose.msra.mxu0 0.0
    %4307 = vmatprep.subr.mxu0 0.0
    %4308 = vmatpush2.xpose.msra.mxu0 0.0
    %4309 = vmatprep.subr.mxu0 0.0
    %4310 = vmatpush2.xpose.msra.mxu0 0.0
    %4311 = vmatprep.subr.mxu0 0.0
    %4312 = vmatpush2.xpose.msra.mxu0 0.0
    %4313 = vmatprep.subr.mxu0 0.0
    %4314 = vmatpush2.xpose.msra.mxu0 0.0
    %4315 = vmatprep.subr.mxu0 0.0
    %4316 = vmatpush2.xpose.msra.mxu0 0.0
    %4317 = vmatprep.subr.mxu0 0.0
    %4318 = vmatpush2.xpose.msra.mxu0 0.0
    %4319 = vmatprep.subr.mxu0 0.0
    %4320 = vmatpush2.xpose.msra.mxu0 0.0
    %4321 = vmatprep.subr.mxu0 0.0
    %4322 = vmatpush2.xpose.msra.mxu0 0.0
    %4323 = vmatprep.subr.mxu0 0.0
    %4324 = vmatpush2.xpose.msra.mxu0 0.0
    %4325 = vmatprep.subr.mxu0 0.0
    %4326 = vmatpush2.xpose.msra.mxu0 0.0
    %4327 = vmatprep.subr.mxu0 0.0
    %4328 = vmatpush2.xpose.msra.mxu0 0.0
    %4329 = vmatprep.mubr.f32.mxu0 0.0
    %4330 = vmatmul.mubr.f32.gmra.mxu0 %v4260
    %v4331 = vpop.f32.mrf.mxu0
    %v4332 = vadd.f32 %v4255, %v4331
    %v4333 = vpop.f32.mrf.mxu0
    %4334 = vdwg.mxu0
    %vm4335 = vcmask 58368
    %4336 = vst.msk [vmem:[#allocation6] sm:$0x3] %vm4335, %v4332
    // Predicated region
    $region68: #{base_cnn_con_lstm_forward.1} parent=1 // pred_check
      _
    $region69: #{base_cnn_con_lstm_forward.1} parent=1 // pred_check_branch
      %4338 = sbr.rel (0) target = $region71
    $region70: #{base_cnn_con_lstm_forward.1} parent=1 // pred_region
      %s4340 = ssub.s32 32, 32
      %4341 = vsyncadd [#allocation7], %s4340
      %s4343 = sshll.u32 [#allocation6], 4
      %s4344 = int_to_ptr.vmem [resolvable:$true] %s4343
      %4346 = dma.vmem_to_hbm [thread:$0]  %s4344, 32, %s9, [#allocation7]
    $region71: #{base_cnn_con_lstm_forward.1} parent=1 // pred_fallthru
      _
    // Predicated region
    $region72: #{base_cnn_con_lstm_forward.1} parent=1 // pred_check
      _
    $region73: #{base_cnn_con_lstm_forward.1} parent=1 // pred_check_branch
      %4348 = sbr.rel (0) target = $region75
    $region74: #{base_cnn_con_lstm_forward.1} parent=1 // pred_region
      %4349 = dma.done [#allocation7], 32
    $region75: #{base_cnn_con_lstm_forward.1} parent=1 // pred_fallthru
      _
    %4350 = vsyncpa [#allocation7], 1
  %4351 = vsyncmov [#allocation5]
  %s4352 = vpop.sfrf %4351
  %p4353 = scmp.eq.s32.totalorder %s4352, 0
  %p4354 = pneg %p4353
  %4356 = shalt.err (%p4354)

</llo_original>
